<compile_context>
chip_gen: v6e
topology: v6e:2x2x1
jax: 0.10.0
libtpu: 0.0.40
codegen_flags: <defaults>
</compile_context>

<pallas_src>
import jax
import jax.numpy as jnp
from jax import lax
from jax.experimental import pallas as pl
from jax.experimental.pallas import tpu as pltpu


# ----------------------------------------------------------------------------
# Fused whole-hourglass kernel (depth d -> 3*d DWS blocks, 'add' merges).
# Activations use the merged lane-dense layout (rows, W*C), C innermost.
# ----------------------------------------------------------------------------
def _make_hourglass_kernel(nb, depth, K, H, W, C):
    L = W * C                      # merged lane width (full 128-lane tile)
    pad = (K - 1) // 2             # = 1
    ROWPAD = 8                     # sublane-tile-aligned row padding

    def kernel(x_ref, wdw_ref, dwb_ref, wpw_ref, pwb_ref, o_ref, xpad_ref):
        # Zero the row-padded DW scratch once per grid step.  The image slab
        # rows [ROWPAD, ROWPAD+H) are fully overwritten before every read;
        # the rows just outside it stay zero and provide the top/bottom conv
        # padding for every block of every image in this step.
        xpad_ref[...] = jnp.zeros_like(xpad_ref)

        def dws_block(b, x):
            """One DW3x3(+foldedBN+ReLU) -> PW1x1(+foldedBN+ReLU) block.

            x: (nb*H, L) f32 in the merged lane-dense layout.
            """
            hs = []
            for n in range(nb):
                # aligned store of image n into the scratch interior
                xpad_ref[pl.ds(ROWPAD, H), :] = x[n * H:(n + 1) * H, :]
                acc = None
                for ki in range(K):
                    # row-shifted view (sublane offsets ROWPAD-1..ROWPAD+1)
                    xr = xpad_ref[pl.ds(ROWPAD + ki - pad, H), :]
                    for kj in range(K):
                        dl = (kj - pad) * C
                        # lane shift by dl on the XLU; image-edge lanes are
                        # zeroed via the pre-zeroed boundary taps, so no
                        # in-kernel mask is needed.
                        xs = xr if dl == 0 else pltpu.roll(xr, (-dl) % L, axis=1)
                        row = (b * K + ki) * K + kj
                        t = xs * wdw_ref[pl.ds(row, 1), :]
                        acc = t if acc is None else acc + t
                hs.append(acc)
            h = jnp.concatenate(hs, axis=0) if nb > 1 else hs[0]
            # DW BatchNorm shift (scale folded into taps) + ReLU.
            h = jnp.maximum(h + dwb_ref[pl.ds(b, 1), :], 0.0)
            # Pointwise 1x1 conv: one MXU matmul with a block-diagonal,
            # BN-folded weight; output stays in the merged lane-dense layout.
            y = jnp.dot(h, wpw_ref[b], preferred_element_type=jnp.float32)
            return jnp.maximum(y + pwb_ref[pl.ds(b, 1), :], 0.0)

        # stack the nb images' rows: (nb, H, L) -> (nb*H, L)
        x = x_ref[...].reshape(nb * H, L)

        # ---- Hourglass wiring (merge_type='add', no extra skip) ----------
        # stacked block order: [down_0..down_{d-1}, up_0..up_{d-1},
        #                       skip_0..skip_{d-1}]
        down_outs = [x]
        for d in range(depth):
            x = dws_block(d, x)                                  # down_seq[d]
            down_outs.append(x)
        for i in range(depth + 1):
            if i != 0:
                s = depth - i
                y = dws_block(2 * depth + s, down_outs[s])       # skip_seq[s]
                x = x + y                                        # 'add' merge
            if i != depth:
                u = depth - 1 - i
                x = dws_block(depth + u, x)                      # up_seq[u]

        o_ref[...] = x.reshape(nb, H, L).astype(o_ref.dtype)

    return kernel


def _multi_tensorcore_chip():
    """True on chips with >1 TensorCore per device (v7x, v4/v5p megacore)."""
    try:
        kind = jax.devices()[0].device_kind.lower()
    except Exception:
        return False
    return ("v7" in kind) or ("v5p" in kind) or ("v4" in kind)


def hourglass_forward_pallas(x_merged, down_preps, up_preps, skip_preps,
                             *, multi_tc=None):
    """Whole Hourglass (merge_type='add') as one fused Pallas kernel.

    x_merged: (N, H, W*Cpad) f32, channels innermost (lane-dense), channels
    zero-padded to Cpad so W*Cpad is a full lane-tile multiple.
    """
    depth = len(down_preps)
    assert len(up_preps) == depth and len(skip_preps) == depth
    N, H, L = x_merged.shape
    C = down_preps[0]["cpad"]
    W = L // C
    K = down_preps[0]["K"]
    assert L == W * C

    # Stack all block weights in the kernel's block order.
    preps = list(down_preps) + list(up_preps) + list(skip_preps)
    wdw = jnp.concatenate([p["wdw"] for p in preps], axis=0)   # (B*K*K, L)
    dwb = jnp.stack([p["dwb"] for p in preps], axis=0)         # (B, L)
    wpw = jnp.stack([p["wpw"] for p in preps], axis=0)         # (B, L, L)
    pwb = jnp.stack([p["pwb"] for p in preps], axis=0)         # (B, L)

    if multi_tc is None:
        multi_tc = _multi_tensorcore_chip()
    # multi-TC: one image per core via grid=(N,)+'parallel'.
    # single-TC: collapse the batch into one grid step (no per-step overhead,
    # PW matmul M doubles).
    nb = 1 if (multi_tc and N > 1) else N
    grid = (N // nb,)

    kernel = _make_hourglass_kernel(nb, depth, K, H, W, C)
    ROWPAD = 8

    return pl.pallas_call(
        kernel,
        out_shape=jax.ShapeDtypeStruct((N, H, L), jnp.float32),
        grid_spec=pltpu.PrefetchScalarGridSpec(
            num_scalar_prefetch=0,
            grid=grid,
            in_specs=[
                pl.BlockSpec((nb, H, L), lambda n: (n, 0, 0)),   # activations
                pl.BlockSpec(wdw.shape, lambda n: (0, 0)),       # DW taps
                pl.BlockSpec(dwb.shape, lambda n: (0, 0)),       # DW shifts
                pl.BlockSpec(wpw.shape, lambda n: (0, 0, 0)),    # PW block-diag
                pl.BlockSpec(pwb.shape, lambda n: (0, 0)),       # PW shifts
            ],
            out_specs=pl.BlockSpec((nb, H, L), lambda n: (n, 0, 0)),
            scratch_shapes=[
                pltpu.VMEM((H + 2 * ROWPAD, L), jnp.float32),    # row-padded img
            ],
        ),
        compiler_params=pltpu.CompilerParams(
            dimension_semantics=("parallel",) if multi_tc else ("arbitrary",)),
    )(x_merged, wdw, dwb, wpw, pwb)


# ----------------------------------------------------------------------------
# Parameter construction: raw PyTorch-layout weights + folded / lane-tiled /
# channel-padded kernel operands.
# ----------------------------------------------------------------------------
def make_block(key, cin, cout, W, cpad, K=3, eps=1e-5):
    ks = jax.random.split(key, 9)
    w_dw_t = jax.random.normal(ks[0], (cin, 1, K, K), jnp.float32) * 0.2
    dw_gamma = 1.0 + 0.1 * jax.random.normal(ks[1], (cin,), jnp.float32)
    dw_beta = 0.1 * jax.random.normal(ks[2], (cin,), jnp.float32)
    dw_mean = 0.1 * jax.random.normal(ks[3], (cin,), jnp.float32)
    dw_var = jnp.abs(jax.random.normal(ks[4], (cin,), jnp.float32)) + 0.5
    w_pw_t = jax.random.normal(ks[5], (cout, cin, 1, 1), jnp.float32) * 0.2
    pw_gamma = 1.0 + 0.1 * jax.random.normal(ks[6], (cout,), jnp.float32)
    pw_beta = 0.1 * jax.random.normal(ks[7], (cout,), jnp.float32)
    pw_mean = 0.1 * jax.random.normal(ks[8], (cout,), jnp.float32)
    pw_var = jnp.ones((cout,), jnp.float32) * 0.8

    # Inference-mode BN folded into scale/shift.
    dw_scale = dw_gamma / jnp.sqrt(dw_var + eps)
    dw_shift = dw_beta - dw_mean * dw_scale
    pw_scale = pw_gamma / jnp.sqrt(pw_var + eps)
    pw_shift = pw_beta - pw_mean * pw_scale

    pad = (K - 1) // 2

    # ---- kernel-side operands: BN scales folded into the conv weights,
    # channels zero-padded to cpad, pre-tiled onto the merged W*C lane axis,
    # pointwise conv as a block-diagonal matrix. ----
    w_dw_raw = jnp.transpose(w_dw_t[:, 0], (1, 2, 0))                 # (K,K,cin)
    w_dw = w_dw_raw * dw_scale[None, None, :]
    w_dw_p = jnp.zeros((K, K, cpad), jnp.float32).at[:, :, :cin].set(w_dw)

    # Tile taps per lane, zeroing the taps that would read across the
    # left/right image border (replaces an in-kernel lane mask).
    lane_w = jnp.arange(W * cpad) // cpad          # image column of each lane
    taps = []
    for ki in range(K):
        for kj in range(K):
            dx = kj - pad
            t = jnp.tile(w_dw_p[ki, kj], W)                           # (W*cpad,)
            valid = (lane_w + dx >= 0) & (lane_w + dx <= W - 1)
            taps.append(jnp.where(valid, t, 0.0))
    wdw_lanes = jnp.stack(taps, axis=0)                               # (K*K, W*cpad)

    dw_shift_p = jnp.zeros((cpad,), jnp.float32).at[:cin].set(dw_shift)
    dwb_lanes = jnp.tile(dw_shift_p, W)                               # (W*cpad,)

    w_pw_raw = jnp.transpose(w_pw_t[:, :, 0, 0], (1, 0))              # (cin,cout)
    w_pw = w_pw_raw * pw_scale[None, :]
    w_pw_p = jnp.zeros((cpad, cpad), jnp.float32).at[:cin, :cout].set(w_pw)
    eye = jnp.eye(W, dtype=jnp.float32)
    wpw_bd = jnp.einsum("ij,co->icjo", eye, w_pw_p)
    wpw_bd = wpw_bd.reshape(W * cpad, W * cpad)                       # block-diag

    pw_shift_p = jnp.zeros((cpad,), jnp.float32).at[:cout].set(pw_shift)
    pwb_lanes = jnp.tile(pw_shift_p, W)                               # (W*cpad,)

    return dict(
        cin=cin, cout=cout, cpad=cpad, K=K,
        wdw=wdw_lanes, dwb=dwb_lanes, wpw=wpw_bd, pwb=pwb_lanes,
        # reference-side (unfolded) parameters
        w_dw_hwio=w_dw_raw.reshape(K, K, 1, cin),
        w_pw_hwio=w_pw_raw.reshape(1, 1, cin, cout),
        dw_scale=dw_scale, dw_shift=dw_shift,
        pw_scale=pw_scale, pw_shift=pw_shift,
    )


# ----------------------------------------------------------------------------
# Pure-JAX reference (NHWC convs + Hourglass wiring) for correctness checking.
# ----------------------------------------------------------------------------
def dws_conv_block_ref(x_nhwc, p):
    cin = p["cin"]
    h = lax.conv_general_dilated(
        x_nhwc, p["w_dw_hwio"], window_strides=(1, 1),
        padding=[(1, 1), (1, 1)],
        dimension_numbers=("NHWC", "HWIO", "NHWC"),
        feature_group_count=cin, precision=lax.Precision.HIGHEST)
    h = jnp.maximum(h * p["dw_scale"] + p["dw_shift"], 0.0)
    y = lax.conv_general_dilated(
        h, p["w_pw_hwio"], window_strides=(1, 1), padding=[(0, 0), (0, 0)],
        dimension_numbers=("NHWC", "HWIO", "NHWC"),
        precision=lax.Precision.HIGHEST)
    y = jnp.maximum(y * p["pw_scale"] + p["pw_shift"], 0.0)
    return y


def hourglass_forward_ref(x_nhwc, down_preps, up_preps, skip_preps):
    depth = len(down_preps)
    x = x_nhwc
    down_outs = [x]
    for p in down_preps:
        x = dws_conv_block_ref(x, p)
        down_outs.append(x)
    for i in range(depth + 1):
        if i != 0:
            y = dws_conv_block_ref(down_outs[depth - i], skip_preps[depth - i])
            x = x + y
        if i != depth:
            x = dws_conv_block_ref(x, up_preps[depth - 1 - i])
    return x


if __name__ == "__main__":
    # Hourglass instance: depth=2, merge_type='add', all sub-modules are
    # DWS conv blocks at constant 16x16 resolution.
    #   down: 4->8, 8->8 ; skip: 4->8, 8->8 ; up: 8->8, 8->8
    N, C0, H, W = 2, 4, 16, 16
    K, eps = 3, 1e-5
    CPAD = 8   # padded channel count -> lane width W*CPAD = 128 for every block

    key = jax.random.PRNGKey(0)
    kx, kd0, kd1, ks0, ks1, ku0, ku1 = jax.random.split(key, 7)

    x_nchw = jax.random.normal(kx, (N, C0, H, W), jnp.float32)

    down_preps = [make_block(kd0, C0, 8, W, CPAD, K, eps),
                  make_block(kd1, 8, 8, W, CPAD, K, eps)]
    skip_preps = [make_block(ks0, C0, 8, W, CPAD, K, eps),
                  make_block(ks1, 8, 8, W, CPAD, K, eps)]
    up_preps = [make_block(ku0, 8, 8, W, CPAD, K, eps),
                make_block(ku1, 8, 8, W, CPAD, K, eps)]

    # Single NCHW->NHWC transpose at the boundary; channels zero-padded to
    # CPAD so every block runs on a full 128-lane tile; the reshape to the
    # merged (N, H, W*C) layout is a free view of contiguous NHWC.
    x_nhwc = jnp.transpose(x_nchw, (0, 2, 3, 1))
    x_pad = jnp.pad(x_nhwc, ((0, 0), (0, 0), (0, 0), (0, CPAD - C0)))
    x_merged = x_pad.reshape(N, H, W * CPAD)

    out_merged = hourglass_forward_pallas(x_merged, down_preps, up_preps,
                                          skip_preps)
    out_merged = jax.block_until_ready(out_merged)

    cout = up_preps[0]["cout"]
    out_nhwc = out_merged.reshape(N, H, W, CPAD)[..., :cout]
    out_nchw = jnp.transpose(out_nhwc, (0, 3, 1, 2))

    ref_nchw = jnp.transpose(
        hourglass_forward_ref(x_nhwc, down_preps, up_preps, skip_preps),
        (0, 3, 1, 2))

    assert out_nchw.shape == (N, cout, H, W), out_nchw.shape
    max_err = float(jnp.max(jnp.abs(out_nchw - ref_nchw)))
    assert jnp.allclose(out_nchw, ref_nchw, atol=2e-3, rtol=2e-3), max_err

    print("KERNEL_OK")
</pallas_src>

<mosaic_0001>
module attributes {stable_mosaic.version = 11 : i64} {
  func.func @kernel(%arg0: i32, %arg1: memref<2x16x128xf32, #tpu.memory_space<vmem>>, %arg2: memref<54x128xf32, #tpu.memory_space<vmem>>, %arg3: memref<6x128xf32, #tpu.memory_space<vmem>>, %arg4: memref<6x128x128xf32, #tpu.memory_space<vmem>>, %arg5: memref<6x128xf32, #tpu.memory_space<vmem>>, %arg6: memref<2x16x128xf32, #tpu.memory_space<vmem>>, %arg7: memref<32x128xf32, #tpu.memory_space<vmem>>) attributes {dimension_semantics = [#tpu.dimension_semantics<arbitrary>], iteration_bounds = array<i64: 1>, scalar_prefetch = 0 : i64, scratch_operands = 1 : i64, tpu.core_type = #tpu.core_type<tc>, window_params = [{transform_indices = @transform_0, window_bounds = array<i64: 2, 16, 128>}, {pipeline_mode = #tpu.pipeline_mode<synchronous>, transform_indices = @transform_1, window_bounds = array<i64: 54, 128>}, {pipeline_mode = #tpu.pipeline_mode<synchronous>, transform_indices = @transform_2, window_bounds = array<i64: 6, 128>}, {pipeline_mode = #tpu.pipeline_mode<synchronous>, transform_indices = @transform_3, window_bounds = array<i64: 6, 128, 128>}, {pipeline_mode = #tpu.pipeline_mode<synchronous>, transform_indices = @transform_4, window_bounds = array<i64: 6, 128>}, {transform_indices = @transform_5, window_bounds = array<i64: 2, 16, 128>}]} {
    %cst = arith.constant 0.000000e+00 : f32
    %0 = vector.broadcast %cst : f32 to vector<32x128xf32>
    %c0 = arith.constant 0 : index
    %c0_0 = arith.constant 0 : index
    %1 = vector.load %arg7[%c0, %c0_0] : memref<32x128xf32, #tpu.memory_space<vmem>>, vector<32x128xf32>
    tpu.vector_store %arg7[%c0, %c0_0], %0 {strides = array<i32>} : memref<32x128xf32, #tpu.memory_space<vmem>>, vector<32x128xf32>,
    %c0_1 = arith.constant 0 : index
    %c0_2 = arith.constant 0 : index
    %c0_3 = arith.constant 0 : index
    %2 = vector.load %arg1[%c0_1, %c0_2, %c0_3] : memref<2x16x128xf32, #tpu.memory_space<vmem>>, vector<2x16x128xf32>
    %3 = vector.shape_cast %2 : vector<2x16x128xf32> to vector<32x128xf32>
    %4 = vector.extract_strided_slice %3 {offsets = [0, 0], sizes = [16, 128], strides = [1, 1]} : vector<32x128xf32> to vector<16x128xf32>
    %c8 = arith.constant 8 : index
    %c0_4 = arith.constant 0 : index
    %5 = vector.load %arg7[%c8, %c0_4] : memref<32x128xf32, #tpu.memory_space<vmem>>, vector<16x128xf32>
    tpu.vector_store %arg7[%c8, %c0_4], %4 {strides = array<i32>} : memref<32x128xf32, #tpu.memory_space<vmem>>, vector<16x128xf32>,
    %c7 = arith.constant 7 : index
    %c0_5 = arith.constant 0 : index
    %6 = vector.load %arg7[%c7, %c0_5] : memref<32x128xf32, #tpu.memory_space<vmem>>, vector<16x128xf32>
    %c8_i32 = arith.constant 8 : i32
    %7 = tpu.dynamic_rotate %6 by %c8_i32 dim 1 : vector<16x128xf32>, i32 -> vector<16x128xf32>
    %c0_6 = arith.constant 0 : index
    %c0_7 = arith.constant 0 : index
    %8 = vector.load %arg2[%c0_6, %c0_7] : memref<54x128xf32, #tpu.memory_space<vmem>>, vector<1x128xf32>
    %9 = vector.broadcast %8 : vector<1x128xf32> to vector<16x128xf32>
    %10 = arith.mulf %7, %9 : vector<16x128xf32>
    %c1 = arith.constant 1 : index
    %c0_8 = arith.constant 0 : index
    %11 = vector.load %arg2[%c1, %c0_8] : memref<54x128xf32, #tpu.memory_space<vmem>>, vector<1x128xf32>
    %12 = vector.broadcast %11 : vector<1x128xf32> to vector<16x128xf32>
    %13 = arith.mulf %6, %12 : vector<16x128xf32>
    %14 = arith.addf %10, %13 : vector<16x128xf32>
    %c120_i32 = arith.constant 120 : i32
    %15 = tpu.dynamic_rotate %6 by %c120_i32 dim 1 : vector<16x128xf32>, i32 -> vector<16x128xf32>
    %c2 = arith.constant 2 : index
    %c0_9 = arith.constant 0 : index
    %16 = vector.load %arg2[%c2, %c0_9] : memref<54x128xf32, #tpu.memory_space<vmem>>, vector<1x128xf32>
    %17 = vector.broadcast %16 : vector<1x128xf32> to vector<16x128xf32>
    %18 = arith.mulf %15, %17 : vector<16x128xf32>
    %19 = arith.addf %14, %18 : vector<16x128xf32>
    %c8_10 = arith.constant 8 : index
    %c0_11 = arith.constant 0 : index
    %20 = vector.load %arg7[%c8_10, %c0_11] : memref<32x128xf32, #tpu.memory_space<vmem>>, vector<16x128xf32>
    %c8_i32_12 = arith.constant 8 : i32
    %21 = tpu.dynamic_rotate %20 by %c8_i32_12 dim 1 : vector<16x128xf32>, i32 -> vector<16x128xf32>
    %c3 = arith.constant 3 : index
    %c0_13 = arith.constant 0 : index
    %22 = vector.load %arg2[%c3, %c0_13] : memref<54x128xf32, #tpu.memory_space<vmem>>, vector<1x128xf32>
    %23 = vector.broadcast %22 : vector<1x128xf32> to vector<16x128xf32>
    %24 = arith.mulf %21, %23 : vector<16x128xf32>
    %25 = arith.addf %19, %24 : vector<16x128xf32>
    %c4 = arith.constant 4 : index
    %c0_14 = arith.constant 0 : index
    %26 = vector.load %arg2[%c4, %c0_14] : memref<54x128xf32, #tpu.memory_space<vmem>>, vector<1x128xf32>
    %27 = vector.broadcast %26 : vector<1x128xf32> to vector<16x128xf32>
    %28 = arith.mulf %20, %27 : vector<16x128xf32>
    %29 = arith.addf %25, %28 : vector<16x128xf32>
    %c120_i32_15 = arith.constant 120 : i32
    %30 = tpu.dynamic_rotate %20 by %c120_i32_15 dim 1 : vector<16x128xf32>, i32 -> vector<16x128xf32>
    %c5 = arith.constant 5 : index
    %c0_16 = arith.constant 0 : index
    %31 = vector.load %arg2[%c5, %c0_16] : memref<54x128xf32, #tpu.memory_space<vmem>>, vector<1x128xf32>
    %32 = vector.broadcast %31 : vector<1x128xf32> to vector<16x128xf32>
    %33 = arith.mulf %30, %32 : vector<16x128xf32>
    %34 = arith.addf %29, %33 : vector<16x128xf32>
    %c9 = arith.constant 9 : index
    %c0_17 = arith.constant 0 : index
    %35 = vector.load %arg7[%c9, %c0_17] : memref<32x128xf32, #tpu.memory_space<vmem>>, vector<16x128xf32>
    %c8_i32_18 = arith.constant 8 : i32
    %36 = tpu.dynamic_rotate %35 by %c8_i32_18 dim 1 : vector<16x128xf32>, i32 -> vector<16x128xf32>
    %c6 = arith.constant 6 : index
    %c0_19 = arith.constant 0 : index
    %37 = vector.load %arg2[%c6, %c0_19] : memref<54x128xf32, #tpu.memory_space<vmem>>, vector<1x128xf32>
    %38 = vector.broadcast %37 : vector<1x128xf32> to vector<16x128xf32>
    %39 = arith.mulf %36, %38 : vector<16x128xf32>
    %40 = arith.addf %34, %39 : vector<16x128xf32>
    %c7_20 = arith.constant 7 : index
    %c0_21 = arith.constant 0 : index
    %41 = vector.load %arg2[%c7_20, %c0_21] : memref<54x128xf32, #tpu.memory_space<vmem>>, vector<1x128xf32>
    %42 = vector.broadcast %41 : vector<1x128xf32> to vector<16x128xf32>
    %43 = arith.mulf %35, %42 : vector<16x128xf32>
    %44 = arith.addf %40, %43 : vector<16x128xf32>
    %c120_i32_22 = arith.constant 120 : i32
    %45 = tpu.dynamic_rotate %35 by %c120_i32_22 dim 1 : vector<16x128xf32>, i32 -> vector<16x128xf32>
    %c8_23 = arith.constant 8 : index
    %c0_24 = arith.constant 0 : index
    %46 = vector.load %arg2[%c8_23, %c0_24] : memref<54x128xf32, #tpu.memory_space<vmem>>, vector<1x128xf32>
    %47 = vector.broadcast %46 : vector<1x128xf32> to vector<16x128xf32>
    %48 = arith.mulf %45, %47 : vector<16x128xf32>
    %49 = arith.addf %44, %48 : vector<16x128xf32>
    %50 = vector.extract_strided_slice %3 {offsets = [16, 0], sizes = [16, 128], strides = [1, 1]} : vector<32x128xf32> to vector<16x128xf32>
    %c8_25 = arith.constant 8 : index
    %c0_26 = arith.constant 0 : index
    %51 = vector.load %arg7[%c8_25, %c0_26] : memref<32x128xf32, #tpu.memory_space<vmem>>, vector<16x128xf32>
    tpu.vector_store %arg7[%c8_25, %c0_26], %50 {strides = array<i32>} : memref<32x128xf32, #tpu.memory_space<vmem>>, vector<16x128xf32>,
    %c7_27 = arith.constant 7 : index
    %c0_28 = arith.constant 0 : index
    %52 = vector.load %arg7[%c7_27, %c0_28] : memref<32x128xf32, #tpu.memory_space<vmem>>, vector<16x128xf32>
    %c8_i32_29 = arith.constant 8 : i32
    %53 = tpu.dynamic_rotate %52 by %c8_i32_29 dim 1 : vector<16x128xf32>, i32 -> vector<16x128xf32>
    %c0_30 = arith.constant 0 : index
    %c0_31 = arith.constant 0 : index
    %54 = vector.load %arg2[%c0_30, %c0_31] : memref<54x128xf32, #tpu.memory_space<vmem>>, vector<1x128xf32>
    %55 = vector.broadcast %54 : vector<1x128xf32> to vector<16x128xf32>
    %56 = arith.mulf %53, %55 : vector<16x128xf32>
    %c1_32 = arith.constant 1 : index
    %c0_33 = arith.constant 0 : index
    %57 = vector.load %arg2[%c1_32, %c0_33] : memref<54x128xf32, #tpu.memory_space<vmem>>, vector<1x128xf32>
    %58 = vector.broadcast %57 : vector<1x128xf32> to vector<16x128xf32>
    %59 = arith.mulf %52, %58 : vector<16x128xf32>
    %60 = arith.addf %56, %59 : vector<16x128xf32>
    %c120_i32_34 = arith.constant 120 : i32
    %61 = tpu.dynamic_rotate %52 by %c120_i32_34 dim 1 : vector<16x128xf32>, i32 -> vector<16x128xf32>
    %c2_35 = arith.constant 2 : index
    %c0_36 = arith.constant 0 : index
    %62 = vector.load %arg2[%c2_35, %c0_36] : memref<54x128xf32, #tpu.memory_space<vmem>>, vector<1x128xf32>
    %63 = vector.broadcast %62 : vector<1x128xf32> to vector<16x128xf32>
    %64 = arith.mulf %61, %63 : vector<16x128xf32>
    %65 = arith.addf %60, %64 : vector<16x128xf32>
    %c8_37 = arith.constant 8 : index
    %c0_38 = arith.constant 0 : index
    %66 = vector.load %arg7[%c8_37, %c0_38] : memref<32x128xf32, #tpu.memory_space<vmem>>, vector<16x128xf32>
    %c8_i32_39 = arith.constant 8 : i32
    %67 = tpu.dynamic_rotate %66 by %c8_i32_39 dim 1 : vector<16x128xf32>, i32 -> vector<16x128xf32>
    %c3_40 = arith.constant 3 : index
    %c0_41 = arith.constant 0 : index
    %68 = vector.load %arg2[%c3_40, %c0_41] : memref<54x128xf32, #tpu.memory_space<vmem>>, vector<1x128xf32>
    %69 = vector.broadcast %68 : vector<1x128xf32> to vector<16x128xf32>
    %70 = arith.mulf %67, %69 : vector<16x128xf32>
    %71 = arith.addf %65, %70 : vector<16x128xf32>
    %c4_42 = arith.constant 4 : index
    %c0_43 = arith.constant 0 : index
    %72 = vector.load %arg2[%c4_42, %c0_43] : memref<54x128xf32, #tpu.memory_space<vmem>>, vector<1x128xf32>
    %73 = vector.broadcast %72 : vector<1x128xf32> to vector<16x128xf32>
    %74 = arith.mulf %66, %73 : vector<16x128xf32>
    %75 = arith.addf %71, %74 : vector<16x128xf32>
    %c120_i32_44 = arith.constant 120 : i32
    %76 = tpu.dynamic_rotate %66 by %c120_i32_44 dim 1 : vector<16x128xf32>, i32 -> vector<16x128xf32>
    %c5_45 = arith.constant 5 : index
    %c0_46 = arith.constant 0 : index
    %77 = vector.load %arg2[%c5_45, %c0_46] : memref<54x128xf32, #tpu.memory_space<vmem>>, vector<1x128xf32>
    %78 = vector.broadcast %77 : vector<1x128xf32> to vector<16x128xf32>
    %79 = arith.mulf %76, %78 : vector<16x128xf32>
    %80 = arith.addf %75, %79 : vector<16x128xf32>
    %c9_47 = arith.constant 9 : index
    %c0_48 = arith.constant 0 : index
    %81 = vector.load %arg7[%c9_47, %c0_48] : memref<32x128xf32, #tpu.memory_space<vmem>>, vector<16x128xf32>
    %c8_i32_49 = arith.constant 8 : i32
    %82 = tpu.dynamic_rotate %81 by %c8_i32_49 dim 1 : vector<16x128xf32>, i32 -> vector<16x128xf32>
    %c6_50 = arith.constant 6 : index
    %c0_51 = arith.constant 0 : index
    %83 = vector.load %arg2[%c6_50, %c0_51] : memref<54x128xf32, #tpu.memory_space<vmem>>, vector<1x128xf32>
    %84 = vector.broadcast %83 : vector<1x128xf32> to vector<16x128xf32>
    %85 = arith.mulf %82, %84 : vector<16x128xf32>
    %86 = arith.addf %80, %85 : vector<16x128xf32>
    %c7_52 = arith.constant 7 : index
    %c0_53 = arith.constant 0 : index
    %87 = vector.load %arg2[%c7_52, %c0_53] : memref<54x128xf32, #tpu.memory_space<vmem>>, vector<1x128xf32>
    %88 = vector.broadcast %87 : vector<1x128xf32> to vector<16x128xf32>
    %89 = arith.mulf %81, %88 : vector<16x128xf32>
    %90 = arith.addf %86, %89 : vector<16x128xf32>
    %c120_i32_54 = arith.constant 120 : i32
    %91 = tpu.dynamic_rotate %81 by %c120_i32_54 dim 1 : vector<16x128xf32>, i32 -> vector<16x128xf32>
    %c8_55 = arith.constant 8 : index
    %c0_56 = arith.constant 0 : index
    %92 = vector.load %arg2[%c8_55, %c0_56] : memref<54x128xf32, #tpu.memory_space<vmem>>, vector<1x128xf32>
    %93 = vector.broadcast %92 : vector<1x128xf32> to vector<16x128xf32>
    %94 = arith.mulf %91, %93 : vector<16x128xf32>
    %95 = arith.addf %90, %94 : vector<16x128xf32>
    %96 = tpu.concatenate %49, %95 in 0 : vector<16x128xf32>, vector<16x128xf32> -> vector<32x128xf32>
    %c0_57 = arith.constant 0 : index
    %c0_58 = arith.constant 0 : index
    %97 = vector.load %arg3[%c0_57, %c0_58] : memref<6x128xf32, #tpu.memory_space<vmem>>, vector<1x128xf32>
    %98 = vector.broadcast %97 : vector<1x128xf32> to vector<32x128xf32>
    %99 = arith.addf %96, %98 : vector<32x128xf32>
    %cst_59 = arith.constant 0.000000e+00 : f32
    %100 = vector.broadcast %cst_59 : f32 to vector<32x128xf32>
    %101 = arith.maximumf %99, %100 : vector<32x128xf32>
    %c0_60 = arith.constant 0 : index
    %c0_61 = arith.constant 0 : index
    %c0_62 = arith.constant 0 : index
    %102 = vector.load %arg4[%c0_60, %c0_61, %c0_62] : memref<6x128x128xf32, #tpu.memory_space<vmem>>, vector<1x128x128xf32>
    %103 = vector.shape_cast %102 : vector<1x128x128xf32> to vector<128x128xf32>
    %cst_63 = arith.constant dense<0.000000e+00> : vector<32x128xf32>
    %104 = tpu.matmul %101, %103, %cst_63 {dimension_numbers = #tpu.dot_dimension_numbers<[1], [0], [0], [1], [0, 0, 1, 1], [], []>} : vector<32x128xf32>, vector<128x128xf32>, vector<32x128xf32> -> vector<32x128xf32>
    %c0_64 = arith.constant 0 : index
    %c0_65 = arith.constant 0 : index
    %105 = vector.load %arg5[%c0_64, %c0_65] : memref<6x128xf32, #tpu.memory_space<vmem>>, vector<1x128xf32>
    %106 = vector.broadcast %105 : vector<1x128xf32> to vector<32x128xf32>
    %107 = arith.addf %104, %106 : vector<32x128xf32>
    %cst_66 = arith.constant 0.000000e+00 : f32
    %108 = vector.broadcast %cst_66 : f32 to vector<32x128xf32>
    %109 = arith.maximumf %107, %108 : vector<32x128xf32>
    %110 = vector.extract_strided_slice %109 {offsets = [0, 0], sizes = [16, 128], strides = [1, 1]} : vector<32x128xf32> to vector<16x128xf32>
    %c8_67 = arith.constant 8 : index
    %c0_68 = arith.constant 0 : index
    %111 = vector.load %arg7[%c8_67, %c0_68] : memref<32x128xf32, #tpu.memory_space<vmem>>, vector<16x128xf32>
    tpu.vector_store %arg7[%c8_67, %c0_68], %110 {strides = array<i32>} : memref<32x128xf32, #tpu.memory_space<vmem>>, vector<16x128xf32>,
    %c7_69 = arith.constant 7 : index
    %c0_70 = arith.constant 0 : index
    %112 = vector.load %arg7[%c7_69, %c0_70] : memref<32x128xf32, #tpu.memory_space<vmem>>, vector<16x128xf32>
    %c8_i32_71 = arith.constant 8 : i32
    %113 = tpu.dynamic_rotate %112 by %c8_i32_71 dim 1 : vector<16x128xf32>, i32 -> vector<16x128xf32>
    %c9_72 = arith.constant 9 : index
    %c0_73 = arith.constant 0 : index
    %114 = vector.load %arg2[%c9_72, %c0_73] : memref<54x128xf32, #tpu.memory_space<vmem>>, vector<1x128xf32>
    %115 = vector.broadcast %114 : vector<1x128xf32> to vector<16x128xf32>
    %116 = arith.mulf %113, %115 : vector<16x128xf32>
    %c10 = arith.constant 10 : index
    %c0_74 = arith.constant 0 : index
    %117 = vector.load %arg2[%c10, %c0_74] : memref<54x128xf32, #tpu.memory_space<vmem>>, vector<1x128xf32>
    %118 = vector.broadcast %117 : vector<1x128xf32> to vector<16x128xf32>
    %119 = arith.mulf %112, %118 : vector<16x128xf32>
    %120 = arith.addf %116, %119 : vector<16x128xf32>
    %c120_i32_75 = arith.constant 120 : i32
    %121 = tpu.dynamic_rotate %112 by %c120_i32_75 dim 1 : vector<16x128xf32>, i32 -> vector<16x128xf32>
    %c11 = arith.constant 11 : index
    %c0_76 = arith.constant 0 : index
    %122 = vector.load %arg2[%c11, %c0_76] : memref<54x128xf32, #tpu.memory_space<vmem>>, vector<1x128xf32>
    %123 = vector.broadcast %122 : vector<1x128xf32> to vector<16x128xf32>
    %124 = arith.mulf %121, %123 : vector<16x128xf32>
    %125 = arith.addf %120, %124 : vector<16x128xf32>
    %c8_77 = arith.constant 8 : index
    %c0_78 = arith.constant 0 : index
    %126 = vector.load %arg7[%c8_77, %c0_78] : memref<32x128xf32, #tpu.memory_space<vmem>>, vector<16x128xf32>
    %c8_i32_79 = arith.constant 8 : i32
    %127 = tpu.dynamic_rotate %126 by %c8_i32_79 dim 1 : vector<16x128xf32>, i32 -> vector<16x128xf32>
    %c12 = arith.constant 12 : index
    %c0_80 = arith.constant 0 : index
    %128 = vector.load %arg2[%c12, %c0_80] : memref<54x128xf32, #tpu.memory_space<vmem>>, vector<1x128xf32>
    %129 = vector.broadcast %128 : vector<1x128xf32> to vector<16x128xf32>
    %130 = arith.mulf %127, %129 : vector<16x128xf32>
    %131 = arith.addf %125, %130 : vector<16x128xf32>
    %c13 = arith.constant 13 : index
    %c0_81 = arith.constant 0 : index
    %132 = vector.load %arg2[%c13, %c0_81] : memref<54x128xf32, #tpu.memory_space<vmem>>, vector<1x128xf32>
    %133 = vector.broadcast %132 : vector<1x128xf32> to vector<16x128xf32>
    %134 = arith.mulf %126, %133 : vector<16x128xf32>
    %135 = arith.addf %131, %134 : vector<16x128xf32>
    %c120_i32_82 = arith.constant 120 : i32
    %136 = tpu.dynamic_rotate %126 by %c120_i32_82 dim 1 : vector<16x128xf32>, i32 -> vector<16x128xf32>
    %c14 = arith.constant 14 : index
    %c0_83 = arith.constant 0 : index
    %137 = vector.load %arg2[%c14, %c0_83] : memref<54x128xf32, #tpu.memory_space<vmem>>, vector<1x128xf32>
    %138 = vector.broadcast %137 : vector<1x128xf32> to vector<16x128xf32>
    %139 = arith.mulf %136, %138 : vector<16x128xf32>
    %140 = arith.addf %135, %139 : vector<16x128xf32>
    %c9_84 = arith.constant 9 : index
    %c0_85 = arith.constant 0 : index
    %141 = vector.load %arg7[%c9_84, %c0_85] : memref<32x128xf32, #tpu.memory_space<vmem>>, vector<16x128xf32>
    %c8_i32_86 = arith.constant 8 : i32
    %142 = tpu.dynamic_rotate %141 by %c8_i32_86 dim 1 : vector<16x128xf32>, i32 -> vector<16x128xf32>
    %c15 = arith.constant 15 : index
    %c0_87 = arith.constant 0 : index
    %143 = vector.load %arg2[%c15, %c0_87] : memref<54x128xf32, #tpu.memory_space<vmem>>, vector<1x128xf32>
    %144 = vector.broadcast %143 : vector<1x128xf32> to vector<16x128xf32>
    %145 = arith.mulf %142, %144 : vector<16x128xf32>
    %146 = arith.addf %140, %145 : vector<16x128xf32>
    %c16 = arith.constant 16 : index
    %c0_88 = arith.constant 0 : index
    %147 = vector.load %arg2[%c16, %c0_88] : memref<54x128xf32, #tpu.memory_space<vmem>>, vector<1x128xf32>
    %148 = vector.broadcast %147 : vector<1x128xf32> to vector<16x128xf32>
    %149 = arith.mulf %141, %148 : vector<16x128xf32>
    %150 = arith.addf %146, %149 : vector<16x128xf32>
    %c120_i32_89 = arith.constant 120 : i32
    %151 = tpu.dynamic_rotate %141 by %c120_i32_89 dim 1 : vector<16x128xf32>, i32 -> vector<16x128xf32>
    %c17 = arith.constant 17 : index
    %c0_90 = arith.constant 0 : index
    %152 = vector.load %arg2[%c17, %c0_90] : memref<54x128xf32, #tpu.memory_space<vmem>>, vector<1x128xf32>
    %153 = vector.broadcast %152 : vector<1x128xf32> to vector<16x128xf32>
    %154 = arith.mulf %151, %153 : vector<16x128xf32>
    %155 = arith.addf %150, %154 : vector<16x128xf32>
    %156 = vector.extract_strided_slice %109 {offsets = [16, 0], sizes = [16, 128], strides = [1, 1]} : vector<32x128xf32> to vector<16x128xf32>
    %c8_91 = arith.constant 8 : index
    %c0_92 = arith.constant 0 : index
    %157 = vector.load %arg7[%c8_91, %c0_92] : memref<32x128xf32, #tpu.memory_space<vmem>>, vector<16x128xf32>
    tpu.vector_store %arg7[%c8_91, %c0_92], %156 {strides = array<i32>} : memref<32x128xf32, #tpu.memory_space<vmem>>, vector<16x128xf32>,
    %c7_93 = arith.constant 7 : index
    %c0_94 = arith.constant 0 : index
    %158 = vector.load %arg7[%c7_93, %c0_94] : memref<32x128xf32, #tpu.memory_space<vmem>>, vector<16x128xf32>
    %c8_i32_95 = arith.constant 8 : i32
    %159 = tpu.dynamic_rotate %158 by %c8_i32_95 dim 1 : vector<16x128xf32>, i32 -> vector<16x128xf32>
    %c9_96 = arith.constant 9 : index
    %c0_97 = arith.constant 0 : index
    %160 = vector.load %arg2[%c9_96, %c0_97] : memref<54x128xf32, #tpu.memory_space<vmem>>, vector<1x128xf32>
    %161 = vector.broadcast %160 : vector<1x128xf32> to vector<16x128xf32>
    %162 = arith.mulf %159, %161 : vector<16x128xf32>
    %c10_98 = arith.constant 10 : index
    %c0_99 = arith.constant 0 : index
    %163 = vector.load %arg2[%c10_98, %c0_99] : memref<54x128xf32, #tpu.memory_space<vmem>>, vector<1x128xf32>
    %164 = vector.broadcast %163 : vector<1x128xf32> to vector<16x128xf32>
    %165 = arith.mulf %158, %164 : vector<16x128xf32>
    %166 = arith.addf %162, %165 : vector<16x128xf32>
    %c120_i32_100 = arith.constant 120 : i32
    %167 = tpu.dynamic_rotate %158 by %c120_i32_100 dim 1 : vector<16x128xf32>, i32 -> vector<16x128xf32>
    %c11_101 = arith.constant 11 : index
    %c0_102 = arith.constant 0 : index
    %168 = vector.load %arg2[%c11_101, %c0_102] : memref<54x128xf32, #tpu.memory_space<vmem>>, vector<1x128xf32>
    %169 = vector.broadcast %168 : vector<1x128xf32> to vector<16x128xf32>
    %170 = arith.mulf %167, %169 : vector<16x128xf32>
    %171 = arith.addf %166, %170 : vector<16x128xf32>
    %c8_103 = arith.constant 8 : index
    %c0_104 = arith.constant 0 : index
    %172 = vector.load %arg7[%c8_103, %c0_104] : memref<32x128xf32, #tpu.memory_space<vmem>>, vector<16x128xf32>
    %c8_i32_105 = arith.constant 8 : i32
    %173 = tpu.dynamic_rotate %172 by %c8_i32_105 dim 1 : vector<16x128xf32>, i32 -> vector<16x128xf32>
    %c12_106 = arith.constant 12 : index
    %c0_107 = arith.constant 0 : index
    %174 = vector.load %arg2[%c12_106, %c0_107] : memref<54x128xf32, #tpu.memory_space<vmem>>, vector<1x128xf32>
    %175 = vector.broadcast %174 : vector<1x128xf32> to vector<16x128xf32>
    %176 = arith.mulf %173, %175 : vector<16x128xf32>
    %177 = arith.addf %171, %176 : vector<16x128xf32>
    %c13_108 = arith.constant 13 : index
    %c0_109 = arith.constant 0 : index
    %178 = vector.load %arg2[%c13_108, %c0_109] : memref<54x128xf32, #tpu.memory_space<vmem>>, vector<1x128xf32>
    %179 = vector.broadcast %178 : vector<1x128xf32> to vector<16x128xf32>
    %180 = arith.mulf %172, %179 : vector<16x128xf32>
    %181 = arith.addf %177, %180 : vector<16x128xf32>
    %c120_i32_110 = arith.constant 120 : i32
    %182 = tpu.dynamic_rotate %172 by %c120_i32_110 dim 1 : vector<16x128xf32>, i32 -> vector<16x128xf32>
    %c14_111 = arith.constant 14 : index
    %c0_112 = arith.constant 0 : index
    %183 = vector.load %arg2[%c14_111, %c0_112] : memref<54x128xf32, #tpu.memory_space<vmem>>, vector<1x128xf32>
    %184 = vector.broadcast %183 : vector<1x128xf32> to vector<16x128xf32>
    %185 = arith.mulf %182, %184 : vector<16x128xf32>
    %186 = arith.addf %181, %185 : vector<16x128xf32>
    %c9_113 = arith.constant 9 : index
    %c0_114 = arith.constant 0 : index
    %187 = vector.load %arg7[%c9_113, %c0_114] : memref<32x128xf32, #tpu.memory_space<vmem>>, vector<16x128xf32>
    %c8_i32_115 = arith.constant 8 : i32
    %188 = tpu.dynamic_rotate %187 by %c8_i32_115 dim 1 : vector<16x128xf32>, i32 -> vector<16x128xf32>
    %c15_116 = arith.constant 15 : index
    %c0_117 = arith.constant 0 : index
    %189 = vector.load %arg2[%c15_116, %c0_117] : memref<54x128xf32, #tpu.memory_space<vmem>>, vector<1x128xf32>
    %190 = vector.broadcast %189 : vector<1x128xf32> to vector<16x128xf32>
    %191 = arith.mulf %188, %190 : vector<16x128xf32>
    %192 = arith.addf %186, %191 : vector<16x128xf32>
    %c16_118 = arith.constant 16 : index
    %c0_119 = arith.constant 0 : index
    %193 = vector.load %arg2[%c16_118, %c0_119] : memref<54x128xf32, #tpu.memory_space<vmem>>, vector<1x128xf32>
    %194 = vector.broadcast %193 : vector<1x128xf32> to vector<16x128xf32>
    %195 = arith.mulf %187, %194 : vector<16x128xf32>
    %196 = arith.addf %192, %195 : vector<16x128xf32>
    %c120_i32_120 = arith.constant 120 : i32
    %197 = tpu.dynamic_rotate %187 by %c120_i32_120 dim 1 : vector<16x128xf32>, i32 -> vector<16x128xf32>
    %c17_121 = arith.constant 17 : index
    %c0_122 = arith.constant 0 : index
    %198 = vector.load %arg2[%c17_121, %c0_122] : memref<54x128xf32, #tpu.memory_space<vmem>>, vector<1x128xf32>
    %199 = vector.broadcast %198 : vector<1x128xf32> to vector<16x128xf32>
    %200 = arith.mulf %197, %199 : vector<16x128xf32>
    %201 = arith.addf %196, %200 : vector<16x128xf32>
    %202 = tpu.concatenate %155, %201 in 0 : vector<16x128xf32>, vector<16x128xf32> -> vector<32x128xf32>
    %c1_123 = arith.constant 1 : index
    %c0_124 = arith.constant 0 : index
    %203 = vector.load %arg3[%c1_123, %c0_124] : memref<6x128xf32, #tpu.memory_space<vmem>>, vector<1x128xf32>
    %204 = vector.broadcast %203 : vector<1x128xf32> to vector<32x128xf32>
    %205 = arith.addf %202, %204 : vector<32x128xf32>
    %cst_125 = arith.constant 0.000000e+00 : f32
    %206 = vector.broadcast %cst_125 : f32 to vector<32x128xf32>
    %207 = arith.maximumf %205, %206 : vector<32x128xf32>
    %c1_126 = arith.constant 1 : index
    %c0_127 = arith.constant 0 : index
    %c0_128 = arith.constant 0 : index
    %208 = vector.load %arg4[%c1_126, %c0_127, %c0_128] : memref<6x128x128xf32, #tpu.memory_space<vmem>>, vector<1x128x128xf32>
    %209 = vector.shape_cast %208 : vector<1x128x128xf32> to vector<128x128xf32>
    %cst_129 = arith.constant dense<0.000000e+00> : vector<32x128xf32>
    %210 = tpu.matmul %207, %209, %cst_129 {dimension_numbers = #tpu.dot_dimension_numbers<[1], [0], [0], [1], [0, 0, 1, 1], [], []>} : vector<32x128xf32>, vector<128x128xf32>, vector<32x128xf32> -> vector<32x128xf32>
    %c1_130 = arith.constant 1 : index
    %c0_131 = arith.constant 0 : index
    %211 = vector.load %arg5[%c1_130, %c0_131] : memref<6x128xf32, #tpu.memory_space<vmem>>, vector<1x128xf32>
    %212 = vector.broadcast %211 : vector<1x128xf32> to vector<32x128xf32>
    %213 = arith.addf %210, %212 : vector<32x128xf32>
    %cst_132 = arith.constant 0.000000e+00 : f32
    %214 = vector.broadcast %cst_132 : f32 to vector<32x128xf32>
    %215 = arith.maximumf %213, %214 : vector<32x128xf32>
    %216 = vector.extract_strided_slice %215 {offsets = [0, 0], sizes = [16, 128], strides = [1, 1]} : vector<32x128xf32> to vector<16x128xf32>
    %c8_133 = arith.constant 8 : index
    %c0_134 = arith.constant 0 : index
    %217 = vector.load %arg7[%c8_133, %c0_134] : memref<32x128xf32, #tpu.memory_space<vmem>>, vector<16x128xf32>
    tpu.vector_store %arg7[%c8_133, %c0_134], %216 {strides = array<i32>} : memref<32x128xf32, #tpu.memory_space<vmem>>, vector<16x128xf32>,
    %c7_135 = arith.constant 7 : index
    %c0_136 = arith.constant 0 : index
    %218 = vector.load %arg7[%c7_135, %c0_136] : memref<32x128xf32, #tpu.memory_space<vmem>>, vector<16x128xf32>
    %c8_i32_137 = arith.constant 8 : i32
    %219 = tpu.dynamic_rotate %218 by %c8_i32_137 dim 1 : vector<16x128xf32>, i32 -> vector<16x128xf32>
    %c27 = arith.constant 27 : index
    %c0_138 = arith.constant 0 : index
    %220 = vector.load %arg2[%c27, %c0_138] : memref<54x128xf32, #tpu.memory_space<vmem>>, vector<1x128xf32>
    %221 = vector.broadcast %220 : vector<1x128xf32> to vector<16x128xf32>
    %222 = arith.mulf %219, %221 : vector<16x128xf32>
    %c28 = arith.constant 28 : index
    %c0_139 = arith.constant 0 : index
    %223 = vector.load %arg2[%c28, %c0_139] : memref<54x128xf32, #tpu.memory_space<vmem>>, vector<1x128xf32>
    %224 = vector.broadcast %223 : vector<1x128xf32> to vector<16x128xf32>
    %225 = arith.mulf %218, %224 : vector<16x128xf32>
    %226 = arith.addf %222, %225 : vector<16x128xf32>
    %c120_i32_140 = arith.constant 120 : i32
    %227 = tpu.dynamic_rotate %218 by %c120_i32_140 dim 1 : vector<16x128xf32>, i32 -> vector<16x128xf32>
    %c29 = arith.constant 29 : index
    %c0_141 = arith.constant 0 : index
    %228 = vector.load %arg2[%c29, %c0_141] : memref<54x128xf32, #tpu.memory_space<vmem>>, vector<1x128xf32>
    %229 = vector.broadcast %228 : vector<1x128xf32> to vector<16x128xf32>
    %230 = arith.mulf %227, %229 : vector<16x128xf32>
    %231 = arith.addf %226, %230 : vector<16x128xf32>
    %c8_142 = arith.constant 8 : index
    %c0_143 = arith.constant 0 : index
    %232 = vector.load %arg7[%c8_142, %c0_143] : memref<32x128xf32, #tpu.memory_space<vmem>>, vector<16x128xf32>
    %c8_i32_144 = arith.constant 8 : i32
    %233 = tpu.dynamic_rotate %232 by %c8_i32_144 dim 1 : vector<16x128xf32>, i32 -> vector<16x128xf32>
    %c30 = arith.constant 30 : index
    %c0_145 = arith.constant 0 : index
    %234 = vector.load %arg2[%c30, %c0_145] : memref<54x128xf32, #tpu.memory_space<vmem>>, vector<1x128xf32>
    %235 = vector.broadcast %234 : vector<1x128xf32> to vector<16x128xf32>
    %236 = arith.mulf %233, %235 : vector<16x128xf32>
    %237 = arith.addf %231, %236 : vector<16x128xf32>
    %c31 = arith.constant 31 : index
    %c0_146 = arith.constant 0 : index
    %238 = vector.load %arg2[%c31, %c0_146] : memref<54x128xf32, #tpu.memory_space<vmem>>, vector<1x128xf32>
    %239 = vector.broadcast %238 : vector<1x128xf32> to vector<16x128xf32>
    %240 = arith.mulf %232, %239 : vector<16x128xf32>
    %241 = arith.addf %237, %240 : vector<16x128xf32>
    %c120_i32_147 = arith.constant 120 : i32
    %242 = tpu.dynamic_rotate %232 by %c120_i32_147 dim 1 : vector<16x128xf32>, i32 -> vector<16x128xf32>
    %c32 = arith.constant 32 : index
    %c0_148 = arith.constant 0 : index
    %243 = vector.load %arg2[%c32, %c0_148] : memref<54x128xf32, #tpu.memory_space<vmem>>, vector<1x128xf32>
    %244 = vector.broadcast %243 : vector<1x128xf32> to vector<16x128xf32>
    %245 = arith.mulf %242, %244 : vector<16x128xf32>
    %246 = arith.addf %241, %245 : vector<16x128xf32>
    %c9_149 = arith.constant 9 : index
    %c0_150 = arith.constant 0 : index
    %247 = vector.load %arg7[%c9_149, %c0_150] : memref<32x128xf32, #tpu.memory_space<vmem>>, vector<16x128xf32>
    %c8_i32_151 = arith.constant 8 : i32
    %248 = tpu.dynamic_rotate %247 by %c8_i32_151 dim 1 : vector<16x128xf32>, i32 -> vector<16x128xf32>
    %c33 = arith.constant 33 : index
    %c0_152 = arith.constant 0 : index
    %249 = vector.load %arg2[%c33, %c0_152] : memref<54x128xf32, #tpu.memory_space<vmem>>, vector<1x128xf32>
    %250 = vector.broadcast %249 : vector<1x128xf32> to vector<16x128xf32>
    %251 = arith.mulf %248, %250 : vector<16x128xf32>
    %252 = arith.addf %246, %251 : vector<16x128xf32>
    %c34 = arith.constant 34 : index
    %c0_153 = arith.constant 0 : index
    %253 = vector.load %arg2[%c34, %c0_153] : memref<54x128xf32, #tpu.memory_space<vmem>>, vector<1x128xf32>
    %254 = vector.broadcast %253 : vector<1x128xf32> to vector<16x128xf32>
    %255 = arith.mulf %247, %254 : vector<16x128xf32>
    %256 = arith.addf %252, %255 : vector<16x128xf32>
    %c120_i32_154 = arith.constant 120 : i32
    %257 = tpu.dynamic_rotate %247 by %c120_i32_154 dim 1 : vector<16x128xf32>, i32 -> vector<16x128xf32>
    %c35 = arith.constant 35 : index
    %c0_155 = arith.constant 0 : index
    %258 = vector.load %arg2[%c35, %c0_155] : memref<54x128xf32, #tpu.memory_space<vmem>>, vector<1x128xf32>
    %259 = vector.broadcast %258 : vector<1x128xf32> to vector<16x128xf32>
    %260 = arith.mulf %257, %259 : vector<16x128xf32>
    %261 = arith.addf %256, %260 : vector<16x128xf32>
    %262 = vector.extract_strided_slice %215 {offsets = [16, 0], sizes = [16, 128], strides = [1, 1]} : vector<32x128xf32> to vector<16x128xf32>
    %c8_156 = arith.constant 8 : index
    %c0_157 = arith.constant 0 : index
    %263 = vector.load %arg7[%c8_156, %c0_157] : memref<32x128xf32, #tpu.memory_space<vmem>>, vector<16x128xf32>
    tpu.vector_store %arg7[%c8_156, %c0_157], %262 {strides = array<i32>} : memref<32x128xf32, #tpu.memory_space<vmem>>, vector<16x128xf32>,
    %c7_158 = arith.constant 7 : index
    %c0_159 = arith.constant 0 : index
    %264 = vector.load %arg7[%c7_158, %c0_159] : memref<32x128xf32, #tpu.memory_space<vmem>>, vector<16x128xf32>
    %c8_i32_160 = arith.constant 8 : i32
    %265 = tpu.dynamic_rotate %264 by %c8_i32_160 dim 1 : vector<16x128xf32>, i32 -> vector<16x128xf32>
    %c27_161 = arith.constant 27 : index
    %c0_162 = arith.constant 0 : index
    %266 = vector.load %arg2[%c27_161, %c0_162] : memref<54x128xf32, #tpu.memory_space<vmem>>, vector<1x128xf32>
    %267 = vector.broadcast %266 : vector<1x128xf32> to vector<16x128xf32>
    %268 = arith.mulf %265, %267 : vector<16x128xf32>
    %c28_163 = arith.constant 28 : index
    %c0_164 = arith.constant 0 : index
    %269 = vector.load %arg2[%c28_163, %c0_164] : memref<54x128xf32, #tpu.memory_space<vmem>>, vector<1x128xf32>
    %270 = vector.broadcast %269 : vector<1x128xf32> to vector<16x128xf32>
    %271 = arith.mulf %264, %270 : vector<16x128xf32>
    %272 = arith.addf %268, %271 : vector<16x128xf32>
    %c120_i32_165 = arith.constant 120 : i32
    %273 = tpu.dynamic_rotate %264 by %c120_i32_165 dim 1 : vector<16x128xf32>, i32 -> vector<16x128xf32>
    %c29_166 = arith.constant 29 : index
    %c0_167 = arith.constant 0 : index
    %274 = vector.load %arg2[%c29_166, %c0_167] : memref<54x128xf32, #tpu.memory_space<vmem>>, vector<1x128xf32>
    %275 = vector.broadcast %274 : vector<1x128xf32> to vector<16x128xf32>
    %276 = arith.mulf %273, %275 : vector<16x128xf32>
    %277 = arith.addf %272, %276 : vector<16x128xf32>
    %c8_168 = arith.constant 8 : index
    %c0_169 = arith.constant 0 : index
    %278 = vector.load %arg7[%c8_168, %c0_169] : memref<32x128xf32, #tpu.memory_space<vmem>>, vector<16x128xf32>
    %c8_i32_170 = arith.constant 8 : i32
    %279 = tpu.dynamic_rotate %278 by %c8_i32_170 dim 1 : vector<16x128xf32>, i32 -> vector<16x128xf32>
    %c30_171 = arith.constant 30 : index
    %c0_172 = arith.constant 0 : index
    %280 = vector.load %arg2[%c30_171, %c0_172] : memref<54x128xf32, #tpu.memory_space<vmem>>, vector<1x128xf32>
    %281 = vector.broadcast %280 : vector<1x128xf32> to vector<16x128xf32>
    %282 = arith.mulf %279, %281 : vector<16x128xf32>
    %283 = arith.addf %277, %282 : vector<16x128xf32>
    %c31_173 = arith.constant 31 : index
    %c0_174 = arith.constant 0 : index
    %284 = vector.load %arg2[%c31_173, %c0_174] : memref<54x128xf32, #tpu.memory_space<vmem>>, vector<1x128xf32>
    %285 = vector.broadcast %284 : vector<1x128xf32> to vector<16x128xf32>
    %286 = arith.mulf %278, %285 : vector<16x128xf32>
    %287 = arith.addf %283, %286 : vector<16x128xf32>
    %c120_i32_175 = arith.constant 120 : i32
    %288 = tpu.dynamic_rotate %278 by %c120_i32_175 dim 1 : vector<16x128xf32>, i32 -> vector<16x128xf32>
    %c32_176 = arith.constant 32 : index
    %c0_177 = arith.constant 0 : index
    %289 = vector.load %arg2[%c32_176, %c0_177] : memref<54x128xf32, #tpu.memory_space<vmem>>, vector<1x128xf32>
    %290 = vector.broadcast %289 : vector<1x128xf32> to vector<16x128xf32>
    %291 = arith.mulf %288, %290 : vector<16x128xf32>
    %292 = arith.addf %287, %291 : vector<16x128xf32>
    %c9_178 = arith.constant 9 : index
    %c0_179 = arith.constant 0 : index
    %293 = vector.load %arg7[%c9_178, %c0_179] : memref<32x128xf32, #tpu.memory_space<vmem>>, vector<16x128xf32>
    %c8_i32_180 = arith.constant 8 : i32
    %294 = tpu.dynamic_rotate %293 by %c8_i32_180 dim 1 : vector<16x128xf32>, i32 -> vector<16x128xf32>
    %c33_181 = arith.constant 33 : index
    %c0_182 = arith.constant 0 : index
    %295 = vector.load %arg2[%c33_181, %c0_182] : memref<54x128xf32, #tpu.memory_space<vmem>>, vector<1x128xf32>
    %296 = vector.broadcast %295 : vector<1x128xf32> to vector<16x128xf32>
    %297 = arith.mulf %294, %296 : vector<16x128xf32>
    %298 = arith.addf %292, %297 : vector<16x128xf32>
    %c34_183 = arith.constant 34 : index
    %c0_184 = arith.constant 0 : index
    %299 = vector.load %arg2[%c34_183, %c0_184] : memref<54x128xf32, #tpu.memory_space<vmem>>, vector<1x128xf32>
    %300 = vector.broadcast %299 : vector<1x128xf32> to vector<16x128xf32>
    %301 = arith.mulf %293, %300 : vector<16x128xf32>
    %302 = arith.addf %298, %301 : vector<16x128xf32>
    %c120_i32_185 = arith.constant 120 : i32
    %303 = tpu.dynamic_rotate %293 by %c120_i32_185 dim 1 : vector<16x128xf32>, i32 -> vector<16x128xf32>
    %c35_186 = arith.constant 35 : index
    %c0_187 = arith.constant 0 : index
    %304 = vector.load %arg2[%c35_186, %c0_187] : memref<54x128xf32, #tpu.memory_space<vmem>>, vector<1x128xf32>
    %305 = vector.broadcast %304 : vector<1x128xf32> to vector<16x128xf32>
    %306 = arith.mulf %303, %305 : vector<16x128xf32>
    %307 = arith.addf %302, %306 : vector<16x128xf32>
    %308 = tpu.concatenate %261, %307 in 0 : vector<16x128xf32>, vector<16x128xf32> -> vector<32x128xf32>
    %c3_188 = arith.constant 3 : index
    %c0_189 = arith.constant 0 : index
    %309 = vector.load %arg3[%c3_188, %c0_189] : memref<6x128xf32, #tpu.memory_space<vmem>>, vector<1x128xf32>
    %310 = vector.broadcast %309 : vector<1x128xf32> to vector<32x128xf32>
    %311 = arith.addf %308, %310 : vector<32x128xf32>
    %cst_190 = arith.constant 0.000000e+00 : f32
    %312 = vector.broadcast %cst_190 : f32 to vector<32x128xf32>
    %313 = arith.maximumf %311, %312 : vector<32x128xf32>
    %c3_191 = arith.constant 3 : index
    %c0_192 = arith.constant 0 : index
    %c0_193 = arith.constant 0 : index
    %314 = vector.load %arg4[%c3_191, %c0_192, %c0_193] : memref<6x128x128xf32, #tpu.memory_space<vmem>>, vector<1x128x128xf32>
    %315 = vector.shape_cast %314 : vector<1x128x128xf32> to vector<128x128xf32>
    %cst_194 = arith.constant dense<0.000000e+00> : vector<32x128xf32>
    %316 = tpu.matmul %313, %315, %cst_194 {dimension_numbers = #tpu.dot_dimension_numbers<[1], [0], [0], [1], [0, 0, 1, 1], [], []>} : vector<32x128xf32>, vector<128x128xf32>, vector<32x128xf32> -> vector<32x128xf32>
    %c3_195 = arith.constant 3 : index
    %c0_196 = arith.constant 0 : index
    %317 = vector.load %arg5[%c3_195, %c0_196] : memref<6x128xf32, #tpu.memory_space<vmem>>, vector<1x128xf32>
    %318 = vector.broadcast %317 : vector<1x128xf32> to vector<32x128xf32>
    %319 = arith.addf %316, %318 : vector<32x128xf32>
    %cst_197 = arith.constant 0.000000e+00 : f32
    %320 = vector.broadcast %cst_197 : f32 to vector<32x128xf32>
    %321 = arith.maximumf %319, %320 : vector<32x128xf32>
    %322 = vector.extract_strided_slice %109 {offsets = [0, 0], sizes = [16, 128], strides = [1, 1]} : vector<32x128xf32> to vector<16x128xf32>
    %c8_198 = arith.constant 8 : index
    %c0_199 = arith.constant 0 : index
    %323 = vector.load %arg7[%c8_198, %c0_199] : memref<32x128xf32, #tpu.memory_space<vmem>>, vector<16x128xf32>
    tpu.vector_store %arg7[%c8_198, %c0_199], %322 {strides = array<i32>} : memref<32x128xf32, #tpu.memory_space<vmem>>, vector<16x128xf32>,
    %c7_200 = arith.constant 7 : index
    %c0_201 = arith.constant 0 : index
    %324 = vector.load %arg7[%c7_200, %c0_201] : memref<32x128xf32, #tpu.memory_space<vmem>>, vector<16x128xf32>
    %c8_i32_202 = arith.constant 8 : i32
    %325 = tpu.dynamic_rotate %324 by %c8_i32_202 dim 1 : vector<16x128xf32>, i32 -> vector<16x128xf32>
    %c45 = arith.constant 45 : index
    %c0_203 = arith.constant 0 : index
    %326 = vector.load %arg2[%c45, %c0_203] : memref<54x128xf32, #tpu.memory_space<vmem>>, vector<1x128xf32>
    %327 = vector.broadcast %326 : vector<1x128xf32> to vector<16x128xf32>
    %328 = arith.mulf %325, %327 : vector<16x128xf32>
    %c46 = arith.constant 46 : index
    %c0_204 = arith.constant 0 : index
    %329 = vector.load %arg2[%c46, %c0_204] : memref<54x128xf32, #tpu.memory_space<vmem>>, vector<1x128xf32>
    %330 = vector.broadcast %329 : vector<1x128xf32> to vector<16x128xf32>
    %331 = arith.mulf %324, %330 : vector<16x128xf32>
    %332 = arith.addf %328, %331 : vector<16x128xf32>
    %c120_i32_205 = arith.constant 120 : i32
    %333 = tpu.dynamic_rotate %324 by %c120_i32_205 dim 1 : vector<16x128xf32>, i32 -> vector<16x128xf32>
    %c47 = arith.constant 47 : index
    %c0_206 = arith.constant 0 : index
    %334 = vector.load %arg2[%c47, %c0_206] : memref<54x128xf32, #tpu.memory_space<vmem>>, vector<1x128xf32>
    %335 = vector.broadcast %334 : vector<1x128xf32> to vector<16x128xf32>
    %336 = arith.mulf %333, %335 : vector<16x128xf32>
    %337 = arith.addf %332, %336 : vector<16x128xf32>
    %c8_207 = arith.constant 8 : index
    %c0_208 = arith.constant 0 : index
    %338 = vector.load %arg7[%c8_207, %c0_208] : memref<32x128xf32, #tpu.memory_space<vmem>>, vector<16x128xf32>
    %c8_i32_209 = arith.constant 8 : i32
    %339 = tpu.dynamic_rotate %338 by %c8_i32_209 dim 1 : vector<16x128xf32>, i32 -> vector<16x128xf32>
    %c48 = arith.constant 48 : index
    %c0_210 = arith.constant 0 : index
    %340 = vector.load %arg2[%c48, %c0_210] : memref<54x128xf32, #tpu.memory_space<vmem>>, vector<1x128xf32>
    %341 = vector.broadcast %340 : vector<1x128xf32> to vector<16x128xf32>
    %342 = arith.mulf %339, %341 : vector<16x128xf32>
    %343 = arith.addf %337, %342 : vector<16x128xf32>
    %c49 = arith.constant 49 : index
    %c0_211 = arith.constant 0 : index
    %344 = vector.load %arg2[%c49, %c0_211] : memref<54x128xf32, #tpu.memory_space<vmem>>, vector<1x128xf32>
    %345 = vector.broadcast %344 : vector<1x128xf32> to vector<16x128xf32>
    %346 = arith.mulf %338, %345 : vector<16x128xf32>
    %347 = arith.addf %343, %346 : vector<16x128xf32>
    %c120_i32_212 = arith.constant 120 : i32
    %348 = tpu.dynamic_rotate %338 by %c120_i32_212 dim 1 : vector<16x128xf32>, i32 -> vector<16x128xf32>
    %c50 = arith.constant 50 : index
    %c0_213 = arith.constant 0 : index
    %349 = vector.load %arg2[%c50, %c0_213] : memref<54x128xf32, #tpu.memory_space<vmem>>, vector<1x128xf32>
    %350 = vector.broadcast %349 : vector<1x128xf32> to vector<16x128xf32>
    %351 = arith.mulf %348, %350 : vector<16x128xf32>
    %352 = arith.addf %347, %351 : vector<16x128xf32>
    %c9_214 = arith.constant 9 : index
    %c0_215 = arith.constant 0 : index
    %353 = vector.load %arg7[%c9_214, %c0_215] : memref<32x128xf32, #tpu.memory_space<vmem>>, vector<16x128xf32>
    %c8_i32_216 = arith.constant 8 : i32
    %354 = tpu.dynamic_rotate %353 by %c8_i32_216 dim 1 : vector<16x128xf32>, i32 -> vector<16x128xf32>
    %c51 = arith.constant 51 : index
    %c0_217 = arith.constant 0 : index
    %355 = vector.load %arg2[%c51, %c0_217] : memref<54x128xf32, #tpu.memory_space<vmem>>, vector<1x128xf32>
    %356 = vector.broadcast %355 : vector<1x128xf32> to vector<16x128xf32>
    %357 = arith.mulf %354, %356 : vector<16x128xf32>
    %358 = arith.addf %352, %357 : vector<16x128xf32>
    %c52 = arith.constant 52 : index
    %c0_218 = arith.constant 0 : index
    %359 = vector.load %arg2[%c52, %c0_218] : memref<54x128xf32, #tpu.memory_space<vmem>>, vector<1x128xf32>
    %360 = vector.broadcast %359 : vector<1x128xf32> to vector<16x128xf32>
    %361 = arith.mulf %353, %360 : vector<16x128xf32>
    %362 = arith.addf %358, %361 : vector<16x128xf32>
    %c120_i32_219 = arith.constant 120 : i32
    %363 = tpu.dynamic_rotate %353 by %c120_i32_219 dim 1 : vector<16x128xf32>, i32 -> vector<16x128xf32>
    %c53 = arith.constant 53 : index
    %c0_220 = arith.constant 0 : index
    %364 = vector.load %arg2[%c53, %c0_220] : memref<54x128xf32, #tpu.memory_space<vmem>>, vector<1x128xf32>
    %365 = vector.broadcast %364 : vector<1x128xf32> to vector<16x128xf32>
    %366 = arith.mulf %363, %365 : vector<16x128xf32>
    %367 = arith.addf %362, %366 : vector<16x128xf32>
    %368 = vector.extract_strided_slice %109 {offsets = [16, 0], sizes = [16, 128], strides = [1, 1]} : vector<32x128xf32> to vector<16x128xf32>
    %c8_221 = arith.constant 8 : index
    %c0_222 = arith.constant 0 : index
    %369 = vector.load %arg7[%c8_221, %c0_222] : memref<32x128xf32, #tpu.memory_space<vmem>>, vector<16x128xf32>
    tpu.vector_store %arg7[%c8_221, %c0_222], %368 {strides = array<i32>} : memref<32x128xf32, #tpu.memory_space<vmem>>, vector<16x128xf32>,
    %c7_223 = arith.constant 7 : index
    %c0_224 = arith.constant 0 : index
    %370 = vector.load %arg7[%c7_223, %c0_224] : memref<32x128xf32, #tpu.memory_space<vmem>>, vector<16x128xf32>
    %c8_i32_225 = arith.constant 8 : i32
    %371 = tpu.dynamic_rotate %370 by %c8_i32_225 dim 1 : vector<16x128xf32>, i32 -> vector<16x128xf32>
    %c45_226 = arith.constant 45 : index
    %c0_227 = arith.constant 0 : index
    %372 = vector.load %arg2[%c45_226, %c0_227] : memref<54x128xf32, #tpu.memory_space<vmem>>, vector<1x128xf32>
    %373 = vector.broadcast %372 : vector<1x128xf32> to vector<16x128xf32>
    %374 = arith.mulf %371, %373 : vector<16x128xf32>
    %c46_228 = arith.constant 46 : index
    %c0_229 = arith.constant 0 : index
    %375 = vector.load %arg2[%c46_228, %c0_229] : memref<54x128xf32, #tpu.memory_space<vmem>>, vector<1x128xf32>
    %376 = vector.broadcast %375 : vector<1x128xf32> to vector<16x128xf32>
    %377 = arith.mulf %370, %376 : vector<16x128xf32>
    %378 = arith.addf %374, %377 : vector<16x128xf32>
    %c120_i32_230 = arith.constant 120 : i32
    %379 = tpu.dynamic_rotate %370 by %c120_i32_230 dim 1 : vector<16x128xf32>, i32 -> vector<16x128xf32>
    %c47_231 = arith.constant 47 : index
    %c0_232 = arith.constant 0 : index
    %380 = vector.load %arg2[%c47_231, %c0_232] : memref<54x128xf32, #tpu.memory_space<vmem>>, vector<1x128xf32>
    %381 = vector.broadcast %380 : vector<1x128xf32> to vector<16x128xf32>
    %382 = arith.mulf %379, %381 : vector<16x128xf32>
    %383 = arith.addf %378, %382 : vector<16x128xf32>
    %c8_233 = arith.constant 8 : index
    %c0_234 = arith.constant 0 : index
    %384 = vector.load %arg7[%c8_233, %c0_234] : memref<32x128xf32, #tpu.memory_space<vmem>>, vector<16x128xf32>
    %c8_i32_235 = arith.constant 8 : i32
    %385 = tpu.dynamic_rotate %384 by %c8_i32_235 dim 1 : vector<16x128xf32>, i32 -> vector<16x128xf32>
    %c48_236 = arith.constant 48 : index
    %c0_237 = arith.constant 0 : index
    %386 = vector.load %arg2[%c48_236, %c0_237] : memref<54x128xf32, #tpu.memory_space<vmem>>, vector<1x128xf32>
    %387 = vector.broadcast %386 : vector<1x128xf32> to vector<16x128xf32>
    %388 = arith.mulf %385, %387 : vector<16x128xf32>
    %389 = arith.addf %383, %388 : vector<16x128xf32>
    %c49_238 = arith.constant 49 : index
    %c0_239 = arith.constant 0 : index
    %390 = vector.load %arg2[%c49_238, %c0_239] : memref<54x128xf32, #tpu.memory_space<vmem>>, vector<1x128xf32>
    %391 = vector.broadcast %390 : vector<1x128xf32> to vector<16x128xf32>
    %392 = arith.mulf %384, %391 : vector<16x128xf32>
    %393 = arith.addf %389, %392 : vector<16x128xf32>
    %c120_i32_240 = arith.constant 120 : i32
    %394 = tpu.dynamic_rotate %384 by %c120_i32_240 dim 1 : vector<16x128xf32>, i32 -> vector<16x128xf32>
    %c50_241 = arith.constant 50 : index
    %c0_242 = arith.constant 0 : index
    %395 = vector.load %arg2[%c50_241, %c0_242] : memref<54x128xf32, #tpu.memory_space<vmem>>, vector<1x128xf32>
    %396 = vector.broadcast %395 : vector<1x128xf32> to vector<16x128xf32>
    %397 = arith.mulf %394, %396 : vector<16x128xf32>
    %398 = arith.addf %393, %397 : vector<16x128xf32>
    %c9_243 = arith.constant 9 : index
    %c0_244 = arith.constant 0 : index
    %399 = vector.load %arg7[%c9_243, %c0_244] : memref<32x128xf32, #tpu.memory_space<vmem>>, vector<16x128xf32>
    %c8_i32_245 = arith.constant 8 : i32
    %400 = tpu.dynamic_rotate %399 by %c8_i32_245 dim 1 : vector<16x128xf32>, i32 -> vector<16x128xf32>
    %c51_246 = arith.constant 51 : index
    %c0_247 = arith.constant 0 : index
    %401 = vector.load %arg2[%c51_246, %c0_247] : memref<54x128xf32, #tpu.memory_space<vmem>>, vector<1x128xf32>
    %402 = vector.broadcast %401 : vector<1x128xf32> to vector<16x128xf32>
    %403 = arith.mulf %400, %402 : vector<16x128xf32>
    %404 = arith.addf %398, %403 : vector<16x128xf32>
    %c52_248 = arith.constant 52 : index
    %c0_249 = arith.constant 0 : index
    %405 = vector.load %arg2[%c52_248, %c0_249] : memref<54x128xf32, #tpu.memory_space<vmem>>, vector<1x128xf32>
    %406 = vector.broadcast %405 : vector<1x128xf32> to vector<16x128xf32>
    %407 = arith.mulf %399, %406 : vector<16x128xf32>
    %408 = arith.addf %404, %407 : vector<16x128xf32>
    %c120_i32_250 = arith.constant 120 : i32
    %409 = tpu.dynamic_rotate %399 by %c120_i32_250 dim 1 : vector<16x128xf32>, i32 -> vector<16x128xf32>
    %c53_251 = arith.constant 53 : index
    %c0_252 = arith.constant 0 : index
    %410 = vector.load %arg2[%c53_251, %c0_252] : memref<54x128xf32, #tpu.memory_space<vmem>>, vector<1x128xf32>
    %411 = vector.broadcast %410 : vector<1x128xf32> to vector<16x128xf32>
    %412 = arith.mulf %409, %411 : vector<16x128xf32>
    %413 = arith.addf %408, %412 : vector<16x128xf32>
    %414 = tpu.concatenate %367, %413 in 0 : vector<16x128xf32>, vector<16x128xf32> -> vector<32x128xf32>
    %c5_253 = arith.constant 5 : index
    %c0_254 = arith.constant 0 : index
    %415 = vector.load %arg3[%c5_253, %c0_254] : memref<6x128xf32, #tpu.memory_space<vmem>>, vector<1x128xf32>
    %416 = vector.broadcast %415 : vector<1x128xf32> to vector<32x128xf32>
    %417 = arith.addf %414, %416 : vector<32x128xf32>
    %cst_255 = arith.constant 0.000000e+00 : f32
    %418 = vector.broadcast %cst_255 : f32 to vector<32x128xf32>
    %419 = arith.maximumf %417, %418 : vector<32x128xf32>
    %c5_256 = arith.constant 5 : index
    %c0_257 = arith.constant 0 : index
    %c0_258 = arith.constant 0 : index
    %420 = vector.load %arg4[%c5_256, %c0_257, %c0_258] : memref<6x128x128xf32, #tpu.memory_space<vmem>>, vector<1x128x128xf32>
    %421 = vector.shape_cast %420 : vector<1x128x128xf32> to vector<128x128xf32>
    %cst_259 = arith.constant dense<0.000000e+00> : vector<32x128xf32>
    %422 = tpu.matmul %419, %421, %cst_259 {dimension_numbers = #tpu.dot_dimension_numbers<[1], [0], [0], [1], [0, 0, 1, 1], [], []>} : vector<32x128xf32>, vector<128x128xf32>, vector<32x128xf32> -> vector<32x128xf32>
    %c5_260 = arith.constant 5 : index
    %c0_261 = arith.constant 0 : index
    %423 = vector.load %arg5[%c5_260, %c0_261] : memref<6x128xf32, #tpu.memory_space<vmem>>, vector<1x128xf32>
    %424 = vector.broadcast %423 : vector<1x128xf32> to vector<32x128xf32>
    %425 = arith.addf %422, %424 : vector<32x128xf32>
    %cst_262 = arith.constant 0.000000e+00 : f32
    %426 = vector.broadcast %cst_262 : f32 to vector<32x128xf32>
    %427 = arith.maximumf %425, %426 : vector<32x128xf32>
    %428 = arith.addf %321, %427 : vector<32x128xf32>
    %429 = vector.extract_strided_slice %428 {offsets = [0, 0], sizes = [16, 128], strides = [1, 1]} : vector<32x128xf32> to vector<16x128xf32>
    %c8_263 = arith.constant 8 : index
    %c0_264 = arith.constant 0 : index
    %430 = vector.load %arg7[%c8_263, %c0_264] : memref<32x128xf32, #tpu.memory_space<vmem>>, vector<16x128xf32>
    tpu.vector_store %arg7[%c8_263, %c0_264], %429 {strides = array<i32>} : memref<32x128xf32, #tpu.memory_space<vmem>>, vector<16x128xf32>,
    %c7_265 = arith.constant 7 : index
    %c0_266 = arith.constant 0 : index
    %431 = vector.load %arg7[%c7_265, %c0_266] : memref<32x128xf32, #tpu.memory_space<vmem>>, vector<16x128xf32>
    %c8_i32_267 = arith.constant 8 : i32
    %432 = tpu.dynamic_rotate %431 by %c8_i32_267 dim 1 : vector<16x128xf32>, i32 -> vector<16x128xf32>
    %c18 = arith.constant 18 : index
    %c0_268 = arith.constant 0 : index
    %433 = vector.load %arg2[%c18, %c0_268] : memref<54x128xf32, #tpu.memory_space<vmem>>, vector<1x128xf32>
    %434 = vector.broadcast %433 : vector<1x128xf32> to vector<16x128xf32>
    %435 = arith.mulf %432, %434 : vector<16x128xf32>
    %c19 = arith.constant 19 : index
    %c0_269 = arith.constant 0 : index
    %436 = vector.load %arg2[%c19, %c0_269] : memref<54x128xf32, #tpu.memory_space<vmem>>, vector<1x128xf32>
    %437 = vector.broadcast %436 : vector<1x128xf32> to vector<16x128xf32>
    %438 = arith.mulf %431, %437 : vector<16x128xf32>
    %439 = arith.addf %435, %438 : vector<16x128xf32>
    %c120_i32_270 = arith.constant 120 : i32
    %440 = tpu.dynamic_rotate %431 by %c120_i32_270 dim 1 : vector<16x128xf32>, i32 -> vector<16x128xf32>
    %c20 = arith.constant 20 : index
    %c0_271 = arith.constant 0 : index
    %441 = vector.load %arg2[%c20, %c0_271] : memref<54x128xf32, #tpu.memory_space<vmem>>, vector<1x128xf32>
    %442 = vector.broadcast %441 : vector<1x128xf32> to vector<16x128xf32>
    %443 = arith.mulf %440, %442 : vector<16x128xf32>
    %444 = arith.addf %439, %443 : vector<16x128xf32>
    %c8_272 = arith.constant 8 : index
    %c0_273 = arith.constant 0 : index
    %445 = vector.load %arg7[%c8_272, %c0_273] : memref<32x128xf32, #tpu.memory_space<vmem>>, vector<16x128xf32>
    %c8_i32_274 = arith.constant 8 : i32
    %446 = tpu.dynamic_rotate %445 by %c8_i32_274 dim 1 : vector<16x128xf32>, i32 -> vector<16x128xf32>
    %c21 = arith.constant 21 : index
    %c0_275 = arith.constant 0 : index
    %447 = vector.load %arg2[%c21, %c0_275] : memref<54x128xf32, #tpu.memory_space<vmem>>, vector<1x128xf32>
    %448 = vector.broadcast %447 : vector<1x128xf32> to vector<16x128xf32>
    %449 = arith.mulf %446, %448 : vector<16x128xf32>
    %450 = arith.addf %444, %449 : vector<16x128xf32>
    %c22 = arith.constant 22 : index
    %c0_276 = arith.constant 0 : index
    %451 = vector.load %arg2[%c22, %c0_276] : memref<54x128xf32, #tpu.memory_space<vmem>>, vector<1x128xf32>
    %452 = vector.broadcast %451 : vector<1x128xf32> to vector<16x128xf32>
    %453 = arith.mulf %445, %452 : vector<16x128xf32>
    %454 = arith.addf %450, %453 : vector<16x128xf32>
    %c120_i32_277 = arith.constant 120 : i32
    %455 = tpu.dynamic_rotate %445 by %c120_i32_277 dim 1 : vector<16x128xf32>, i32 -> vector<16x128xf32>
    %c23 = arith.constant 23 : index
    %c0_278 = arith.constant 0 : index
    %456 = vector.load %arg2[%c23, %c0_278] : memref<54x128xf32, #tpu.memory_space<vmem>>, vector<1x128xf32>
    %457 = vector.broadcast %456 : vector<1x128xf32> to vector<16x128xf32>
    %458 = arith.mulf %455, %457 : vector<16x128xf32>
    %459 = arith.addf %454, %458 : vector<16x128xf32>
    %c9_279 = arith.constant 9 : index
    %c0_280 = arith.constant 0 : index
    %460 = vector.load %arg7[%c9_279, %c0_280] : memref<32x128xf32, #tpu.memory_space<vmem>>, vector<16x128xf32>
    %c8_i32_281 = arith.constant 8 : i32
    %461 = tpu.dynamic_rotate %460 by %c8_i32_281 dim 1 : vector<16x128xf32>, i32 -> vector<16x128xf32>
    %c24 = arith.constant 24 : index
    %c0_282 = arith.constant 0 : index
    %462 = vector.load %arg2[%c24, %c0_282] : memref<54x128xf32, #tpu.memory_space<vmem>>, vector<1x128xf32>
    %463 = vector.broadcast %462 : vector<1x128xf32> to vector<16x128xf32>
    %464 = arith.mulf %461, %463 : vector<16x128xf32>
    %465 = arith.addf %459, %464 : vector<16x128xf32>
    %c25 = arith.constant 25 : index
    %c0_283 = arith.constant 0 : index
    %466 = vector.load %arg2[%c25, %c0_283] : memref<54x128xf32, #tpu.memory_space<vmem>>, vector<1x128xf32>
    %467 = vector.broadcast %466 : vector<1x128xf32> to vector<16x128xf32>
    %468 = arith.mulf %460, %467 : vector<16x128xf32>
    %469 = arith.addf %465, %468 : vector<16x128xf32>
    %c120_i32_284 = arith.constant 120 : i32
    %470 = tpu.dynamic_rotate %460 by %c120_i32_284 dim 1 : vector<16x128xf32>, i32 -> vector<16x128xf32>
    %c26 = arith.constant 26 : index
    %c0_285 = arith.constant 0 : index
    %471 = vector.load %arg2[%c26, %c0_285] : memref<54x128xf32, #tpu.memory_space<vmem>>, vector<1x128xf32>
    %472 = vector.broadcast %471 : vector<1x128xf32> to vector<16x128xf32>
    %473 = arith.mulf %470, %472 : vector<16x128xf32>
    %474 = arith.addf %469, %473 : vector<16x128xf32>
    %475 = vector.extract_strided_slice %428 {offsets = [16, 0], sizes = [16, 128], strides = [1, 1]} : vector<32x128xf32> to vector<16x128xf32>
    %c8_286 = arith.constant 8 : index
    %c0_287 = arith.constant 0 : index
    %476 = vector.load %arg7[%c8_286, %c0_287] : memref<32x128xf32, #tpu.memory_space<vmem>>, vector<16x128xf32>
    tpu.vector_store %arg7[%c8_286, %c0_287], %475 {strides = array<i32>} : memref<32x128xf32, #tpu.memory_space<vmem>>, vector<16x128xf32>,
    %c7_288 = arith.constant 7 : index
    %c0_289 = arith.constant 0 : index
    %477 = vector.load %arg7[%c7_288, %c0_289] : memref<32x128xf32, #tpu.memory_space<vmem>>, vector<16x128xf32>
    %c8_i32_290 = arith.constant 8 : i32
    %478 = tpu.dynamic_rotate %477 by %c8_i32_290 dim 1 : vector<16x128xf32>, i32 -> vector<16x128xf32>
    %c18_291 = arith.constant 18 : index
    %c0_292 = arith.constant 0 : index
    %479 = vector.load %arg2[%c18_291, %c0_292] : memref<54x128xf32, #tpu.memory_space<vmem>>, vector<1x128xf32>
    %480 = vector.broadcast %479 : vector<1x128xf32> to vector<16x128xf32>
    %481 = arith.mulf %478, %480 : vector<16x128xf32>
    %c19_293 = arith.constant 19 : index
    %c0_294 = arith.constant 0 : index
    %482 = vector.load %arg2[%c19_293, %c0_294] : memref<54x128xf32, #tpu.memory_space<vmem>>, vector<1x128xf32>
    %483 = vector.broadcast %482 : vector<1x128xf32> to vector<16x128xf32>
    %484 = arith.mulf %477, %483 : vector<16x128xf32>
    %485 = arith.addf %481, %484 : vector<16x128xf32>
    %c120_i32_295 = arith.constant 120 : i32
    %486 = tpu.dynamic_rotate %477 by %c120_i32_295 dim 1 : vector<16x128xf32>, i32 -> vector<16x128xf32>
    %c20_296 = arith.constant 20 : index
    %c0_297 = arith.constant 0 : index
    %487 = vector.load %arg2[%c20_296, %c0_297] : memref<54x128xf32, #tpu.memory_space<vmem>>, vector<1x128xf32>
    %488 = vector.broadcast %487 : vector<1x128xf32> to vector<16x128xf32>
    %489 = arith.mulf %486, %488 : vector<16x128xf32>
    %490 = arith.addf %485, %489 : vector<16x128xf32>
    %c8_298 = arith.constant 8 : index
    %c0_299 = arith.constant 0 : index
    %491 = vector.load %arg7[%c8_298, %c0_299] : memref<32x128xf32, #tpu.memory_space<vmem>>, vector<16x128xf32>
    %c8_i32_300 = arith.constant 8 : i32
    %492 = tpu.dynamic_rotate %491 by %c8_i32_300 dim 1 : vector<16x128xf32>, i32 -> vector<16x128xf32>
    %c21_301 = arith.constant 21 : index
    %c0_302 = arith.constant 0 : index
    %493 = vector.load %arg2[%c21_301, %c0_302] : memref<54x128xf32, #tpu.memory_space<vmem>>, vector<1x128xf32>
    %494 = vector.broadcast %493 : vector<1x128xf32> to vector<16x128xf32>
    %495 = arith.mulf %492, %494 : vector<16x128xf32>
    %496 = arith.addf %490, %495 : vector<16x128xf32>
    %c22_303 = arith.constant 22 : index
    %c0_304 = arith.constant 0 : index
    %497 = vector.load %arg2[%c22_303, %c0_304] : memref<54x128xf32, #tpu.memory_space<vmem>>, vector<1x128xf32>
    %498 = vector.broadcast %497 : vector<1x128xf32> to vector<16x128xf32>
    %499 = arith.mulf %491, %498 : vector<16x128xf32>
    %500 = arith.addf %496, %499 : vector<16x128xf32>
    %c120_i32_305 = arith.constant 120 : i32
    %501 = tpu.dynamic_rotate %491 by %c120_i32_305 dim 1 : vector<16x128xf32>, i32 -> vector<16x128xf32>
    %c23_306 = arith.constant 23 : index
    %c0_307 = arith.constant 0 : index
    %502 = vector.load %arg2[%c23_306, %c0_307] : memref<54x128xf32, #tpu.memory_space<vmem>>, vector<1x128xf32>
    %503 = vector.broadcast %502 : vector<1x128xf32> to vector<16x128xf32>
    %504 = arith.mulf %501, %503 : vector<16x128xf32>
    %505 = arith.addf %500, %504 : vector<16x128xf32>
    %c9_308 = arith.constant 9 : index
    %c0_309 = arith.constant 0 : index
    %506 = vector.load %arg7[%c9_308, %c0_309] : memref<32x128xf32, #tpu.memory_space<vmem>>, vector<16x128xf32>
    %c8_i32_310 = arith.constant 8 : i32
    %507 = tpu.dynamic_rotate %506 by %c8_i32_310 dim 1 : vector<16x128xf32>, i32 -> vector<16x128xf32>
    %c24_311 = arith.constant 24 : index
    %c0_312 = arith.constant 0 : index
    %508 = vector.load %arg2[%c24_311, %c0_312] : memref<54x128xf32, #tpu.memory_space<vmem>>, vector<1x128xf32>
    %509 = vector.broadcast %508 : vector<1x128xf32> to vector<16x128xf32>
    %510 = arith.mulf %507, %509 : vector<16x128xf32>
    %511 = arith.addf %505, %510 : vector<16x128xf32>
    %c25_313 = arith.constant 25 : index
    %c0_314 = arith.constant 0 : index
    %512 = vector.load %arg2[%c25_313, %c0_314] : memref<54x128xf32, #tpu.memory_space<vmem>>, vector<1x128xf32>
    %513 = vector.broadcast %512 : vector<1x128xf32> to vector<16x128xf32>
    %514 = arith.mulf %506, %513 : vector<16x128xf32>
    %515 = arith.addf %511, %514 : vector<16x128xf32>
    %c120_i32_315 = arith.constant 120 : i32
    %516 = tpu.dynamic_rotate %506 by %c120_i32_315 dim 1 : vector<16x128xf32>, i32 -> vector<16x128xf32>
    %c26_316 = arith.constant 26 : index
    %c0_317 = arith.constant 0 : index
    %517 = vector.load %arg2[%c26_316, %c0_317] : memref<54x128xf32, #tpu.memory_space<vmem>>, vector<1x128xf32>
    %518 = vector.broadcast %517 : vector<1x128xf32> to vector<16x128xf32>
    %519 = arith.mulf %516, %518 : vector<16x128xf32>
    %520 = arith.addf %515, %519 : vector<16x128xf32>
    %521 = tpu.concatenate %474, %520 in 0 : vector<16x128xf32>, vector<16x128xf32> -> vector<32x128xf32>
    %c2_318 = arith.constant 2 : index
    %c0_319 = arith.constant 0 : index
    %522 = vector.load %arg3[%c2_318, %c0_319] : memref<6x128xf32, #tpu.memory_space<vmem>>, vector<1x128xf32>
    %523 = vector.broadcast %522 : vector<1x128xf32> to vector<32x128xf32>
    %524 = arith.addf %521, %523 : vector<32x128xf32>
    %cst_320 = arith.constant 0.000000e+00 : f32
    %525 = vector.broadcast %cst_320 : f32 to vector<32x128xf32>
    %526 = arith.maximumf %524, %525 : vector<32x128xf32>
    %c2_321 = arith.constant 2 : index
    %c0_322 = arith.constant 0 : index
    %c0_323 = arith.constant 0 : index
    %527 = vector.load %arg4[%c2_321, %c0_322, %c0_323] : memref<6x128x128xf32, #tpu.memory_space<vmem>>, vector<1x128x128xf32>
    %528 = vector.shape_cast %527 : vector<1x128x128xf32> to vector<128x128xf32>
    %cst_324 = arith.constant dense<0.000000e+00> : vector<32x128xf32>
    %529 = tpu.matmul %526, %528, %cst_324 {dimension_numbers = #tpu.dot_dimension_numbers<[1], [0], [0], [1], [0, 0, 1, 1], [], []>} : vector<32x128xf32>, vector<128x128xf32>, vector<32x128xf32> -> vector<32x128xf32>
    %c2_325 = arith.constant 2 : index
    %c0_326 = arith.constant 0 : index
    %530 = vector.load %arg5[%c2_325, %c0_326] : memref<6x128xf32, #tpu.memory_space<vmem>>, vector<1x128xf32>
    %531 = vector.broadcast %530 : vector<1x128xf32> to vector<32x128xf32>
    %532 = arith.addf %529, %531 : vector<32x128xf32>
    %cst_327 = arith.constant 0.000000e+00 : f32
    %533 = vector.broadcast %cst_327 : f32 to vector<32x128xf32>
    %534 = arith.maximumf %532, %533 : vector<32x128xf32>
    %535 = vector.extract_strided_slice %3 {offsets = [0, 0], sizes = [16, 128], strides = [1, 1]} : vector<32x128xf32> to vector<16x128xf32>
    %c8_328 = arith.constant 8 : index
    %c0_329 = arith.constant 0 : index
    %536 = vector.load %arg7[%c8_328, %c0_329] : memref<32x128xf32, #tpu.memory_space<vmem>>, vector<16x128xf32>
    tpu.vector_store %arg7[%c8_328, %c0_329], %535 {strides = array<i32>} : memref<32x128xf32, #tpu.memory_space<vmem>>, vector<16x128xf32>,
    %c7_330 = arith.constant 7 : index
    %c0_331 = arith.constant 0 : index
    %537 = vector.load %arg7[%c7_330, %c0_331] : memref<32x128xf32, #tpu.memory_space<vmem>>, vector<16x128xf32>
    %c8_i32_332 = arith.constant 8 : i32
    %538 = tpu.dynamic_rotate %537 by %c8_i32_332 dim 1 : vector<16x128xf32>, i32 -> vector<16x128xf32>
    %c36 = arith.constant 36 : index
    %c0_333 = arith.constant 0 : index
    %539 = vector.load %arg2[%c36, %c0_333] : memref<54x128xf32, #tpu.memory_space<vmem>>, vector<1x128xf32>
    %540 = vector.broadcast %539 : vector<1x128xf32> to vector<16x128xf32>
    %541 = arith.mulf %538, %540 : vector<16x128xf32>
    %c37 = arith.constant 37 : index
    %c0_334 = arith.constant 0 : index
    %542 = vector.load %arg2[%c37, %c0_334] : memref<54x128xf32, #tpu.memory_space<vmem>>, vector<1x128xf32>
    %543 = vector.broadcast %542 : vector<1x128xf32> to vector<16x128xf32>
    %544 = arith.mulf %537, %543 : vector<16x128xf32>
    %545 = arith.addf %541, %544 : vector<16x128xf32>
    %c120_i32_335 = arith.constant 120 : i32
    %546 = tpu.dynamic_rotate %537 by %c120_i32_335 dim 1 : vector<16x128xf32>, i32 -> vector<16x128xf32>
    %c38 = arith.constant 38 : index
    %c0_336 = arith.constant 0 : index
    %547 = vector.load %arg2[%c38, %c0_336] : memref<54x128xf32, #tpu.memory_space<vmem>>, vector<1x128xf32>
    %548 = vector.broadcast %547 : vector<1x128xf32> to vector<16x128xf32>
    %549 = arith.mulf %546, %548 : vector<16x128xf32>
    %550 = arith.addf %545, %549 : vector<16x128xf32>
    %c8_337 = arith.constant 8 : index
    %c0_338 = arith.constant 0 : index
    %551 = vector.load %arg7[%c8_337, %c0_338] : memref<32x128xf32, #tpu.memory_space<vmem>>, vector<16x128xf32>
    %c8_i32_339 = arith.constant 8 : i32
    %552 = tpu.dynamic_rotate %551 by %c8_i32_339 dim 1 : vector<16x128xf32>, i32 -> vector<16x128xf32>
    %c39 = arith.constant 39 : index
    %c0_340 = arith.constant 0 : index
    %553 = vector.load %arg2[%c39, %c0_340] : memref<54x128xf32, #tpu.memory_space<vmem>>, vector<1x128xf32>
    %554 = vector.broadcast %553 : vector<1x128xf32> to vector<16x128xf32>
    %555 = arith.mulf %552, %554 : vector<16x128xf32>
    %556 = arith.addf %550, %555 : vector<16x128xf32>
    %c40 = arith.constant 40 : index
    %c0_341 = arith.constant 0 : index
    %557 = vector.load %arg2[%c40, %c0_341] : memref<54x128xf32, #tpu.memory_space<vmem>>, vector<1x128xf32>
    %558 = vector.broadcast %557 : vector<1x128xf32> to vector<16x128xf32>
    %559 = arith.mulf %551, %558 : vector<16x128xf32>
    %560 = arith.addf %556, %559 : vector<16x128xf32>
    %c120_i32_342 = arith.constant 120 : i32
    %561 = tpu.dynamic_rotate %551 by %c120_i32_342 dim 1 : vector<16x128xf32>, i32 -> vector<16x128xf32>
    %c41 = arith.constant 41 : index
    %c0_343 = arith.constant 0 : index
    %562 = vector.load %arg2[%c41, %c0_343] : memref<54x128xf32, #tpu.memory_space<vmem>>, vector<1x128xf32>
    %563 = vector.broadcast %562 : vector<1x128xf32> to vector<16x128xf32>
    %564 = arith.mulf %561, %563 : vector<16x128xf32>
    %565 = arith.addf %560, %564 : vector<16x128xf32>
    %c9_344 = arith.constant 9 : index
    %c0_345 = arith.constant 0 : index
    %566 = vector.load %arg7[%c9_344, %c0_345] : memref<32x128xf32, #tpu.memory_space<vmem>>, vector<16x128xf32>
    %c8_i32_346 = arith.constant 8 : i32
    %567 = tpu.dynamic_rotate %566 by %c8_i32_346 dim 1 : vector<16x128xf32>, i32 -> vector<16x128xf32>
    %c42 = arith.constant 42 : index
    %c0_347 = arith.constant 0 : index
    %568 = vector.load %arg2[%c42, %c0_347] : memref<54x128xf32, #tpu.memory_space<vmem>>, vector<1x128xf32>
    %569 = vector.broadcast %568 : vector<1x128xf32> to vector<16x128xf32>
    %570 = arith.mulf %567, %569 : vector<16x128xf32>
    %571 = arith.addf %565, %570 : vector<16x128xf32>
    %c43 = arith.constant 43 : index
    %c0_348 = arith.constant 0 : index
    %572 = vector.load %arg2[%c43, %c0_348] : memref<54x128xf32, #tpu.memory_space<vmem>>, vector<1x128xf32>
    %573 = vector.broadcast %572 : vector<1x128xf32> to vector<16x128xf32>
    %574 = arith.mulf %566, %573 : vector<16x128xf32>
    %575 = arith.addf %571, %574 : vector<16x128xf32>
    %c120_i32_349 = arith.constant 120 : i32
    %576 = tpu.dynamic_rotate %566 by %c120_i32_349 dim 1 : vector<16x128xf32>, i32 -> vector<16x128xf32>
    %c44 = arith.constant 44 : index
    %c0_350 = arith.constant 0 : index
    %577 = vector.load %arg2[%c44, %c0_350] : memref<54x128xf32, #tpu.memory_space<vmem>>, vector<1x128xf32>
    %578 = vector.broadcast %577 : vector<1x128xf32> to vector<16x128xf32>
    %579 = arith.mulf %576, %578 : vector<16x128xf32>
    %580 = arith.addf %575, %579 : vector<16x128xf32>
    %581 = vector.extract_strided_slice %3 {offsets = [16, 0], sizes = [16, 128], strides = [1, 1]} : vector<32x128xf32> to vector<16x128xf32>
    %c8_351 = arith.constant 8 : index
    %c0_352 = arith.constant 0 : index
    %582 = vector.load %arg7[%c8_351, %c0_352] : memref<32x128xf32, #tpu.memory_space<vmem>>, vector<16x128xf32>
    tpu.vector_store %arg7[%c8_351, %c0_352], %581 {strides = array<i32>} : memref<32x128xf32, #tpu.memory_space<vmem>>, vector<16x128xf32>,
    %c7_353 = arith.constant 7 : index
    %c0_354 = arith.constant 0 : index
    %583 = vector.load %arg7[%c7_353, %c0_354] : memref<32x128xf32, #tpu.memory_space<vmem>>, vector<16x128xf32>
    %c8_i32_355 = arith.constant 8 : i32
    %584 = tpu.dynamic_rotate %583 by %c8_i32_355 dim 1 : vector<16x128xf32>, i32 -> vector<16x128xf32>
    %c36_356 = arith.constant 36 : index
    %c0_357 = arith.constant 0 : index
    %585 = vector.load %arg2[%c36_356, %c0_357] : memref<54x128xf32, #tpu.memory_space<vmem>>, vector<1x128xf32>
    %586 = vector.broadcast %585 : vector<1x128xf32> to vector<16x128xf32>
    %587 = arith.mulf %584, %586 : vector<16x128xf32>
    %c37_358 = arith.constant 37 : index
    %c0_359 = arith.constant 0 : index
    %588 = vector.load %arg2[%c37_358, %c0_359] : memref<54x128xf32, #tpu.memory_space<vmem>>, vector<1x128xf32>
    %589 = vector.broadcast %588 : vector<1x128xf32> to vector<16x128xf32>
    %590 = arith.mulf %583, %589 : vector<16x128xf32>
    %591 = arith.addf %587, %590 : vector<16x128xf32>
    %c120_i32_360 = arith.constant 120 : i32
    %592 = tpu.dynamic_rotate %583 by %c120_i32_360 dim 1 : vector<16x128xf32>, i32 -> vector<16x128xf32>
    %c38_361 = arith.constant 38 : index
    %c0_362 = arith.constant 0 : index
    %593 = vector.load %arg2[%c38_361, %c0_362] : memref<54x128xf32, #tpu.memory_space<vmem>>, vector<1x128xf32>
    %594 = vector.broadcast %593 : vector<1x128xf32> to vector<16x128xf32>
    %595 = arith.mulf %592, %594 : vector<16x128xf32>
    %596 = arith.addf %591, %595 : vector<16x128xf32>
    %c8_363 = arith.constant 8 : index
    %c0_364 = arith.constant 0 : index
    %597 = vector.load %arg7[%c8_363, %c0_364] : memref<32x128xf32, #tpu.memory_space<vmem>>, vector<16x128xf32>
    %c8_i32_365 = arith.constant 8 : i32
    %598 = tpu.dynamic_rotate %597 by %c8_i32_365 dim 1 : vector<16x128xf32>, i32 -> vector<16x128xf32>
    %c39_366 = arith.constant 39 : index
    %c0_367 = arith.constant 0 : index
    %599 = vector.load %arg2[%c39_366, %c0_367] : memref<54x128xf32, #tpu.memory_space<vmem>>, vector<1x128xf32>
    %600 = vector.broadcast %599 : vector<1x128xf32> to vector<16x128xf32>
    %601 = arith.mulf %598, %600 : vector<16x128xf32>
    %602 = arith.addf %596, %601 : vector<16x128xf32>
    %c40_368 = arith.constant 40 : index
    %c0_369 = arith.constant 0 : index
    %603 = vector.load %arg2[%c40_368, %c0_369] : memref<54x128xf32, #tpu.memory_space<vmem>>, vector<1x128xf32>
    %604 = vector.broadcast %603 : vector<1x128xf32> to vector<16x128xf32>
    %605 = arith.mulf %597, %604 : vector<16x128xf32>
    %606 = arith.addf %602, %605 : vector<16x128xf32>
    %c120_i32_370 = arith.constant 120 : i32
    %607 = tpu.dynamic_rotate %597 by %c120_i32_370 dim 1 : vector<16x128xf32>, i32 -> vector<16x128xf32>
    %c41_371 = arith.constant 41 : index
    %c0_372 = arith.constant 0 : index
    %608 = vector.load %arg2[%c41_371, %c0_372] : memref<54x128xf32, #tpu.memory_space<vmem>>, vector<1x128xf32>
    %609 = vector.broadcast %608 : vector<1x128xf32> to vector<16x128xf32>
    %610 = arith.mulf %607, %609 : vector<16x128xf32>
    %611 = arith.addf %606, %610 : vector<16x128xf32>
    %c9_373 = arith.constant 9 : index
    %c0_374 = arith.constant 0 : index
    %612 = vector.load %arg7[%c9_373, %c0_374] : memref<32x128xf32, #tpu.memory_space<vmem>>, vector<16x128xf32>
    %c8_i32_375 = arith.constant 8 : i32
    %613 = tpu.dynamic_rotate %612 by %c8_i32_375 dim 1 : vector<16x128xf32>, i32 -> vector<16x128xf32>
    %c42_376 = arith.constant 42 : index
    %c0_377 = arith.constant 0 : index
    %614 = vector.load %arg2[%c42_376, %c0_377] : memref<54x128xf32, #tpu.memory_space<vmem>>, vector<1x128xf32>
    %615 = vector.broadcast %614 : vector<1x128xf32> to vector<16x128xf32>
    %616 = arith.mulf %613, %615 : vector<16x128xf32>
    %617 = arith.addf %611, %616 : vector<16x128xf32>
    %c43_378 = arith.constant 43 : index
    %c0_379 = arith.constant 0 : index
    %618 = vector.load %arg2[%c43_378, %c0_379] : memref<54x128xf32, #tpu.memory_space<vmem>>, vector<1x128xf32>
    %619 = vector.broadcast %618 : vector<1x128xf32> to vector<16x128xf32>
    %620 = arith.mulf %612, %619 : vector<16x128xf32>
    %621 = arith.addf %617, %620 : vector<16x128xf32>
    %c120_i32_380 = arith.constant 120 : i32
    %622 = tpu.dynamic_rotate %612 by %c120_i32_380 dim 1 : vector<16x128xf32>, i32 -> vector<16x128xf32>
    %c44_381 = arith.constant 44 : index
    %c0_382 = arith.constant 0 : index
    %623 = vector.load %arg2[%c44_381, %c0_382] : memref<54x128xf32, #tpu.memory_space<vmem>>, vector<1x128xf32>
    %624 = vector.broadcast %623 : vector<1x128xf32> to vector<16x128xf32>
    %625 = arith.mulf %622, %624 : vector<16x128xf32>
    %626 = arith.addf %621, %625 : vector<16x128xf32>
    %627 = tpu.concatenate %580, %626 in 0 : vector<16x128xf32>, vector<16x128xf32> -> vector<32x128xf32>
    %c4_383 = arith.constant 4 : index
    %c0_384 = arith.constant 0 : index
    %628 = vector.load %arg3[%c4_383, %c0_384] : memref<6x128xf32, #tpu.memory_space<vmem>>, vector<1x128xf32>
    %629 = vector.broadcast %628 : vector<1x128xf32> to vector<32x128xf32>
    %630 = arith.addf %627, %629 : vector<32x128xf32>
    %cst_385 = arith.constant 0.000000e+00 : f32
    %631 = vector.broadcast %cst_385 : f32 to vector<32x128xf32>
    %632 = arith.maximumf %630, %631 : vector<32x128xf32>
    %c4_386 = arith.constant 4 : index
    %c0_387 = arith.constant 0 : index
    %c0_388 = arith.constant 0 : index
    %633 = vector.load %arg4[%c4_386, %c0_387, %c0_388] : memref<6x128x128xf32, #tpu.memory_space<vmem>>, vector<1x128x128xf32>
    %634 = vector.shape_cast %633 : vector<1x128x128xf32> to vector<128x128xf32>
    %cst_389 = arith.constant dense<0.000000e+00> : vector<32x128xf32>
    %635 = tpu.matmul %632, %634, %cst_389 {dimension_numbers = #tpu.dot_dimension_numbers<[1], [0], [0], [1], [0, 0, 1, 1], [], []>} : vector<32x128xf32>, vector<128x128xf32>, vector<32x128xf32> -> vector<32x128xf32>
    %c4_390 = arith.constant 4 : index
    %c0_391 = arith.constant 0 : index
    %636 = vector.load %arg5[%c4_390, %c0_391] : memref<6x128xf32, #tpu.memory_space<vmem>>, vector<1x128xf32>
    %637 = vector.broadcast %636 : vector<1x128xf32> to vector<32x128xf32>
    %638 = arith.addf %635, %637 : vector<32x128xf32>
    %cst_392 = arith.constant 0.000000e+00 : f32
    %639 = vector.broadcast %cst_392 : f32 to vector<32x128xf32>
    %640 = arith.maximumf %638, %639 : vector<32x128xf32>
    %641 = arith.addf %534, %640 : vector<32x128xf32>
    %642 = vector.shape_cast %641 : vector<32x128xf32> to vector<2x16x128xf32>
    %c0_393 = arith.constant 0 : index
    %c0_394 = arith.constant 0 : index
    %c0_395 = arith.constant 0 : index
    %643 = vector.load %arg6[%c0_393, %c0_394, %c0_395] : memref<2x16x128xf32, #tpu.memory_space<vmem>>, vector<2x16x128xf32>
    tpu.vector_store %arg6[%c0_393, %c0_394, %c0_395], %642 {strides = array<i32>} : memref<2x16x128xf32, #tpu.memory_space<vmem>>, vector<2x16x128xf32>,
    return
  }
  func.func @transform_0(%arg0: i32) -> (i32, i32, i32) {
    %c0_i32 = arith.constant 0 : i32
    %c0_i32_0 = arith.constant 0 : i32
    %c0_i32_1 = arith.constant 0 : i32
    return %arg0, %c0_i32, %c0_i32_0 : i32, i32, i32
  }
  func.func @transform_1(%arg0: i32) -> (i32, i32) {
    %c0_i32 = arith.constant 0 : i32
    %c0_i32_0 = arith.constant 0 : i32
    %c0_i32_1 = arith.constant 0 : i32
    return %c0_i32, %c0_i32_0 : i32, i32
  }
  func.func @transform_2(%arg0: i32) -> (i32, i32) {
    %c0_i32 = arith.constant 0 : i32
    %c0_i32_0 = arith.constant 0 : i32
    %c0_i32_1 = arith.constant 0 : i32
    return %c0_i32, %c0_i32_0 : i32, i32
  }
  func.func @transform_3(%arg0: i32) -> (i32, i32, i32) {
    %c0_i32 = arith.constant 0 : i32
    %c0_i32_0 = arith.constant 0 : i32
    %c0_i32_1 = arith.constant 0 : i32
    %c0_i32_2 = arith.constant 0 : i32
    return %c0_i32, %c0_i32_0, %c0_i32_1 : i32, i32, i32
  }
  func.func @transform_4(%arg0: i32) -> (i32, i32) {
    %c0_i32 = arith.constant 0 : i32
    %c0_i32_0 = arith.constant 0 : i32
    %c0_i32_1 = arith.constant 0 : i32
    return %c0_i32, %c0_i32_0 : i32, i32
  }
  func.func @transform_5(%arg0: i32) -> (i32, i32, i32) {
    %c0_i32 = arith.constant 0 : i32
    %c0_i32_0 = arith.constant 0 : i32
    %c0_i32_1 = arith.constant 0 : i32
    return %arg0, %c0_i32, %c0_i32_0 : i32, i32, i32
  }
}

</mosaic_0001>

<llo_original>
// kernel: tpu_custom_call.1
$region0: #{tpu_custom_call.1}
  #allocation0 [shape = 'u32[]', space=smem, size = 0x4, offset = 0x4, fixed_abs, tag = 'smem constant byte address 0x4 - core index']
  #allocation1 [shape = 'u32[144,128]{1,0:T(1,128)}', space=vmem, size = 0x12000, scoped, tag = 'internal scratch']
  #allocation2 [shape = 'f32[32,128]{1,0:T(8,128)}', space=vmem, size = 0x4000, scoped, tag = 'scratch operand']
  %s0 = inlined_call_operand.hbm [shape: f32[2,16,128], index: 0, kind: input, shape index: {}]
  %s1 = inlined_call_operand.hbm [shape: f32[54,128], index: 1, kind: input, shape index: {}]
  %s2 = inlined_call_operand.hbm [shape: f32[6,128], index: 2, kind: input, shape index: {}]
  %s3 = inlined_call_operand.hbm [shape: f32[6,128,128], index: 3, kind: input, shape index: {}]
  %s4 = inlined_call_operand.hbm [shape: f32[6,128], index: 4, kind: input, shape index: {}]
  %s5 = inlined_call_operand.hbm [shape: f32[2,16,128], index: 5, kind: output, shape index: {}]
  %s6 = sld [smem:[#allocation0]]
  $region50: #{tpu_custom_call.1} parent=0
    _
  %s8 = ssub.s32 1, %s6
  %s9 = scalar_select 0, %s8, %s6
  $region1: #{tpu_custom_call.1} parent=0
    #allocation3 [shape = 'u8[16384]{0}', space=vmem, size = 0x4000, scoped, tag = 'input window, operand 0, single buffered']
    #allocation4 [shape = 's32[1]{0}', space=sflag, size = 0x4, scoped, tag = 'scoped memory for tpu_custom_call.1']
    #allocation5 [shape = 's32[1]{0}', space=sflag, size = 0x4, scoped, tag = 'scoped memory for tpu_custom_call.1']
    #allocation6 [shape = 'u8[28672]{0}', space=vmem, size = 0x7000, scoped, tag = 'input window, operand 1, single buffered']
    #allocation7 [shape = 's32[1]{0}', space=sflag, size = 0x4, scoped, tag = 'scoped memory for tpu_custom_call.1']
    #allocation8 [shape = 'u8[4096]{0}', space=vmem, size = 0x1000, scoped, tag = 'input window, operand 2, single buffered']
    #allocation9 [shape = 'u8[393216]{0}', space=vmem, size = 0x60000, scoped, tag = 'input window, operand 3, single buffered']
    #allocation10 [shape = 's32[1]{0}', space=sflag, size = 0x4, scoped, tag = 'scoped memory for tpu_custom_call.1']
    #allocation11 [shape = 'u8[4096]{0}', space=vmem, size = 0x1000, scoped, tag = 'input window, operand 4, single buffered']
    #allocation12 [shape = 'u8[16384]{0}', space=vmem, size = 0x4000, scoped, tag = 'output window, operand 0, single buffered']
    %10 = vsyncpa [#allocation4], 0
    %11 = vsyncpa [#allocation7], 0
    %12 = vsyncpa [#allocation10], 0
    %13 = vsyncpa [#allocation5], 0
    // Predicated region
    $region2: #{tpu_custom_call.1} parent=1 // pred_check
      _
    $region3: #{tpu_custom_call.1} parent=1 // pred_check_branch
      %15 = sbr.rel (0) target = $region5
    $region4: #{tpu_custom_call.1} parent=1 // pred_region
      %s17 = ssub.s32 512, 512
      %18 = vsyncadd [#allocation4], %s17
      %s19 = sshll.u32 [#allocation3], 4
      %s20 = int_to_ptr.vmem [resolvable:$true] %s19
      %25 = dma.hbm_to_vmem [thread:$0]  %s0, 512, %s20, [#allocation4], 128, 128, 8
    $region5: #{tpu_custom_call.1} parent=1 // pred_fallthru
      _
    // Predicated region
    $region6: #{tpu_custom_call.1} parent=1 // pred_check
      _
    $region7: #{tpu_custom_call.1} parent=1 // pred_check_branch
      %27 = sbr.rel (0) target = $region9
    $region8: #{tpu_custom_call.1} parent=1 // pred_region
      %s29 = ssub.s32 896, 896
      %30 = vsyncadd [#allocation7], %s29
      %s31 = sshll.u32 [#allocation6], 4
      %s32 = int_to_ptr.vmem [resolvable:$true] %s31
      %37 = dma.hbm_to_vmem [thread:$0]  %s1, 896, %s32, [#allocation7], 128, 128, 8
    $region9: #{tpu_custom_call.1} parent=1 // pred_fallthru
      _
    // Predicated region
    $region10: #{tpu_custom_call.1} parent=1 // pred_check
      _
    $region11: #{tpu_custom_call.1} parent=1 // pred_check_branch
      %39 = sbr.rel (0) target = $region13
    $region12: #{tpu_custom_call.1} parent=1 // pred_region
      %s41 = ssub.s32 128, 128
      %42 = vsyncadd [#allocation7], %s41
      %s44 = sshll.u32 [#allocation8], 4
      %s45 = int_to_ptr.vmem [resolvable:$true] %s44
      %47 = dma.hbm_to_vmem [thread:$0]  %s2, 128, %s45, [#allocation7]
    $region13: #{tpu_custom_call.1} parent=1 // pred_fallthru
      _
    // Predicated region
    $region14: #{tpu_custom_call.1} parent=1 // pred_check
      _
    $region15: #{tpu_custom_call.1} parent=1 // pred_check_branch
      %49 = sbr.rel (0) target = $region17
    $region16: #{tpu_custom_call.1} parent=1 // pred_region
      %s51 = ssub.s32 12288, 12288
      %52 = vsyncadd [#allocation10], %s51
      %s53 = sshll.u32 [#allocation9], 4
      %s54 = int_to_ptr.vmem [resolvable:$true] %s53
      %59 = dma.hbm_to_vmem [thread:$0]  %s3, 12288, %s54, [#allocation10], 128, 128, 8
    $region17: #{tpu_custom_call.1} parent=1 // pred_fallthru
      _
    // Predicated region
    $region18: #{tpu_custom_call.1} parent=1 // pred_check
      _
    $region19: #{tpu_custom_call.1} parent=1 // pred_check_branch
      %61 = sbr.rel (0) target = $region21
    $region20: #{tpu_custom_call.1} parent=1 // pred_region
      %s63 = ssub.s32 128, 128
      %64 = vsyncadd [#allocation10], %s63
      %s66 = sshll.u32 [#allocation11], 4
      %s67 = int_to_ptr.vmem [resolvable:$true] %s66
      %69 = dma.hbm_to_vmem [thread:$0]  %s4, 128, %s67, [#allocation10]
    $region21: #{tpu_custom_call.1} parent=1 // pred_fallthru
      _
    // Predicated region
    $region22: #{tpu_custom_call.1} parent=1 // pred_check
      _
    $region23: #{tpu_custom_call.1} parent=1 // pred_check_branch
      %71 = sbr.rel (0) target = $region25
    $region24: #{tpu_custom_call.1} parent=1 // pred_region
      %72 = dma.done [#allocation4], 512
    $region25: #{tpu_custom_call.1} parent=1 // pred_fallthru
      _
    // Predicated region
    $region26: #{tpu_custom_call.1} parent=1 // pred_check
      _
    $region27: #{tpu_custom_call.1} parent=1 // pred_check_branch
      %74 = sbr.rel (0) target = $region29
    $region28: #{tpu_custom_call.1} parent=1 // pred_region
      %75 = dma.done [#allocation7], 896
    $region29: #{tpu_custom_call.1} parent=1 // pred_fallthru
      _
    // Predicated region
    $region30: #{tpu_custom_call.1} parent=1 // pred_check
      _
    $region31: #{tpu_custom_call.1} parent=1 // pred_check_branch
      %77 = sbr.rel (0) target = $region33
    $region32: #{tpu_custom_call.1} parent=1 // pred_region
      %78 = dma.done [#allocation7], 128
    $region33: #{tpu_custom_call.1} parent=1 // pred_fallthru
      _
    // Predicated region
    $region34: #{tpu_custom_call.1} parent=1 // pred_check
      _
    $region35: #{tpu_custom_call.1} parent=1 // pred_check_branch
      %80 = sbr.rel (0) target = $region37
    $region36: #{tpu_custom_call.1} parent=1 // pred_region
      %81 = dma.done [#allocation10], 12288
    $region37: #{tpu_custom_call.1} parent=1 // pred_fallthru
      _
    // Predicated region
    $region38: #{tpu_custom_call.1} parent=1 // pred_check
      _
    $region39: #{tpu_custom_call.1} parent=1 // pred_check_branch
      %83 = sbr.rel (0) target = $region41
    $region40: #{tpu_custom_call.1} parent=1 // pred_region
      %84 = dma.done [#allocation10], 128
    $region41: #{tpu_custom_call.1} parent=1 // pred_fallthru
      _
    %85 = vst [vmem:[#allocation2] sm:$0xff] 0.0
    %86 = vst [vmem:[#allocation2 + $0x8] sm:$0xff] 0.0
    %87 = vst [vmem:[#allocation2 + $0x10] sm:$0xff] 0.0
    %88 = vst [vmem:[#allocation2 + $0x18] sm:$0xff] 0.0
    %v89 = vld [vmem:[#allocation3] sm:$0xff]
    %v90 = vld [vmem:[#allocation3 + $0x8] sm:$0xff]
    %v91 = vld [vmem:[#allocation3 + $0x10] sm:$0xff]
    %v92 = vld [vmem:[#allocation3 + $0x18] sm:$0xff]
    %93 = vst [vmem:[#allocation2 + $0x8] sm:$0xff] %v89
    %94 = vst [vmem:[#allocation2 + $0x10] sm:$0xff] %v90
    %v95 = vld [vmem:[#allocation2 + $0x7] sm:$0xff]
    %v96 = vld [vmem:[#allocation2 + $0xf] sm:$0xff]
    %97 = vrot.lane.b32.xlu0 %v95, 8
    %v98 = vpop.permute.xlu0 %97
    %99 = vrot.lane.b32.xlu0 %v96, 8
    %v100 = vpop.permute.xlu0 %99
    %v101 = vld [vmem:[#allocation6] sm:$0x1]
    %v102 = vlaneseq
    %v103 = vshrl.u32 %v102, 7
    %v104 = vsub.s32 0, %v103
    %v105 = vrot.slane %v101, %v104
    %v106 = vmul.f32 %v98, %v105
    %v107 = vmul.f32 %v100, %v105
    %v108 = vld [vmem:[#allocation6 + $0x1] sm:$0x1]
    %v109 = vlaneseq
    %v110 = vshrl.u32 %v109, 7
    %v111 = vsub.s32 0, %v110
    %v112 = vrot.slane %v108, %v111
    %v113 = vmul.f32 %v95, %v112
    %v114 = vmul.f32 %v96, %v112
    %v115 = vadd.f32 %v106, %v113
    %v116 = vadd.f32 %v107, %v114
    %117 = vrot.lane.b32.xlu0 %v95, 120
    %v118 = vpop.permute.xlu0 %117
    %119 = vrot.lane.b32.xlu0 %v96, 120
    %v120 = vpop.permute.xlu0 %119
    %v121 = vld [vmem:[#allocation6 + $0x2] sm:$0x1]
    %v122 = vlaneseq
    %v123 = vshrl.u32 %v122, 7
    %v124 = vsub.s32 0, %v123
    %v125 = vrot.slane %v121, %v124
    %v126 = vmul.f32 %v118, %v125
    %v127 = vmul.f32 %v120, %v125
    %v128 = vadd.f32 %v115, %v126
    %v129 = vadd.f32 %v116, %v127
    %v130 = vld [vmem:[#allocation2 + $0x8] sm:$0xff]
    %v131 = vld [vmem:[#allocation2 + $0x10] sm:$0xff]
    %132 = vrot.lane.b32.xlu0 %v130, 8
    %v133 = vpop.permute.xlu0 %132
    %134 = vrot.lane.b32.xlu0 %v131, 8
    %v135 = vpop.permute.xlu0 %134
    %v136 = vld [vmem:[#allocation6 + $0x3] sm:$0x1]
    %v137 = vlaneseq
    %v138 = vshrl.u32 %v137, 7
    %v139 = vsub.s32 0, %v138
    %v140 = vrot.slane %v136, %v139
    %v141 = vmul.f32 %v133, %v140
    %v142 = vmul.f32 %v135, %v140
    %v143 = vadd.f32 %v128, %v141
    %v144 = vadd.f32 %v129, %v142
    %v145 = vld [vmem:[#allocation6 + $0x4] sm:$0x1]
    %v146 = vlaneseq
    %v147 = vshrl.u32 %v146, 7
    %v148 = vsub.s32 0, %v147
    %v149 = vrot.slane %v145, %v148
    %v150 = vmul.f32 %v130, %v149
    %v151 = vmul.f32 %v131, %v149
    %v152 = vadd.f32 %v143, %v150
    %v153 = vadd.f32 %v144, %v151
    %154 = vrot.lane.b32.xlu0 %v130, 120
    %v155 = vpop.permute.xlu0 %154
    %156 = vrot.lane.b32.xlu0 %v131, 120
    %v157 = vpop.permute.xlu0 %156
    %v158 = vld [vmem:[#allocation6 + $0x5] sm:$0x1]
    %v159 = vlaneseq
    %v160 = vshrl.u32 %v159, 7
    %v161 = vsub.s32 0, %v160
    %v162 = vrot.slane %v158, %v161
    %v163 = vmul.f32 %v155, %v162
    %v164 = vmul.f32 %v157, %v162
    %v165 = vadd.f32 %v152, %v163
    %v166 = vadd.f32 %v153, %v164
    %v167 = vld [vmem:[#allocation2 + $0x9] sm:$0xff]
    %v168 = vld [vmem:[#allocation2 + $0x11] sm:$0xff]
    %169 = vrot.lane.b32.xlu0 %v167, 8
    %v170 = vpop.permute.xlu0 %169
    %171 = vrot.lane.b32.xlu0 %v168, 8
    %v172 = vpop.permute.xlu0 %171
    %v173 = vld [vmem:[#allocation6 + $0x6] sm:$0x1]
    %v174 = vlaneseq
    %v175 = vshrl.u32 %v174, 7
    %v176 = vsub.s32 0, %v175
    %v177 = vrot.slane %v173, %v176
    %v178 = vmul.f32 %v170, %v177
    %v179 = vmul.f32 %v172, %v177
    %v180 = vadd.f32 %v165, %v178
    %v181 = vadd.f32 %v166, %v179
    %v182 = vld [vmem:[#allocation6 + $0x7] sm:$0x1]
    %v183 = vlaneseq
    %v184 = vshrl.u32 %v183, 7
    %v185 = vsub.s32 0, %v184
    %v186 = vrot.slane %v182, %v185
    %v187 = vmul.f32 %v167, %v186
    %v188 = vmul.f32 %v168, %v186
    %v189 = vadd.f32 %v180, %v187
    %v190 = vadd.f32 %v181, %v188
    %191 = vrot.lane.b32.xlu0 %v167, 120
    %v192 = vpop.permute.xlu0 %191
    %193 = vrot.lane.b32.xlu0 %v168, 120
    %v194 = vpop.permute.xlu0 %193
    %v195 = vld [vmem:[#allocation6 + $0x8] sm:$0x1]
    %v196 = vlaneseq
    %v197 = vshrl.u32 %v196, 7
    %v198 = vsub.s32 0, %v197
    %v199 = vrot.slane %v195, %v198
    %v200 = vmul.f32 %v192, %v199
    %v201 = vmul.f32 %v194, %v199
    %v202 = vadd.f32 %v189, %v200
    %v203 = vadd.f32 %v190, %v201
    %204 = vst [vmem:[#allocation2 + $0x8] sm:$0xff] %v91
    %205 = vst [vmem:[#allocation2 + $0x10] sm:$0xff] %v92
    %v206 = vld [vmem:[#allocation2 + $0x7] sm:$0xff]
    %v207 = vld [vmem:[#allocation2 + $0xf] sm:$0xff]
    %208 = vrot.lane.b32.xlu0 %v206, 8
    %v209 = vpop.permute.xlu0 %208
    %210 = vrot.lane.b32.xlu0 %v207, 8
    %v211 = vpop.permute.xlu0 %210
    %v212 = vld [vmem:[#allocation6] sm:$0x1]
    %v213 = vlaneseq
    %v214 = vshrl.u32 %v213, 7
    %v215 = vsub.s32 0, %v214
    %v216 = vrot.slane %v212, %v215
    %v217 = vmul.f32 %v209, %v216
    %v218 = vmul.f32 %v211, %v216
    %v219 = vld [vmem:[#allocation6 + $0x1] sm:$0x1]
    %v220 = vlaneseq
    %v221 = vshrl.u32 %v220, 7
    %v222 = vsub.s32 0, %v221
    %v223 = vrot.slane %v219, %v222
    %v224 = vmul.f32 %v206, %v223
    %v225 = vmul.f32 %v207, %v223
    %v226 = vadd.f32 %v217, %v224
    %v227 = vadd.f32 %v218, %v225
    %228 = vrot.lane.b32.xlu0 %v206, 120
    %v229 = vpop.permute.xlu0 %228
    %230 = vrot.lane.b32.xlu0 %v207, 120
    %v231 = vpop.permute.xlu0 %230
    %v232 = vld [vmem:[#allocation6 + $0x2] sm:$0x1]
    %v233 = vlaneseq
    %v234 = vshrl.u32 %v233, 7
    %v235 = vsub.s32 0, %v234
    %v236 = vrot.slane %v232, %v235
    %v237 = vmul.f32 %v229, %v236
    %v238 = vmul.f32 %v231, %v236
    %v239 = vadd.f32 %v226, %v237
    %v240 = vadd.f32 %v227, %v238
    %v241 = vld [vmem:[#allocation2 + $0x8] sm:$0xff]
    %v242 = vld [vmem:[#allocation2 + $0x10] sm:$0xff]
    %243 = vrot.lane.b32.xlu0 %v241, 8
    %v244 = vpop.permute.xlu0 %243
    %245 = vrot.lane.b32.xlu0 %v242, 8
    %v246 = vpop.permute.xlu0 %245
    %v247 = vld [vmem:[#allocation6 + $0x3] sm:$0x1]
    %v248 = vlaneseq
    %v249 = vshrl.u32 %v248, 7
    %v250 = vsub.s32 0, %v249
    %v251 = vrot.slane %v247, %v250
    %v252 = vmul.f32 %v244, %v251
    %v253 = vmul.f32 %v246, %v251
    %v254 = vadd.f32 %v239, %v252
    %v255 = vadd.f32 %v240, %v253
    %v256 = vld [vmem:[#allocation6 + $0x4] sm:$0x1]
    %v257 = vlaneseq
    %v258 = vshrl.u32 %v257, 7
    %v259 = vsub.s32 0, %v258
    %v260 = vrot.slane %v256, %v259
    %v261 = vmul.f32 %v241, %v260
    %v262 = vmul.f32 %v242, %v260
    %v263 = vadd.f32 %v254, %v261
    %v264 = vadd.f32 %v255, %v262
    %265 = vrot.lane.b32.xlu0 %v241, 120
    %v266 = vpop.permute.xlu0 %265
    %267 = vrot.lane.b32.xlu0 %v242, 120
    %v268 = vpop.permute.xlu0 %267
    %v269 = vld [vmem:[#allocation6 + $0x5] sm:$0x1]
    %v270 = vlaneseq
    %v271 = vshrl.u32 %v270, 7
    %v272 = vsub.s32 0, %v271
    %v273 = vrot.slane %v269, %v272
    %v274 = vmul.f32 %v266, %v273
    %v275 = vmul.f32 %v268, %v273
    %v276 = vadd.f32 %v263, %v274
    %v277 = vadd.f32 %v264, %v275
    %v278 = vld [vmem:[#allocation2 + $0x9] sm:$0xff]
    %v279 = vld [vmem:[#allocation2 + $0x11] sm:$0xff]
    %280 = vrot.lane.b32.xlu0 %v278, 8
    %v281 = vpop.permute.xlu0 %280
    %282 = vrot.lane.b32.xlu0 %v279, 8
    %v283 = vpop.permute.xlu0 %282
    %v284 = vld [vmem:[#allocation6 + $0x6] sm:$0x1]
    %v285 = vlaneseq
    %v286 = vshrl.u32 %v285, 7
    %v287 = vsub.s32 0, %v286
    %v288 = vrot.slane %v284, %v287
    %v289 = vmul.f32 %v281, %v288
    %v290 = vmul.f32 %v283, %v288
    %v291 = vadd.f32 %v276, %v289
    %v292 = vadd.f32 %v277, %v290
    %v293 = vld [vmem:[#allocation6 + $0x7] sm:$0x1]
    %v294 = vlaneseq
    %v295 = vshrl.u32 %v294, 7
    %v296 = vsub.s32 0, %v295
    %v297 = vrot.slane %v293, %v296
    %v298 = vmul.f32 %v278, %v297
    %v299 = vmul.f32 %v279, %v297
    %v300 = vadd.f32 %v291, %v298
    %v301 = vadd.f32 %v292, %v299
    %302 = vrot.lane.b32.xlu0 %v278, 120
    %v303 = vpop.permute.xlu0 %302
    %304 = vrot.lane.b32.xlu0 %v279, 120
    %v305 = vpop.permute.xlu0 %304
    %v306 = vld [vmem:[#allocation6 + $0x8] sm:$0x1]
    %v307 = vlaneseq
    %v308 = vshrl.u32 %v307, 7
    %v309 = vsub.s32 0, %v308
    %v310 = vrot.slane %v306, %v309
    %v311 = vmul.f32 %v303, %v310
    %v312 = vmul.f32 %v305, %v310
    %v313 = vadd.f32 %v300, %v311
    %v314 = vadd.f32 %v301, %v312
    %v315 = vld [vmem:[#allocation8] sm:$0x1]
    %v316 = vlaneseq
    %v317 = vshrl.u32 %v316, 7
    %v318 = vsub.s32 0, %v317
    %v319 = vrot.slane %v315, %v318
    %v320 = vadd.f32 %v202, %v319
    %v321 = vadd.f32 %v203, %v319
    %v322 = vadd.f32 %v313, %v319
    %v323 = vadd.f32 %v314, %v319
    %v324 = vmax.f32 %v320, 0.0
    %v325 = vmax.f32 %v321, 0.0
    %v326 = vmax.f32 %v322, 0.0
    %v327 = vmax.f32 %v323, 0.0
    %v328 = vld [vmem:[#allocation9] sm:$0xff]
    %v329 = vld [vmem:[#allocation9 + $0x8] sm:$0xff]
    %v330 = vld [vmem:[#allocation9 + $0x10] sm:$0xff]
    %v331 = vld [vmem:[#allocation9 + $0x18] sm:$0xff]
    %v332 = vld [vmem:[#allocation9 + $0x20] sm:$0xff]
    %v333 = vld [vmem:[#allocation9 + $0x28] sm:$0xff]
    %v334 = vld [vmem:[#allocation9 + $0x30] sm:$0xff]
    %v335 = vld [vmem:[#allocation9 + $0x38] sm:$0xff]
    %v336 = vld [vmem:[#allocation9 + $0x40] sm:$0xff]
    %v337 = vld [vmem:[#allocation9 + $0x48] sm:$0xff]
    %v338 = vld [vmem:[#allocation9 + $0x50] sm:$0xff]
    %v339 = vld [vmem:[#allocation9 + $0x58] sm:$0xff]
    %v340 = vld [vmem:[#allocation9 + $0x60] sm:$0xff]
    %v341 = vld [vmem:[#allocation9 + $0x68] sm:$0xff]
    %v342 = vld [vmem:[#allocation9 + $0x70] sm:$0xff]
    %v343 = vld [vmem:[#allocation9 + $0x78] sm:$0xff]
    %v344 = vld [vmem:[#allocation11] sm:$0x1]
    %v345 = vlaneseq
    %v346 = vshrl.u32 %v345, 7
    %v347 = vsub.s32 0, %v346
    %v348 = vrot.slane %v344, %v347
    %349 = vmatprep.subr.mxu0 0.0
    %350 = vmatpush1.msra.mxu0 %v343
    %351 = vmatprep.subr.mxu0 0.0
    %352 = vmatpush1.msra.mxu0 %v342
    %353 = vmatprep.subr.mxu0 0.0
    %354 = vmatpush1.msra.mxu0 %v341
    %355 = vmatprep.subr.mxu0 0.0
    %356 = vmatpush1.msra.mxu0 %v340
    %357 = vmatprep.subr.mxu0 0.0
    %358 = vmatpush1.msra.mxu0 %v339
    %359 = vmatprep.subr.mxu0 0.0
    %360 = vmatpush1.msra.mxu0 %v338
    %361 = vmatprep.subr.mxu0 0.0
    %362 = vmatpush1.msra.mxu0 %v337
    %363 = vmatprep.subr.mxu0 0.0
    %364 = vmatpush1.msra.mxu0 %v336
    %365 = vmatprep.subr.mxu0 0.0
    %366 = vmatpush1.msra.mxu0 %v335
    %367 = vmatprep.subr.mxu0 0.0
    %368 = vmatpush1.msra.mxu0 %v334
    %369 = vmatprep.subr.mxu0 0.0
    %370 = vmatpush1.msra.mxu0 %v333
    %371 = vmatprep.subr.mxu0 0.0
    %372 = vmatpush1.msra.mxu0 %v332
    %373 = vmatprep.subr.mxu0 0.0
    %374 = vmatpush1.msra.mxu0 %v331
    %375 = vmatprep.subr.mxu0 0.0
    %376 = vmatpush1.msra.mxu0 %v330
    %377 = vmatprep.subr.mxu0 0.0
    %378 = vmatpush1.msra.mxu0 %v329
    %379 = vmatprep.subr.mxu0 0.0
    %380 = vmatpush1.msra.mxu0 %v328
    %381 = vmatprep.subr.mxu0 0.0
    %382 = vmatpush2.msra.mxu0 0.0
    %383 = vmatprep.subr.mxu0 0.0
    %384 = vmatpush2.msra.mxu0 0.0
    %385 = vmatprep.subr.mxu0 0.0
    %386 = vmatpush2.msra.mxu0 0.0
    %387 = vmatprep.subr.mxu0 0.0
    %388 = vmatpush2.msra.mxu0 0.0
    %389 = vmatprep.subr.mxu0 0.0
    %390 = vmatpush2.msra.mxu0 0.0
    %391 = vmatprep.subr.mxu0 0.0
    %392 = vmatpush2.msra.mxu0 0.0
    %393 = vmatprep.subr.mxu0 0.0
    %394 = vmatpush2.msra.mxu0 0.0
    %395 = vmatprep.subr.mxu0 0.0
    %396 = vmatpush2.msra.mxu0 0.0
    %397 = vmatprep.subr.mxu0 0.0
    %398 = vmatpush2.msra.mxu0 0.0
    %399 = vmatprep.subr.mxu0 0.0
    %400 = vmatpush2.msra.mxu0 0.0
    %401 = vmatprep.subr.mxu0 0.0
    %402 = vmatpush2.msra.mxu0 0.0
    %403 = vmatprep.subr.mxu0 0.0
    %404 = vmatpush2.msra.mxu0 0.0
    %405 = vmatprep.subr.mxu0 0.0
    %406 = vmatpush2.msra.mxu0 0.0
    %407 = vmatprep.subr.mxu0 0.0
    %408 = vmatpush2.msra.mxu0 0.0
    %409 = vmatprep.subr.mxu0 0.0
    %410 = vmatpush2.msra.mxu0 0.0
    %411 = vmatprep.subr.mxu0 0.0
    %412 = vmatpush2.msra.mxu0 0.0
    %413 = vmatprep.mubr.f32.mxu0 0.0
    %414 = vmatmul.mubr.f32.gmra.mxu0 %v324
    %v415 = vpop.f32.mrf.mxu0
    %v416 = vadd.f32 %v348, %v415
    %v417 = vpop.f32.mrf.mxu0
    %418 = vmatprep.mubr.f32.mxu0 0.0
    %419 = vmatmul.mubr.f32.gmra.mxu0 %v325
    %v420 = vpop.f32.mrf.mxu0
    %v421 = vadd.f32 %v348, %v420
    %v422 = vpop.f32.mrf.mxu0
    %423 = vmatprep.mubr.f32.mxu0 0.0
    %424 = vmatmul.mubr.f32.gmra.mxu0 %v326
    %v425 = vpop.f32.mrf.mxu0
    %v426 = vadd.f32 %v348, %v425
    %v427 = vpop.f32.mrf.mxu0
    %428 = vmatprep.mubr.f32.mxu0 0.0
    %429 = vmatmul.mubr.f32.gmra.mxu0 %v327
    %v430 = vpop.f32.mrf.mxu0
    %v431 = vadd.f32 %v348, %v430
    %v432 = vpop.f32.mrf.mxu0
    %433 = vdwg.mxu0
    %v434 = vmax.f32 %v416, 0.0
    %v435 = vmax.f32 %v421, 0.0
    %v436 = vmax.f32 %v426, 0.0
    %v437 = vmax.f32 %v431, 0.0
    %438 = vst [vmem:[#allocation2 + $0x8] sm:$0xff] %v434
    %439 = vst [vmem:[#allocation2 + $0x10] sm:$0xff] %v435
    %v440 = vld [vmem:[#allocation2 + $0x7] sm:$0xff]
    %v441 = vld [vmem:[#allocation2 + $0xf] sm:$0xff]
    %442 = vrot.lane.b32.xlu0 %v440, 8
    %v443 = vpop.permute.xlu0 %442
    %444 = vrot.lane.b32.xlu0 %v441, 8
    %v445 = vpop.permute.xlu0 %444
    %v446 = vld [vmem:[#allocation6 + $0x9] sm:$0x1]
    %v447 = vlaneseq
    %v448 = vshrl.u32 %v447, 7
    %v449 = vsub.s32 0, %v448
    %v450 = vrot.slane %v446, %v449
    %v451 = vmul.f32 %v443, %v450
    %v452 = vmul.f32 %v445, %v450
    %v453 = vld [vmem:[#allocation6 + $0xa] sm:$0x1]
    %v454 = vlaneseq
    %v455 = vshrl.u32 %v454, 7
    %v456 = vsub.s32 0, %v455
    %v457 = vrot.slane %v453, %v456
    %v458 = vmul.f32 %v440, %v457
    %v459 = vmul.f32 %v441, %v457
    %v460 = vadd.f32 %v451, %v458
    %v461 = vadd.f32 %v452, %v459
    %462 = vrot.lane.b32.xlu0 %v440, 120
    %v463 = vpop.permute.xlu0 %462
    %464 = vrot.lane.b32.xlu0 %v441, 120
    %v465 = vpop.permute.xlu0 %464
    %v466 = vld [vmem:[#allocation6 + $0xb] sm:$0x1]
    %v467 = vlaneseq
    %v468 = vshrl.u32 %v467, 7
    %v469 = vsub.s32 0, %v468
    %v470 = vrot.slane %v466, %v469
    %v471 = vmul.f32 %v463, %v470
    %v472 = vmul.f32 %v465, %v470
    %v473 = vadd.f32 %v460, %v471
    %v474 = vadd.f32 %v461, %v472
    %v475 = vld [vmem:[#allocation2 + $0x8] sm:$0xff]
    %v476 = vld [vmem:[#allocation2 + $0x10] sm:$0xff]
    %477 = vrot.lane.b32.xlu0 %v475, 8
    %v478 = vpop.permute.xlu0 %477
    %479 = vrot.lane.b32.xlu0 %v476, 8
    %v480 = vpop.permute.xlu0 %479
    %v481 = vld [vmem:[#allocation6 + $0xc] sm:$0x1]
    %v482 = vlaneseq
    %v483 = vshrl.u32 %v482, 7
    %v484 = vsub.s32 0, %v483
    %v485 = vrot.slane %v481, %v484
    %v486 = vmul.f32 %v478, %v485
    %v487 = vmul.f32 %v480, %v485
    %v488 = vadd.f32 %v473, %v486
    %v489 = vadd.f32 %v474, %v487
    %v490 = vld [vmem:[#allocation6 + $0xd] sm:$0x1]
    %v491 = vlaneseq
    %v492 = vshrl.u32 %v491, 7
    %v493 = vsub.s32 0, %v492
    %v494 = vrot.slane %v490, %v493
    %v495 = vmul.f32 %v475, %v494
    %v496 = vmul.f32 %v476, %v494
    %v497 = vadd.f32 %v488, %v495
    %v498 = vadd.f32 %v489, %v496
    %499 = vrot.lane.b32.xlu0 %v475, 120
    %v500 = vpop.permute.xlu0 %499
    %501 = vrot.lane.b32.xlu0 %v476, 120
    %v502 = vpop.permute.xlu0 %501
    %v503 = vld [vmem:[#allocation6 + $0xe] sm:$0x1]
    %v504 = vlaneseq
    %v505 = vshrl.u32 %v504, 7
    %v506 = vsub.s32 0, %v505
    %v507 = vrot.slane %v503, %v506
    %v508 = vmul.f32 %v500, %v507
    %v509 = vmul.f32 %v502, %v507
    %v510 = vadd.f32 %v497, %v508
    %v511 = vadd.f32 %v498, %v509
    %v512 = vld [vmem:[#allocation2 + $0x9] sm:$0xff]
    %v513 = vld [vmem:[#allocation2 + $0x11] sm:$0xff]
    %514 = vrot.lane.b32.xlu0 %v512, 8
    %v515 = vpop.permute.xlu0 %514
    %516 = vrot.lane.b32.xlu0 %v513, 8
    %v517 = vpop.permute.xlu0 %516
    %v518 = vld [vmem:[#allocation6 + $0xf] sm:$0x1]
    %v519 = vlaneseq
    %v520 = vshrl.u32 %v519, 7
    %v521 = vsub.s32 0, %v520
    %v522 = vrot.slane %v518, %v521
    %v523 = vmul.f32 %v515, %v522
    %v524 = vmul.f32 %v517, %v522
    %v525 = vadd.f32 %v510, %v523
    %v526 = vadd.f32 %v511, %v524
    %v527 = vld [vmem:[#allocation6 + $0x10] sm:$0x1]
    %v528 = vlaneseq
    %v529 = vshrl.u32 %v528, 7
    %v530 = vsub.s32 0, %v529
    %v531 = vrot.slane %v527, %v530
    %v532 = vmul.f32 %v512, %v531
    %v533 = vmul.f32 %v513, %v531
    %v534 = vadd.f32 %v525, %v532
    %v535 = vadd.f32 %v526, %v533
    %536 = vrot.lane.b32.xlu0 %v512, 120
    %v537 = vpop.permute.xlu0 %536
    %538 = vrot.lane.b32.xlu0 %v513, 120
    %v539 = vpop.permute.xlu0 %538
    %v540 = vld [vmem:[#allocation6 + $0x11] sm:$0x1]
    %v541 = vlaneseq
    %v542 = vshrl.u32 %v541, 7
    %v543 = vsub.s32 0, %v542
    %v544 = vrot.slane %v540, %v543
    %v545 = vmul.f32 %v537, %v544
    %v546 = vmul.f32 %v539, %v544
    %v547 = vadd.f32 %v534, %v545
    %v548 = vadd.f32 %v535, %v546
    %549 = vst [vmem:[#allocation2 + $0x8] sm:$0xff] %v436
    %550 = vst [vmem:[#allocation2 + $0x10] sm:$0xff] %v437
    %v551 = vld [vmem:[#allocation2 + $0x7] sm:$0xff]
    %v552 = vld [vmem:[#allocation2 + $0xf] sm:$0xff]
    %553 = vrot.lane.b32.xlu0 %v551, 8
    %v554 = vpop.permute.xlu0 %553
    %555 = vrot.lane.b32.xlu0 %v552, 8
    %v556 = vpop.permute.xlu0 %555
    %v557 = vld [vmem:[#allocation6 + $0x9] sm:$0x1]
    %v558 = vlaneseq
    %v559 = vshrl.u32 %v558, 7
    %v560 = vsub.s32 0, %v559
    %v561 = vrot.slane %v557, %v560
    %v562 = vmul.f32 %v554, %v561
    %v563 = vmul.f32 %v556, %v561
    %v564 = vld [vmem:[#allocation6 + $0xa] sm:$0x1]
    %v565 = vlaneseq
    %v566 = vshrl.u32 %v565, 7
    %v567 = vsub.s32 0, %v566
    %v568 = vrot.slane %v564, %v567
    %v569 = vmul.f32 %v551, %v568
    %v570 = vmul.f32 %v552, %v568
    %v571 = vadd.f32 %v562, %v569
    %v572 = vadd.f32 %v563, %v570
    %573 = vrot.lane.b32.xlu0 %v551, 120
    %v574 = vpop.permute.xlu0 %573
    %575 = vrot.lane.b32.xlu0 %v552, 120
    %v576 = vpop.permute.xlu0 %575
    %v577 = vld [vmem:[#allocation6 + $0xb] sm:$0x1]
    %v578 = vlaneseq
    %v579 = vshrl.u32 %v578, 7
    %v580 = vsub.s32 0, %v579
    %v581 = vrot.slane %v577, %v580
    %v582 = vmul.f32 %v574, %v581
    %v583 = vmul.f32 %v576, %v581
    %v584 = vadd.f32 %v571, %v582
    %v585 = vadd.f32 %v572, %v583
    %v586 = vld [vmem:[#allocation2 + $0x8] sm:$0xff]
    %v587 = vld [vmem:[#allocation2 + $0x10] sm:$0xff]
    %588 = vrot.lane.b32.xlu0 %v586, 8
    %v589 = vpop.permute.xlu0 %588
    %590 = vrot.lane.b32.xlu0 %v587, 8
    %v591 = vpop.permute.xlu0 %590
    %v592 = vld [vmem:[#allocation6 + $0xc] sm:$0x1]
    %v593 = vlaneseq
    %v594 = vshrl.u32 %v593, 7
    %v595 = vsub.s32 0, %v594
    %v596 = vrot.slane %v592, %v595
    %v597 = vmul.f32 %v589, %v596
    %v598 = vmul.f32 %v591, %v596
    %v599 = vadd.f32 %v584, %v597
    %v600 = vadd.f32 %v585, %v598
    %v601 = vld [vmem:[#allocation6 + $0xd] sm:$0x1]
    %v602 = vlaneseq
    %v603 = vshrl.u32 %v602, 7
    %v604 = vsub.s32 0, %v603
    %v605 = vrot.slane %v601, %v604
    %v606 = vmul.f32 %v586, %v605
    %v607 = vmul.f32 %v587, %v605
    %v608 = vadd.f32 %v599, %v606
    %v609 = vadd.f32 %v600, %v607
    %610 = vrot.lane.b32.xlu0 %v586, 120
    %v611 = vpop.permute.xlu0 %610
    %612 = vrot.lane.b32.xlu0 %v587, 120
    %v613 = vpop.permute.xlu0 %612
    %v614 = vld [vmem:[#allocation6 + $0xe] sm:$0x1]
    %v615 = vlaneseq
    %v616 = vshrl.u32 %v615, 7
    %v617 = vsub.s32 0, %v616
    %v618 = vrot.slane %v614, %v617
    %v619 = vmul.f32 %v611, %v618
    %v620 = vmul.f32 %v613, %v618
    %v621 = vadd.f32 %v608, %v619
    %v622 = vadd.f32 %v609, %v620
    %v623 = vld [vmem:[#allocation2 + $0x9] sm:$0xff]
    %v624 = vld [vmem:[#allocation2 + $0x11] sm:$0xff]
    %625 = vrot.lane.b32.xlu0 %v623, 8
    %v626 = vpop.permute.xlu0 %625
    %627 = vrot.lane.b32.xlu0 %v624, 8
    %v628 = vpop.permute.xlu0 %627
    %v629 = vld [vmem:[#allocation6 + $0xf] sm:$0x1]
    %v630 = vlaneseq
    %v631 = vshrl.u32 %v630, 7
    %v632 = vsub.s32 0, %v631
    %v633 = vrot.slane %v629, %v632
    %v634 = vmul.f32 %v626, %v633
    %v635 = vmul.f32 %v628, %v633
    %v636 = vadd.f32 %v621, %v634
    %v637 = vadd.f32 %v622, %v635
    %v638 = vld [vmem:[#allocation6 + $0x10] sm:$0x1]
    %v639 = vlaneseq
    %v640 = vshrl.u32 %v639, 7
    %v641 = vsub.s32 0, %v640
    %v642 = vrot.slane %v638, %v641
    %v643 = vmul.f32 %v623, %v642
    %v644 = vmul.f32 %v624, %v642
    %v645 = vadd.f32 %v636, %v643
    %v646 = vadd.f32 %v637, %v644
    %647 = vrot.lane.b32.xlu0 %v623, 120
    %v648 = vpop.permute.xlu0 %647
    %649 = vrot.lane.b32.xlu0 %v624, 120
    %v650 = vpop.permute.xlu0 %649
    %v651 = vld [vmem:[#allocation6 + $0x11] sm:$0x1]
    %v652 = vlaneseq
    %v653 = vshrl.u32 %v652, 7
    %v654 = vsub.s32 0, %v653
    %v655 = vrot.slane %v651, %v654
    %v656 = vmul.f32 %v648, %v655
    %v657 = vmul.f32 %v650, %v655
    %v658 = vadd.f32 %v645, %v656
    %v659 = vadd.f32 %v646, %v657
    %v660 = vld [vmem:[#allocation8 + $0x1] sm:$0x1]
    %v661 = vlaneseq
    %v662 = vshrl.u32 %v661, 7
    %v663 = vsub.s32 0, %v662
    %v664 = vrot.slane %v660, %v663
    %v665 = vadd.f32 %v547, %v664
    %v666 = vadd.f32 %v548, %v664
    %v667 = vadd.f32 %v658, %v664
    %v668 = vadd.f32 %v659, %v664
    %v669 = vmax.f32 %v665, 0.0
    %v670 = vmax.f32 %v666, 0.0
    %v671 = vmax.f32 %v667, 0.0
    %v672 = vmax.f32 %v668, 0.0
    %s673 = scalar_lea.vmem [#allocation9], 128
    %v674 = vld [vmem:[%s673] sm:$0xff]
    %v675 = vld [vmem:[%s673 + $0x8] sm:$0xff]
    %v676 = vld [vmem:[%s673 + $0x10] sm:$0xff]
    %v677 = vld [vmem:[%s673 + $0x18] sm:$0xff]
    %v678 = vld [vmem:[%s673 + $0x20] sm:$0xff]
    %v679 = vld [vmem:[%s673 + $0x28] sm:$0xff]
    %v680 = vld [vmem:[%s673 + $0x30] sm:$0xff]
    %v681 = vld [vmem:[%s673 + $0x38] sm:$0xff]
    %v682 = vld [vmem:[%s673 + $0x40] sm:$0xff]
    %v683 = vld [vmem:[%s673 + $0x48] sm:$0xff]
    %v684 = vld [vmem:[%s673 + $0x50] sm:$0xff]
    %v685 = vld [vmem:[%s673 + $0x58] sm:$0xff]
    %v686 = vld [vmem:[%s673 + $0x60] sm:$0xff]
    %v687 = vld [vmem:[%s673 + $0x68] sm:$0xff]
    %v688 = vld [vmem:[%s673 + $0x70] sm:$0xff]
    %v689 = vld [vmem:[%s673 + $0x78] sm:$0xff]
    %v690 = vld [vmem:[#allocation11 + $0x1] sm:$0x1]
    %v691 = vlaneseq
    %v692 = vshrl.u32 %v691, 7
    %v693 = vsub.s32 0, %v692
    %v694 = vrot.slane %v690, %v693
    %695 = vmatprep.subr.mxu0 0.0
    %696 = vmatpush1.msra.mxu0 %v689
    %697 = vmatprep.subr.mxu0 0.0
    %698 = vmatpush1.msra.mxu0 %v688
    %699 = vmatprep.subr.mxu0 0.0
    %700 = vmatpush1.msra.mxu0 %v687
    %701 = vmatprep.subr.mxu0 0.0
    %702 = vmatpush1.msra.mxu0 %v686
    %703 = vmatprep.subr.mxu0 0.0
    %704 = vmatpush1.msra.mxu0 %v685
    %705 = vmatprep.subr.mxu0 0.0
    %706 = vmatpush1.msra.mxu0 %v684
    %707 = vmatprep.subr.mxu0 0.0
    %708 = vmatpush1.msra.mxu0 %v683
    %709 = vmatprep.subr.mxu0 0.0
    %710 = vmatpush1.msra.mxu0 %v682
    %711 = vmatprep.subr.mxu0 0.0
    %712 = vmatpush1.msra.mxu0 %v681
    %713 = vmatprep.subr.mxu0 0.0
    %714 = vmatpush1.msra.mxu0 %v680
    %715 = vmatprep.subr.mxu0 0.0
    %716 = vmatpush1.msra.mxu0 %v679
    %717 = vmatprep.subr.mxu0 0.0
    %718 = vmatpush1.msra.mxu0 %v678
    %719 = vmatprep.subr.mxu0 0.0
    %720 = vmatpush1.msra.mxu0 %v677
    %721 = vmatprep.subr.mxu0 0.0
    %722 = vmatpush1.msra.mxu0 %v676
    %723 = vmatprep.subr.mxu0 0.0
    %724 = vmatpush1.msra.mxu0 %v675
    %725 = vmatprep.subr.mxu0 0.0
    %726 = vmatpush1.msra.mxu0 %v674
    %727 = vmatprep.subr.mxu0 0.0
    %728 = vmatpush2.msra.mxu0 0.0
    %729 = vmatprep.subr.mxu0 0.0
    %730 = vmatpush2.msra.mxu0 0.0
    %731 = vmatprep.subr.mxu0 0.0
    %732 = vmatpush2.msra.mxu0 0.0
    %733 = vmatprep.subr.mxu0 0.0
    %734 = vmatpush2.msra.mxu0 0.0
    %735 = vmatprep.subr.mxu0 0.0
    %736 = vmatpush2.msra.mxu0 0.0
    %737 = vmatprep.subr.mxu0 0.0
    %738 = vmatpush2.msra.mxu0 0.0
    %739 = vmatprep.subr.mxu0 0.0
    %740 = vmatpush2.msra.mxu0 0.0
    %741 = vmatprep.subr.mxu0 0.0
    %742 = vmatpush2.msra.mxu0 0.0
    %743 = vmatprep.subr.mxu0 0.0
    %744 = vmatpush2.msra.mxu0 0.0
    %745 = vmatprep.subr.mxu0 0.0
    %746 = vmatpush2.msra.mxu0 0.0
    %747 = vmatprep.subr.mxu0 0.0
    %748 = vmatpush2.msra.mxu0 0.0
    %749 = vmatprep.subr.mxu0 0.0
    %750 = vmatpush2.msra.mxu0 0.0
    %751 = vmatprep.subr.mxu0 0.0
    %752 = vmatpush2.msra.mxu0 0.0
    %753 = vmatprep.subr.mxu0 0.0
    %754 = vmatpush2.msra.mxu0 0.0
    %755 = vmatprep.subr.mxu0 0.0
    %756 = vmatpush2.msra.mxu0 0.0
    %757 = vmatprep.subr.mxu0 0.0
    %758 = vmatpush2.msra.mxu0 0.0
    %759 = vmatprep.mubr.f32.mxu0 0.0
    %760 = vmatmul.mubr.f32.gmra.mxu0 %v669
    %v761 = vpop.f32.mrf.mxu0
    %v762 = vadd.f32 %v694, %v761
    %v763 = vpop.f32.mrf.mxu0
    %764 = vmatprep.mubr.f32.mxu0 0.0
    %765 = vmatmul.mubr.f32.gmra.mxu0 %v670
    %v766 = vpop.f32.mrf.mxu0
    %v767 = vadd.f32 %v694, %v766
    %v768 = vpop.f32.mrf.mxu0
    %769 = vmatprep.mubr.f32.mxu0 0.0
    %770 = vmatmul.mubr.f32.gmra.mxu0 %v671
    %v771 = vpop.f32.mrf.mxu0
    %v772 = vadd.f32 %v694, %v771
    %v773 = vpop.f32.mrf.mxu0
    %774 = vmatprep.mubr.f32.mxu0 0.0
    %775 = vmatmul.mubr.f32.gmra.mxu0 %v672
    %v776 = vpop.f32.mrf.mxu0
    %v777 = vadd.f32 %v694, %v776
    %v778 = vpop.f32.mrf.mxu0
    %779 = vdwg.mxu0
    %v780 = vmax.f32 %v762, 0.0
    %v781 = vmax.f32 %v767, 0.0
    %v782 = vmax.f32 %v772, 0.0
    %v783 = vmax.f32 %v777, 0.0
    %784 = vst [vmem:[#allocation2 + $0x8] sm:$0xff] %v780
    %785 = vst [vmem:[#allocation2 + $0x10] sm:$0xff] %v781
    %v786 = vld [vmem:[#allocation2 + $0x7] sm:$0xff]
    %v787 = vld [vmem:[#allocation2 + $0xf] sm:$0xff]
    %788 = vrot.lane.b32.xlu0 %v786, 8
    %v789 = vpop.permute.xlu0 %788
    %790 = vrot.lane.b32.xlu0 %v787, 8
    %v791 = vpop.permute.xlu0 %790
    %v792 = vld [vmem:[#allocation6 + $0x1b] sm:$0x1]
    %v793 = vlaneseq
    %v794 = vshrl.u32 %v793, 7
    %v795 = vsub.s32 0, %v794
    %v796 = vrot.slane %v792, %v795
    %v797 = vmul.f32 %v789, %v796
    %v798 = vmul.f32 %v791, %v796
    %v799 = vld [vmem:[#allocation6 + $0x1c] sm:$0x1]
    %v800 = vlaneseq
    %v801 = vshrl.u32 %v800, 7
    %v802 = vsub.s32 0, %v801
    %v803 = vrot.slane %v799, %v802
    %v804 = vmul.f32 %v786, %v803
    %v805 = vmul.f32 %v787, %v803
    %v806 = vadd.f32 %v797, %v804
    %v807 = vadd.f32 %v798, %v805
    %808 = vrot.lane.b32.xlu0 %v786, 120
    %v809 = vpop.permute.xlu0 %808
    %810 = vrot.lane.b32.xlu0 %v787, 120
    %v811 = vpop.permute.xlu0 %810
    %v812 = vld [vmem:[#allocation6 + $0x1d] sm:$0x1]
    %v813 = vlaneseq
    %v814 = vshrl.u32 %v813, 7
    %v815 = vsub.s32 0, %v814
    %v816 = vrot.slane %v812, %v815
    %v817 = vmul.f32 %v809, %v816
    %v818 = vmul.f32 %v811, %v816
    %v819 = vadd.f32 %v806, %v817
    %v820 = vadd.f32 %v807, %v818
    %v821 = vld [vmem:[#allocation2 + $0x8] sm:$0xff]
    %v822 = vld [vmem:[#allocation2 + $0x10] sm:$0xff]
    %823 = vrot.lane.b32.xlu0 %v821, 8
    %v824 = vpop.permute.xlu0 %823
    %825 = vrot.lane.b32.xlu0 %v822, 8
    %v826 = vpop.permute.xlu0 %825
    %v827 = vld [vmem:[#allocation6 + $0x1e] sm:$0x1]
    %v828 = vlaneseq
    %v829 = vshrl.u32 %v828, 7
    %v830 = vsub.s32 0, %v829
    %v831 = vrot.slane %v827, %v830
    %v832 = vmul.f32 %v824, %v831
    %v833 = vmul.f32 %v826, %v831
    %v834 = vadd.f32 %v819, %v832
    %v835 = vadd.f32 %v820, %v833
    %v836 = vld [vmem:[#allocation6 + $0x1f] sm:$0x1]
    %v837 = vlaneseq
    %v838 = vshrl.u32 %v837, 7
    %v839 = vsub.s32 0, %v838
    %v840 = vrot.slane %v836, %v839
    %v841 = vmul.f32 %v821, %v840
    %v842 = vmul.f32 %v822, %v840
    %v843 = vadd.f32 %v834, %v841
    %v844 = vadd.f32 %v835, %v842
    %845 = vrot.lane.b32.xlu0 %v821, 120
    %v846 = vpop.permute.xlu0 %845
    %847 = vrot.lane.b32.xlu0 %v822, 120
    %v848 = vpop.permute.xlu0 %847
    %v849 = vld [vmem:[#allocation6 + $0x20] sm:$0x1]
    %v850 = vlaneseq
    %v851 = vshrl.u32 %v850, 7
    %v852 = vsub.s32 0, %v851
    %v853 = vrot.slane %v849, %v852
    %v854 = vmul.f32 %v846, %v853
    %v855 = vmul.f32 %v848, %v853
    %v856 = vadd.f32 %v843, %v854
    %v857 = vadd.f32 %v844, %v855
    %v858 = vld [vmem:[#allocation2 + $0x9] sm:$0xff]
    %v859 = vld [vmem:[#allocation2 + $0x11] sm:$0xff]
    %860 = vrot.lane.b32.xlu0 %v858, 8
    %v861 = vpop.permute.xlu0 %860
    %862 = vrot.lane.b32.xlu0 %v859, 8
    %v863 = vpop.permute.xlu0 %862
    %v864 = vld [vmem:[#allocation6 + $0x21] sm:$0x1]
    %v865 = vlaneseq
    %v866 = vshrl.u32 %v865, 7
    %v867 = vsub.s32 0, %v866
    %v868 = vrot.slane %v864, %v867
    %v869 = vmul.f32 %v861, %v868
    %v870 = vmul.f32 %v863, %v868
    %v871 = vadd.f32 %v856, %v869
    %v872 = vadd.f32 %v857, %v870
    %v873 = vld [vmem:[#allocation6 + $0x22] sm:$0x1]
    %v874 = vlaneseq
    %v875 = vshrl.u32 %v874, 7
    %v876 = vsub.s32 0, %v875
    %v877 = vrot.slane %v873, %v876
    %v878 = vmul.f32 %v858, %v877
    %v879 = vmul.f32 %v859, %v877
    %v880 = vadd.f32 %v871, %v878
    %v881 = vadd.f32 %v872, %v879
    %882 = vrot.lane.b32.xlu0 %v858, 120
    %v883 = vpop.permute.xlu0 %882
    %884 = vrot.lane.b32.xlu0 %v859, 120
    %v885 = vpop.permute.xlu0 %884
    %v886 = vld [vmem:[#allocation6 + $0x23] sm:$0x1]
    %v887 = vlaneseq
    %v888 = vshrl.u32 %v887, 7
    %v889 = vsub.s32 0, %v888
    %v890 = vrot.slane %v886, %v889
    %v891 = vmul.f32 %v883, %v890
    %v892 = vmul.f32 %v885, %v890
    %v893 = vadd.f32 %v880, %v891
    %v894 = vadd.f32 %v881, %v892
    %895 = vst [vmem:[#allocation2 + $0x8] sm:$0xff] %v782
    %896 = vst [vmem:[#allocation2 + $0x10] sm:$0xff] %v783
    %v897 = vld [vmem:[#allocation2 + $0x7] sm:$0xff]
    %v898 = vld [vmem:[#allocation2 + $0xf] sm:$0xff]
    %899 = vrot.lane.b32.xlu0 %v897, 8
    %v900 = vpop.permute.xlu0 %899
    %901 = vrot.lane.b32.xlu0 %v898, 8
    %v902 = vpop.permute.xlu0 %901
    %v903 = vld [vmem:[#allocation6 + $0x1b] sm:$0x1]
    %v904 = vlaneseq
    %v905 = vshrl.u32 %v904, 7
    %v906 = vsub.s32 0, %v905
    %v907 = vrot.slane %v903, %v906
    %v908 = vmul.f32 %v900, %v907
    %v909 = vmul.f32 %v902, %v907
    %v910 = vld [vmem:[#allocation6 + $0x1c] sm:$0x1]
    %v911 = vlaneseq
    %v912 = vshrl.u32 %v911, 7
    %v913 = vsub.s32 0, %v912
    %v914 = vrot.slane %v910, %v913
    %v915 = vmul.f32 %v897, %v914
    %v916 = vmul.f32 %v898, %v914
    %v917 = vadd.f32 %v908, %v915
    %v918 = vadd.f32 %v909, %v916
    %919 = vrot.lane.b32.xlu0 %v897, 120
    %v920 = vpop.permute.xlu0 %919
    %921 = vrot.lane.b32.xlu0 %v898, 120
    %v922 = vpop.permute.xlu0 %921
    %v923 = vld [vmem:[#allocation6 + $0x1d] sm:$0x1]
    %v924 = vlaneseq
    %v925 = vshrl.u32 %v924, 7
    %v926 = vsub.s32 0, %v925
    %v927 = vrot.slane %v923, %v926
    %v928 = vmul.f32 %v920, %v927
    %v929 = vmul.f32 %v922, %v927
    %v930 = vadd.f32 %v917, %v928
    %v931 = vadd.f32 %v918, %v929
    %v932 = vld [vmem:[#allocation2 + $0x8] sm:$0xff]
    %v933 = vld [vmem:[#allocation2 + $0x10] sm:$0xff]
    %934 = vrot.lane.b32.xlu0 %v932, 8
    %v935 = vpop.permute.xlu0 %934
    %936 = vrot.lane.b32.xlu0 %v933, 8
    %v937 = vpop.permute.xlu0 %936
    %v938 = vld [vmem:[#allocation6 + $0x1e] sm:$0x1]
    %v939 = vlaneseq
    %v940 = vshrl.u32 %v939, 7
    %v941 = vsub.s32 0, %v940
    %v942 = vrot.slane %v938, %v941
    %v943 = vmul.f32 %v935, %v942
    %v944 = vmul.f32 %v937, %v942
    %v945 = vadd.f32 %v930, %v943
    %v946 = vadd.f32 %v931, %v944
    %v947 = vld [vmem:[#allocation6 + $0x1f] sm:$0x1]
    %v948 = vlaneseq
    %v949 = vshrl.u32 %v948, 7
    %v950 = vsub.s32 0, %v949
    %v951 = vrot.slane %v947, %v950
    %v952 = vmul.f32 %v932, %v951
    %v953 = vmul.f32 %v933, %v951
    %v954 = vadd.f32 %v945, %v952
    %v955 = vadd.f32 %v946, %v953
    %956 = vrot.lane.b32.xlu0 %v932, 120
    %v957 = vpop.permute.xlu0 %956
    %958 = vrot.lane.b32.xlu0 %v933, 120
    %v959 = vpop.permute.xlu0 %958
    %v960 = vld [vmem:[#allocation6 + $0x20] sm:$0x1]
    %v961 = vlaneseq
    %v962 = vshrl.u32 %v961, 7
    %v963 = vsub.s32 0, %v962
    %v964 = vrot.slane %v960, %v963
    %v965 = vmul.f32 %v957, %v964
    %v966 = vmul.f32 %v959, %v964
    %v967 = vadd.f32 %v954, %v965
    %v968 = vadd.f32 %v955, %v966
    %v969 = vld [vmem:[#allocation2 + $0x9] sm:$0xff]
    %v970 = vld [vmem:[#allocation2 + $0x11] sm:$0xff]
    %971 = vrot.lane.b32.xlu0 %v969, 8
    %v972 = vpop.permute.xlu0 %971
    %973 = vrot.lane.b32.xlu0 %v970, 8
    %v974 = vpop.permute.xlu0 %973
    %v975 = vld [vmem:[#allocation6 + $0x21] sm:$0x1]
    %v976 = vlaneseq
    %v977 = vshrl.u32 %v976, 7
    %v978 = vsub.s32 0, %v977
    %v979 = vrot.slane %v975, %v978
    %v980 = vmul.f32 %v972, %v979
    %v981 = vmul.f32 %v974, %v979
    %v982 = vadd.f32 %v967, %v980
    %v983 = vadd.f32 %v968, %v981
    %v984 = vld [vmem:[#allocation6 + $0x22] sm:$0x1]
    %v985 = vlaneseq
    %v986 = vshrl.u32 %v985, 7
    %v987 = vsub.s32 0, %v986
    %v988 = vrot.slane %v984, %v987
    %v989 = vmul.f32 %v969, %v988
    %v990 = vmul.f32 %v970, %v988
    %v991 = vadd.f32 %v982, %v989
    %v992 = vadd.f32 %v983, %v990
    %993 = vrot.lane.b32.xlu0 %v969, 120
    %v994 = vpop.permute.xlu0 %993
    %995 = vrot.lane.b32.xlu0 %v970, 120
    %v996 = vpop.permute.xlu0 %995
    %v997 = vld [vmem:[#allocation6 + $0x23] sm:$0x1]
    %v998 = vlaneseq
    %v999 = vshrl.u32 %v998, 7
    %v1000 = vsub.s32 0, %v999
    %v1001 = vrot.slane %v997, %v1000
    %v1002 = vmul.f32 %v994, %v1001
    %v1003 = vmul.f32 %v996, %v1001
    %v1004 = vadd.f32 %v991, %v1002
    %v1005 = vadd.f32 %v992, %v1003
    %v1006 = vld [vmem:[#allocation8 + $0x3] sm:$0x1]
    %v1007 = vlaneseq
    %v1008 = vshrl.u32 %v1007, 7
    %v1009 = vsub.s32 0, %v1008
    %v1010 = vrot.slane %v1006, %v1009
    %v1011 = vadd.f32 %v893, %v1010
    %v1012 = vadd.f32 %v894, %v1010
    %v1013 = vadd.f32 %v1004, %v1010
    %v1014 = vadd.f32 %v1005, %v1010
    %v1015 = vmax.f32 %v1011, 0.0
    %v1016 = vmax.f32 %v1012, 0.0
    %v1017 = vmax.f32 %v1013, 0.0
    %v1018 = vmax.f32 %v1014, 0.0
    %s1019 = scalar_lea.vmem [#allocation9], 384
    %v1020 = vld [vmem:[%s1019] sm:$0xff]
    %v1021 = vld [vmem:[%s1019 + $0x8] sm:$0xff]
    %v1022 = vld [vmem:[%s1019 + $0x10] sm:$0xff]
    %v1023 = vld [vmem:[%s1019 + $0x18] sm:$0xff]
    %v1024 = vld [vmem:[%s1019 + $0x20] sm:$0xff]
    %v1025 = vld [vmem:[%s1019 + $0x28] sm:$0xff]
    %v1026 = vld [vmem:[%s1019 + $0x30] sm:$0xff]
    %v1027 = vld [vmem:[%s1019 + $0x38] sm:$0xff]
    %v1028 = vld [vmem:[%s1019 + $0x40] sm:$0xff]
    %v1029 = vld [vmem:[%s1019 + $0x48] sm:$0xff]
    %v1030 = vld [vmem:[%s1019 + $0x50] sm:$0xff]
    %v1031 = vld [vmem:[%s1019 + $0x58] sm:$0xff]
    %v1032 = vld [vmem:[%s1019 + $0x60] sm:$0xff]
    %v1033 = vld [vmem:[%s1019 + $0x68] sm:$0xff]
    %v1034 = vld [vmem:[%s1019 + $0x70] sm:$0xff]
    %v1035 = vld [vmem:[%s1019 + $0x78] sm:$0xff]
    %v1036 = vld [vmem:[#allocation11 + $0x3] sm:$0x1]
    %v1037 = vlaneseq
    %v1038 = vshrl.u32 %v1037, 7
    %v1039 = vsub.s32 0, %v1038
    %v1040 = vrot.slane %v1036, %v1039
    %1041 = vmatprep.subr.mxu0 0.0
    %1042 = vmatpush1.msra.mxu0 %v1035
    %1043 = vmatprep.subr.mxu0 0.0
    %1044 = vmatpush1.msra.mxu0 %v1034
    %1045 = vmatprep.subr.mxu0 0.0
    %1046 = vmatpush1.msra.mxu0 %v1033
    %1047 = vmatprep.subr.mxu0 0.0
    %1048 = vmatpush1.msra.mxu0 %v1032
    %1049 = vmatprep.subr.mxu0 0.0
    %1050 = vmatpush1.msra.mxu0 %v1031
    %1051 = vmatprep.subr.mxu0 0.0
    %1052 = vmatpush1.msra.mxu0 %v1030
    %1053 = vmatprep.subr.mxu0 0.0
    %1054 = vmatpush1.msra.mxu0 %v1029
    %1055 = vmatprep.subr.mxu0 0.0
    %1056 = vmatpush1.msra.mxu0 %v1028
    %1057 = vmatprep.subr.mxu0 0.0
    %1058 = vmatpush1.msra.mxu0 %v1027
    %1059 = vmatprep.subr.mxu0 0.0
    %1060 = vmatpush1.msra.mxu0 %v1026
    %1061 = vmatprep.subr.mxu0 0.0
    %1062 = vmatpush1.msra.mxu0 %v1025
    %1063 = vmatprep.subr.mxu0 0.0
    %1064 = vmatpush1.msra.mxu0 %v1024
    %1065 = vmatprep.subr.mxu0 0.0
    %1066 = vmatpush1.msra.mxu0 %v1023
    %1067 = vmatprep.subr.mxu0 0.0
    %1068 = vmatpush1.msra.mxu0 %v1022
    %1069 = vmatprep.subr.mxu0 0.0
    %1070 = vmatpush1.msra.mxu0 %v1021
    %1071 = vmatprep.subr.mxu0 0.0
    %1072 = vmatpush1.msra.mxu0 %v1020
    %1073 = vmatprep.subr.mxu0 0.0
    %1074 = vmatpush2.msra.mxu0 0.0
    %1075 = vmatprep.subr.mxu0 0.0
    %1076 = vmatpush2.msra.mxu0 0.0
    %1077 = vmatprep.subr.mxu0 0.0
    %1078 = vmatpush2.msra.mxu0 0.0
    %1079 = vmatprep.subr.mxu0 0.0
    %1080 = vmatpush2.msra.mxu0 0.0
    %1081 = vmatprep.subr.mxu0 0.0
    %1082 = vmatpush2.msra.mxu0 0.0
    %1083 = vmatprep.subr.mxu0 0.0
    %1084 = vmatpush2.msra.mxu0 0.0
    %1085 = vmatprep.subr.mxu0 0.0
    %1086 = vmatpush2.msra.mxu0 0.0
    %1087 = vmatprep.subr.mxu0 0.0
    %1088 = vmatpush2.msra.mxu0 0.0
    %1089 = vmatprep.subr.mxu0 0.0
    %1090 = vmatpush2.msra.mxu0 0.0
    %1091 = vmatprep.subr.mxu0 0.0
    %1092 = vmatpush2.msra.mxu0 0.0
    %1093 = vmatprep.subr.mxu0 0.0
    %1094 = vmatpush2.msra.mxu0 0.0
    %1095 = vmatprep.subr.mxu0 0.0
    %1096 = vmatpush2.msra.mxu0 0.0
    %1097 = vmatprep.subr.mxu0 0.0
    %1098 = vmatpush2.msra.mxu0 0.0
    %1099 = vmatprep.subr.mxu0 0.0
    %1100 = vmatpush2.msra.mxu0 0.0
    %1101 = vmatprep.subr.mxu0 0.0
    %1102 = vmatpush2.msra.mxu0 0.0
    %1103 = vmatprep.subr.mxu0 0.0
    %1104 = vmatpush2.msra.mxu0 0.0
    %1105 = vmatprep.mubr.f32.mxu0 0.0
    %1106 = vmatmul.mubr.f32.gmra.mxu0 %v1015
    %v1107 = vpop.f32.mrf.mxu0
    %v1108 = vadd.f32 %v1040, %v1107
    %v1109 = vpop.f32.mrf.mxu0
    %1110 = vmatprep.mubr.f32.mxu0 0.0
    %1111 = vmatmul.mubr.f32.gmra.mxu0 %v1016
    %v1112 = vpop.f32.mrf.mxu0
    %v1113 = vadd.f32 %v1040, %v1112
    %v1114 = vpop.f32.mrf.mxu0
    %1115 = vmatprep.mubr.f32.mxu0 0.0
    %1116 = vmatmul.mubr.f32.gmra.mxu0 %v1017
    %v1117 = vpop.f32.mrf.mxu0
    %v1118 = vadd.f32 %v1040, %v1117
    %v1119 = vpop.f32.mrf.mxu0
    %1120 = vmatprep.mubr.f32.mxu0 0.0
    %1121 = vmatmul.mubr.f32.gmra.mxu0 %v1018
    %v1122 = vpop.f32.mrf.mxu0
    %v1123 = vadd.f32 %v1040, %v1122
    %v1124 = vpop.f32.mrf.mxu0
    %1125 = vdwg.mxu0
    %v1126 = vmax.f32 %v1108, 0.0
    %v1127 = vmax.f32 %v1113, 0.0
    %v1128 = vmax.f32 %v1118, 0.0
    %v1129 = vmax.f32 %v1123, 0.0
    %1130 = vst [vmem:[#allocation2 + $0x8] sm:$0xff] %v434
    %1131 = vst [vmem:[#allocation2 + $0x10] sm:$0xff] %v435
    %v1132 = vld [vmem:[#allocation2 + $0x7] sm:$0xff]
    %v1133 = vld [vmem:[#allocation2 + $0xf] sm:$0xff]
    %1134 = vrot.lane.b32.xlu0 %v1132, 8
    %v1135 = vpop.permute.xlu0 %1134
    %1136 = vrot.lane.b32.xlu0 %v1133, 8
    %v1137 = vpop.permute.xlu0 %1136
    %v1138 = vld [vmem:[#allocation6 + $0x2d] sm:$0x1]
    %v1139 = vlaneseq
    %v1140 = vshrl.u32 %v1139, 7
    %v1141 = vsub.s32 0, %v1140
    %v1142 = vrot.slane %v1138, %v1141
    %v1143 = vmul.f32 %v1135, %v1142
    %v1144 = vmul.f32 %v1137, %v1142
    %v1145 = vld [vmem:[#allocation6 + $0x2e] sm:$0x1]
    %v1146 = vlaneseq
    %v1147 = vshrl.u32 %v1146, 7
    %v1148 = vsub.s32 0, %v1147
    %v1149 = vrot.slane %v1145, %v1148
    %v1150 = vmul.f32 %v1132, %v1149
    %v1151 = vmul.f32 %v1133, %v1149
    %v1152 = vadd.f32 %v1143, %v1150
    %v1153 = vadd.f32 %v1144, %v1151
    %1154 = vrot.lane.b32.xlu0 %v1132, 120
    %v1155 = vpop.permute.xlu0 %1154
    %1156 = vrot.lane.b32.xlu0 %v1133, 120
    %v1157 = vpop.permute.xlu0 %1156
    %v1158 = vld [vmem:[#allocation6 + $0x2f] sm:$0x1]
    %v1159 = vlaneseq
    %v1160 = vshrl.u32 %v1159, 7
    %v1161 = vsub.s32 0, %v1160
    %v1162 = vrot.slane %v1158, %v1161
    %v1163 = vmul.f32 %v1155, %v1162
    %v1164 = vmul.f32 %v1157, %v1162
    %v1165 = vadd.f32 %v1152, %v1163
    %v1166 = vadd.f32 %v1153, %v1164
    %v1167 = vld [vmem:[#allocation2 + $0x8] sm:$0xff]
    %v1168 = vld [vmem:[#allocation2 + $0x10] sm:$0xff]
    %1169 = vrot.lane.b32.xlu0 %v1167, 8
    %v1170 = vpop.permute.xlu0 %1169
    %1171 = vrot.lane.b32.xlu0 %v1168, 8
    %v1172 = vpop.permute.xlu0 %1171
    %v1173 = vld [vmem:[#allocation6 + $0x30] sm:$0x1]
    %v1174 = vlaneseq
    %v1175 = vshrl.u32 %v1174, 7
    %v1176 = vsub.s32 0, %v1175
    %v1177 = vrot.slane %v1173, %v1176
    %v1178 = vmul.f32 %v1170, %v1177
    %v1179 = vmul.f32 %v1172, %v1177
    %v1180 = vadd.f32 %v1165, %v1178
    %v1181 = vadd.f32 %v1166, %v1179
    %v1182 = vld [vmem:[#allocation6 + $0x31] sm:$0x1]
    %v1183 = vlaneseq
    %v1184 = vshrl.u32 %v1183, 7
    %v1185 = vsub.s32 0, %v1184
    %v1186 = vrot.slane %v1182, %v1185
    %v1187 = vmul.f32 %v1167, %v1186
    %v1188 = vmul.f32 %v1168, %v1186
    %v1189 = vadd.f32 %v1180, %v1187
    %v1190 = vadd.f32 %v1181, %v1188
    %1191 = vrot.lane.b32.xlu0 %v1167, 120
    %v1192 = vpop.permute.xlu0 %1191
    %1193 = vrot.lane.b32.xlu0 %v1168, 120
    %v1194 = vpop.permute.xlu0 %1193
    %v1195 = vld [vmem:[#allocation6 + $0x32] sm:$0x1]
    %v1196 = vlaneseq
    %v1197 = vshrl.u32 %v1196, 7
    %v1198 = vsub.s32 0, %v1197
    %v1199 = vrot.slane %v1195, %v1198
    %v1200 = vmul.f32 %v1192, %v1199
    %v1201 = vmul.f32 %v1194, %v1199
    %v1202 = vadd.f32 %v1189, %v1200
    %v1203 = vadd.f32 %v1190, %v1201
    %v1204 = vld [vmem:[#allocation2 + $0x9] sm:$0xff]
    %v1205 = vld [vmem:[#allocation2 + $0x11] sm:$0xff]
    %1206 = vrot.lane.b32.xlu0 %v1204, 8
    %v1207 = vpop.permute.xlu0 %1206
    %1208 = vrot.lane.b32.xlu0 %v1205, 8
    %v1209 = vpop.permute.xlu0 %1208
    %v1210 = vld [vmem:[#allocation6 + $0x33] sm:$0x1]
    %v1211 = vlaneseq
    %v1212 = vshrl.u32 %v1211, 7
    %v1213 = vsub.s32 0, %v1212
    %v1214 = vrot.slane %v1210, %v1213
    %v1215 = vmul.f32 %v1207, %v1214
    %v1216 = vmul.f32 %v1209, %v1214
    %v1217 = vadd.f32 %v1202, %v1215
    %v1218 = vadd.f32 %v1203, %v1216
    %v1219 = vld [vmem:[#allocation6 + $0x34] sm:$0x1]
    %v1220 = vlaneseq
    %v1221 = vshrl.u32 %v1220, 7
    %v1222 = vsub.s32 0, %v1221
    %v1223 = vrot.slane %v1219, %v1222
    %v1224 = vmul.f32 %v1204, %v1223
    %v1225 = vmul.f32 %v1205, %v1223
    %v1226 = vadd.f32 %v1217, %v1224
    %v1227 = vadd.f32 %v1218, %v1225
    %1228 = vrot.lane.b32.xlu0 %v1204, 120
    %v1229 = vpop.permute.xlu0 %1228
    %1230 = vrot.lane.b32.xlu0 %v1205, 120
    %v1231 = vpop.permute.xlu0 %1230
    %v1232 = vld [vmem:[#allocation6 + $0x35] sm:$0x1]
    %v1233 = vlaneseq
    %v1234 = vshrl.u32 %v1233, 7
    %v1235 = vsub.s32 0, %v1234
    %v1236 = vrot.slane %v1232, %v1235
    %v1237 = vmul.f32 %v1229, %v1236
    %v1238 = vmul.f32 %v1231, %v1236
    %v1239 = vadd.f32 %v1226, %v1237
    %v1240 = vadd.f32 %v1227, %v1238
    %1241 = vst [vmem:[#allocation2 + $0x8] sm:$0xff] %v436
    %1242 = vst [vmem:[#allocation2 + $0x10] sm:$0xff] %v437
    %v1243 = vld [vmem:[#allocation2 + $0x7] sm:$0xff]
    %v1244 = vld [vmem:[#allocation2 + $0xf] sm:$0xff]
    %1245 = vrot.lane.b32.xlu0 %v1243, 8
    %v1246 = vpop.permute.xlu0 %1245
    %1247 = vrot.lane.b32.xlu0 %v1244, 8
    %v1248 = vpop.permute.xlu0 %1247
    %v1249 = vld [vmem:[#allocation6 + $0x2d] sm:$0x1]
    %v1250 = vlaneseq
    %v1251 = vshrl.u32 %v1250, 7
    %v1252 = vsub.s32 0, %v1251
    %v1253 = vrot.slane %v1249, %v1252
    %v1254 = vmul.f32 %v1246, %v1253
    %v1255 = vmul.f32 %v1248, %v1253
    %v1256 = vld [vmem:[#allocation6 + $0x2e] sm:$0x1]
    %v1257 = vlaneseq
    %v1258 = vshrl.u32 %v1257, 7
    %v1259 = vsub.s32 0, %v1258
    %v1260 = vrot.slane %v1256, %v1259
    %v1261 = vmul.f32 %v1243, %v1260
    %v1262 = vmul.f32 %v1244, %v1260
    %v1263 = vadd.f32 %v1254, %v1261
    %v1264 = vadd.f32 %v1255, %v1262
    %1265 = vrot.lane.b32.xlu0 %v1243, 120
    %v1266 = vpop.permute.xlu0 %1265
    %1267 = vrot.lane.b32.xlu0 %v1244, 120
    %v1268 = vpop.permute.xlu0 %1267
    %v1269 = vld [vmem:[#allocation6 + $0x2f] sm:$0x1]
    %v1270 = vlaneseq
    %v1271 = vshrl.u32 %v1270, 7
    %v1272 = vsub.s32 0, %v1271
    %v1273 = vrot.slane %v1269, %v1272
    %v1274 = vmul.f32 %v1266, %v1273
    %v1275 = vmul.f32 %v1268, %v1273
    %v1276 = vadd.f32 %v1263, %v1274
    %v1277 = vadd.f32 %v1264, %v1275
    %v1278 = vld [vmem:[#allocation2 + $0x8] sm:$0xff]
    %v1279 = vld [vmem:[#allocation2 + $0x10] sm:$0xff]
    %1280 = vrot.lane.b32.xlu0 %v1278, 8
    %v1281 = vpop.permute.xlu0 %1280
    %1282 = vrot.lane.b32.xlu0 %v1279, 8
    %v1283 = vpop.permute.xlu0 %1282
    %v1284 = vld [vmem:[#allocation6 + $0x30] sm:$0x1]
    %v1285 = vlaneseq
    %v1286 = vshrl.u32 %v1285, 7
    %v1287 = vsub.s32 0, %v1286
    %v1288 = vrot.slane %v1284, %v1287
    %v1289 = vmul.f32 %v1281, %v1288
    %v1290 = vmul.f32 %v1283, %v1288
    %v1291 = vadd.f32 %v1276, %v1289
    %v1292 = vadd.f32 %v1277, %v1290
    %v1293 = vld [vmem:[#allocation6 + $0x31] sm:$0x1]
    %v1294 = vlaneseq
    %v1295 = vshrl.u32 %v1294, 7
    %v1296 = vsub.s32 0, %v1295
    %v1297 = vrot.slane %v1293, %v1296
    %v1298 = vmul.f32 %v1278, %v1297
    %v1299 = vmul.f32 %v1279, %v1297
    %v1300 = vadd.f32 %v1291, %v1298
    %v1301 = vadd.f32 %v1292, %v1299
    %1302 = vrot.lane.b32.xlu0 %v1278, 120
    %v1303 = vpop.permute.xlu0 %1302
    %1304 = vrot.lane.b32.xlu0 %v1279, 120
    %v1305 = vpop.permute.xlu0 %1304
    %v1306 = vld [vmem:[#allocation6 + $0x32] sm:$0x1]
    %v1307 = vlaneseq
    %v1308 = vshrl.u32 %v1307, 7
    %v1309 = vsub.s32 0, %v1308
    %v1310 = vrot.slane %v1306, %v1309
    %v1311 = vmul.f32 %v1303, %v1310
    %v1312 = vmul.f32 %v1305, %v1310
    %v1313 = vadd.f32 %v1300, %v1311
    %v1314 = vadd.f32 %v1301, %v1312
    %v1315 = vld [vmem:[#allocation2 + $0x9] sm:$0xff]
    %v1316 = vld [vmem:[#allocation2 + $0x11] sm:$0xff]
    %1317 = vrot.lane.b32.xlu0 %v1315, 8
    %v1318 = vpop.permute.xlu0 %1317
    %1319 = vrot.lane.b32.xlu0 %v1316, 8
    %v1320 = vpop.permute.xlu0 %1319
    %v1321 = vld [vmem:[#allocation6 + $0x33] sm:$0x1]
    %v1322 = vlaneseq
    %v1323 = vshrl.u32 %v1322, 7
    %v1324 = vsub.s32 0, %v1323
    %v1325 = vrot.slane %v1321, %v1324
    %v1326 = vmul.f32 %v1318, %v1325
    %v1327 = vmul.f32 %v1320, %v1325
    %v1328 = vadd.f32 %v1313, %v1326
    %v1329 = vadd.f32 %v1314, %v1327
    %v1330 = vld [vmem:[#allocation6 + $0x34] sm:$0x1]
    %v1331 = vlaneseq
    %v1332 = vshrl.u32 %v1331, 7
    %v1333 = vsub.s32 0, %v1332
    %v1334 = vrot.slane %v1330, %v1333
    %v1335 = vmul.f32 %v1315, %v1334
    %v1336 = vmul.f32 %v1316, %v1334
    %v1337 = vadd.f32 %v1328, %v1335
    %v1338 = vadd.f32 %v1329, %v1336
    %1339 = vrot.lane.b32.xlu0 %v1315, 120
    %v1340 = vpop.permute.xlu0 %1339
    %1341 = vrot.lane.b32.xlu0 %v1316, 120
    %v1342 = vpop.permute.xlu0 %1341
    %v1343 = vld [vmem:[#allocation6 + $0x35] sm:$0x1]
    %v1344 = vlaneseq
    %v1345 = vshrl.u32 %v1344, 7
    %v1346 = vsub.s32 0, %v1345
    %v1347 = vrot.slane %v1343, %v1346
    %v1348 = vmul.f32 %v1340, %v1347
    %v1349 = vmul.f32 %v1342, %v1347
    %v1350 = vadd.f32 %v1337, %v1348
    %v1351 = vadd.f32 %v1338, %v1349
    %v1352 = vld [vmem:[#allocation8 + $0x5] sm:$0x1]
    %v1353 = vlaneseq
    %v1354 = vshrl.u32 %v1353, 7
    %v1355 = vsub.s32 0, %v1354
    %v1356 = vrot.slane %v1352, %v1355
    %v1357 = vadd.f32 %v1239, %v1356
    %v1358 = vadd.f32 %v1240, %v1356
    %v1359 = vadd.f32 %v1350, %v1356
    %v1360 = vadd.f32 %v1351, %v1356
    %v1361 = vmax.f32 %v1357, 0.0
    %v1362 = vmax.f32 %v1358, 0.0
    %v1363 = vmax.f32 %v1359, 0.0
    %v1364 = vmax.f32 %v1360, 0.0
    %s1365 = scalar_lea.vmem [#allocation9], 640
    %v1366 = vld [vmem:[%s1365] sm:$0xff]
    %v1367 = vld [vmem:[%s1365 + $0x8] sm:$0xff]
    %v1368 = vld [vmem:[%s1365 + $0x10] sm:$0xff]
    %v1369 = vld [vmem:[%s1365 + $0x18] sm:$0xff]
    %v1370 = vld [vmem:[%s1365 + $0x20] sm:$0xff]
    %v1371 = vld [vmem:[%s1365 + $0x28] sm:$0xff]
    %v1372 = vld [vmem:[%s1365 + $0x30] sm:$0xff]
    %v1373 = vld [vmem:[%s1365 + $0x38] sm:$0xff]
    %v1374 = vld [vmem:[%s1365 + $0x40] sm:$0xff]
    %v1375 = vld [vmem:[%s1365 + $0x48] sm:$0xff]
    %v1376 = vld [vmem:[%s1365 + $0x50] sm:$0xff]
    %v1377 = vld [vmem:[%s1365 + $0x58] sm:$0xff]
    %v1378 = vld [vmem:[%s1365 + $0x60] sm:$0xff]
    %v1379 = vld [vmem:[%s1365 + $0x68] sm:$0xff]
    %v1380 = vld [vmem:[%s1365 + $0x70] sm:$0xff]
    %v1381 = vld [vmem:[%s1365 + $0x78] sm:$0xff]
    %v1382 = vld [vmem:[#allocation11 + $0x5] sm:$0x1]
    %v1383 = vlaneseq
    %v1384 = vshrl.u32 %v1383, 7
    %v1385 = vsub.s32 0, %v1384
    %v1386 = vrot.slane %v1382, %v1385
    %1387 = vmatprep.subr.mxu0 0.0
    %1388 = vmatpush1.msra.mxu0 %v1381
    %1389 = vmatprep.subr.mxu0 0.0
    %1390 = vmatpush1.msra.mxu0 %v1380
    %1391 = vmatprep.subr.mxu0 0.0
    %1392 = vmatpush1.msra.mxu0 %v1379
    %1393 = vmatprep.subr.mxu0 0.0
    %1394 = vmatpush1.msra.mxu0 %v1378
    %1395 = vmatprep.subr.mxu0 0.0
    %1396 = vmatpush1.msra.mxu0 %v1377
    %1397 = vmatprep.subr.mxu0 0.0
    %1398 = vmatpush1.msra.mxu0 %v1376
    %1399 = vmatprep.subr.mxu0 0.0
    %1400 = vmatpush1.msra.mxu0 %v1375
    %1401 = vmatprep.subr.mxu0 0.0
    %1402 = vmatpush1.msra.mxu0 %v1374
    %1403 = vmatprep.subr.mxu0 0.0
    %1404 = vmatpush1.msra.mxu0 %v1373
    %1405 = vmatprep.subr.mxu0 0.0
    %1406 = vmatpush1.msra.mxu0 %v1372
    %1407 = vmatprep.subr.mxu0 0.0
    %1408 = vmatpush1.msra.mxu0 %v1371
    %1409 = vmatprep.subr.mxu0 0.0
    %1410 = vmatpush1.msra.mxu0 %v1370
    %1411 = vmatprep.subr.mxu0 0.0
    %1412 = vmatpush1.msra.mxu0 %v1369
    %1413 = vmatprep.subr.mxu0 0.0
    %1414 = vmatpush1.msra.mxu0 %v1368
    %1415 = vmatprep.subr.mxu0 0.0
    %1416 = vmatpush1.msra.mxu0 %v1367
    %1417 = vmatprep.subr.mxu0 0.0
    %1418 = vmatpush1.msra.mxu0 %v1366
    %1419 = vmatprep.subr.mxu0 0.0
    %1420 = vmatpush2.msra.mxu0 0.0
    %1421 = vmatprep.subr.mxu0 0.0
    %1422 = vmatpush2.msra.mxu0 0.0
    %1423 = vmatprep.subr.mxu0 0.0
    %1424 = vmatpush2.msra.mxu0 0.0
    %1425 = vmatprep.subr.mxu0 0.0
    %1426 = vmatpush2.msra.mxu0 0.0
    %1427 = vmatprep.subr.mxu0 0.0
    %1428 = vmatpush2.msra.mxu0 0.0
    %1429 = vmatprep.subr.mxu0 0.0
    %1430 = vmatpush2.msra.mxu0 0.0
    %1431 = vmatprep.subr.mxu0 0.0
    %1432 = vmatpush2.msra.mxu0 0.0
    %1433 = vmatprep.subr.mxu0 0.0
    %1434 = vmatpush2.msra.mxu0 0.0
    %1435 = vmatprep.subr.mxu0 0.0
    %1436 = vmatpush2.msra.mxu0 0.0
    %1437 = vmatprep.subr.mxu0 0.0
    %1438 = vmatpush2.msra.mxu0 0.0
    %1439 = vmatprep.subr.mxu0 0.0
    %1440 = vmatpush2.msra.mxu0 0.0
    %1441 = vmatprep.subr.mxu0 0.0
    %1442 = vmatpush2.msra.mxu0 0.0
    %1443 = vmatprep.subr.mxu0 0.0
    %1444 = vmatpush2.msra.mxu0 0.0
    %1445 = vmatprep.subr.mxu0 0.0
    %1446 = vmatpush2.msra.mxu0 0.0
    %1447 = vmatprep.subr.mxu0 0.0
    %1448 = vmatpush2.msra.mxu0 0.0
    %1449 = vmatprep.subr.mxu0 0.0
    %1450 = vmatpush2.msra.mxu0 0.0
    %1451 = vmatprep.mubr.f32.mxu0 0.0
    %1452 = vmatmul.mubr.f32.gmra.mxu0 %v1361
    %v1453 = vpop.f32.mrf.mxu0
    %v1454 = vadd.f32 %v1386, %v1453
    %v1455 = vpop.f32.mrf.mxu0
    %1456 = vmatprep.mubr.f32.mxu0 0.0
    %1457 = vmatmul.mubr.f32.gmra.mxu0 %v1362
    %v1458 = vpop.f32.mrf.mxu0
    %v1459 = vadd.f32 %v1386, %v1458
    %v1460 = vpop.f32.mrf.mxu0
    %1461 = vmatprep.mubr.f32.mxu0 0.0
    %1462 = vmatmul.mubr.f32.gmra.mxu0 %v1363
    %v1463 = vpop.f32.mrf.mxu0
    %v1464 = vadd.f32 %v1386, %v1463
    %v1465 = vpop.f32.mrf.mxu0
    %1466 = vmatprep.mubr.f32.mxu0 0.0
    %1467 = vmatmul.mubr.f32.gmra.mxu0 %v1364
    %v1468 = vpop.f32.mrf.mxu0
    %v1469 = vadd.f32 %v1386, %v1468
    %v1470 = vpop.f32.mrf.mxu0
    %1471 = vdwg.mxu0
    %v1472 = vmax.f32 %v1454, 0.0
    %v1473 = vmax.f32 %v1459, 0.0
    %v1474 = vmax.f32 %v1464, 0.0
    %v1475 = vmax.f32 %v1469, 0.0
    %v1476 = vadd.f32 %v1126, %v1472
    %v1477 = vadd.f32 %v1127, %v1473
    %v1478 = vadd.f32 %v1128, %v1474
    %v1479 = vadd.f32 %v1129, %v1475
    %1480 = vst [vmem:[#allocation2 + $0x8] sm:$0xff] %v1476
    %1481 = vst [vmem:[#allocation2 + $0x10] sm:$0xff] %v1477
    %v1482 = vld [vmem:[#allocation2 + $0x7] sm:$0xff]
    %v1483 = vld [vmem:[#allocation2 + $0xf] sm:$0xff]
    %1484 = vrot.lane.b32.xlu0 %v1482, 8
    %v1485 = vpop.permute.xlu0 %1484
    %1486 = vrot.lane.b32.xlu0 %v1483, 8
    %v1487 = vpop.permute.xlu0 %1486
    %v1488 = vld [vmem:[#allocation6 + $0x12] sm:$0x1]
    %v1489 = vlaneseq
    %v1490 = vshrl.u32 %v1489, 7
    %v1491 = vsub.s32 0, %v1490
    %v1492 = vrot.slane %v1488, %v1491
    %v1493 = vmul.f32 %v1485, %v1492
    %v1494 = vmul.f32 %v1487, %v1492
    %v1495 = vld [vmem:[#allocation6 + $0x13] sm:$0x1]
    %v1496 = vlaneseq
    %v1497 = vshrl.u32 %v1496, 7
    %v1498 = vsub.s32 0, %v1497
    %v1499 = vrot.slane %v1495, %v1498
    %v1500 = vmul.f32 %v1482, %v1499
    %v1501 = vmul.f32 %v1483, %v1499
    %v1502 = vadd.f32 %v1493, %v1500
    %v1503 = vadd.f32 %v1494, %v1501
    %1504 = vrot.lane.b32.xlu0 %v1482, 120
    %v1505 = vpop.permute.xlu0 %1504
    %1506 = vrot.lane.b32.xlu0 %v1483, 120
    %v1507 = vpop.permute.xlu0 %1506
    %v1508 = vld [vmem:[#allocation6 + $0x14] sm:$0x1]
    %v1509 = vlaneseq
    %v1510 = vshrl.u32 %v1509, 7
    %v1511 = vsub.s32 0, %v1510
    %v1512 = vrot.slane %v1508, %v1511
    %v1513 = vmul.f32 %v1505, %v1512
    %v1514 = vmul.f32 %v1507, %v1512
    %v1515 = vadd.f32 %v1502, %v1513
    %v1516 = vadd.f32 %v1503, %v1514
    %v1517 = vld [vmem:[#allocation2 + $0x8] sm:$0xff]
    %v1518 = vld [vmem:[#allocation2 + $0x10] sm:$0xff]
    %1519 = vrot.lane.b32.xlu0 %v1517, 8
    %v1520 = vpop.permute.xlu0 %1519
    %1521 = vrot.lane.b32.xlu0 %v1518, 8
    %v1522 = vpop.permute.xlu0 %1521
    %v1523 = vld [vmem:[#allocation6 + $0x15] sm:$0x1]
    %v1524 = vlaneseq
    %v1525 = vshrl.u32 %v1524, 7
    %v1526 = vsub.s32 0, %v1525
    %v1527 = vrot.slane %v1523, %v1526
    %v1528 = vmul.f32 %v1520, %v1527
    %v1529 = vmul.f32 %v1522, %v1527
    %v1530 = vadd.f32 %v1515, %v1528
    %v1531 = vadd.f32 %v1516, %v1529
    %v1532 = vld [vmem:[#allocation6 + $0x16] sm:$0x1]
    %v1533 = vlaneseq
    %v1534 = vshrl.u32 %v1533, 7
    %v1535 = vsub.s32 0, %v1534
    %v1536 = vrot.slane %v1532, %v1535
    %v1537 = vmul.f32 %v1517, %v1536
    %v1538 = vmul.f32 %v1518, %v1536
    %v1539 = vadd.f32 %v1530, %v1537
    %v1540 = vadd.f32 %v1531, %v1538
    %1541 = vrot.lane.b32.xlu0 %v1517, 120
    %v1542 = vpop.permute.xlu0 %1541
    %1543 = vrot.lane.b32.xlu0 %v1518, 120
    %v1544 = vpop.permute.xlu0 %1543
    %v1545 = vld [vmem:[#allocation6 + $0x17] sm:$0x1]
    %v1546 = vlaneseq
    %v1547 = vshrl.u32 %v1546, 7
    %v1548 = vsub.s32 0, %v1547
    %v1549 = vrot.slane %v1545, %v1548
    %v1550 = vmul.f32 %v1542, %v1549
    %v1551 = vmul.f32 %v1544, %v1549
    %v1552 = vadd.f32 %v1539, %v1550
    %v1553 = vadd.f32 %v1540, %v1551
    %v1554 = vld [vmem:[#allocation2 + $0x9] sm:$0xff]
    %v1555 = vld [vmem:[#allocation2 + $0x11] sm:$0xff]
    %1556 = vrot.lane.b32.xlu0 %v1554, 8
    %v1557 = vpop.permute.xlu0 %1556
    %1558 = vrot.lane.b32.xlu0 %v1555, 8
    %v1559 = vpop.permute.xlu0 %1558
    %v1560 = vld [vmem:[#allocation6 + $0x18] sm:$0x1]
    %v1561 = vlaneseq
    %v1562 = vshrl.u32 %v1561, 7
    %v1563 = vsub.s32 0, %v1562
    %v1564 = vrot.slane %v1560, %v1563
    %v1565 = vmul.f32 %v1557, %v1564
    %v1566 = vmul.f32 %v1559, %v1564
    %v1567 = vadd.f32 %v1552, %v1565
    %v1568 = vadd.f32 %v1553, %v1566
    %v1569 = vld [vmem:[#allocation6 + $0x19] sm:$0x1]
    %v1570 = vlaneseq
    %v1571 = vshrl.u32 %v1570, 7
    %v1572 = vsub.s32 0, %v1571
    %v1573 = vrot.slane %v1569, %v1572
    %v1574 = vmul.f32 %v1554, %v1573
    %v1575 = vmul.f32 %v1555, %v1573
    %v1576 = vadd.f32 %v1567, %v1574
    %v1577 = vadd.f32 %v1568, %v1575
    %1578 = vrot.lane.b32.xlu0 %v1554, 120
    %v1579 = vpop.permute.xlu0 %1578
    %1580 = vrot.lane.b32.xlu0 %v1555, 120
    %v1581 = vpop.permute.xlu0 %1580
    %v1582 = vld [vmem:[#allocation6 + $0x1a] sm:$0x1]
    %v1583 = vlaneseq
    %v1584 = vshrl.u32 %v1583, 7
    %v1585 = vsub.s32 0, %v1584
    %v1586 = vrot.slane %v1582, %v1585
    %v1587 = vmul.f32 %v1579, %v1586
    %v1588 = vmul.f32 %v1581, %v1586
    %v1589 = vadd.f32 %v1576, %v1587
    %v1590 = vadd.f32 %v1577, %v1588
    %1591 = vst [vmem:[#allocation2 + $0x8] sm:$0xff] %v1478
    %1592 = vst [vmem:[#allocation2 + $0x10] sm:$0xff] %v1479
    %v1593 = vld [vmem:[#allocation2 + $0x7] sm:$0xff]
    %v1594 = vld [vmem:[#allocation2 + $0xf] sm:$0xff]
    %1595 = vrot.lane.b32.xlu0 %v1593, 8
    %v1596 = vpop.permute.xlu0 %1595
    %1597 = vrot.lane.b32.xlu0 %v1594, 8
    %v1598 = vpop.permute.xlu0 %1597
    %v1599 = vld [vmem:[#allocation6 + $0x12] sm:$0x1]
    %v1600 = vlaneseq
    %v1601 = vshrl.u32 %v1600, 7
    %v1602 = vsub.s32 0, %v1601
    %v1603 = vrot.slane %v1599, %v1602
    %v1604 = vmul.f32 %v1596, %v1603
    %v1605 = vmul.f32 %v1598, %v1603
    %v1606 = vld [vmem:[#allocation6 + $0x13] sm:$0x1]
    %v1607 = vlaneseq
    %v1608 = vshrl.u32 %v1607, 7
    %v1609 = vsub.s32 0, %v1608
    %v1610 = vrot.slane %v1606, %v1609
    %v1611 = vmul.f32 %v1593, %v1610
    %v1612 = vmul.f32 %v1594, %v1610
    %v1613 = vadd.f32 %v1604, %v1611
    %v1614 = vadd.f32 %v1605, %v1612
    %1615 = vrot.lane.b32.xlu0 %v1593, 120
    %v1616 = vpop.permute.xlu0 %1615
    %1617 = vrot.lane.b32.xlu0 %v1594, 120
    %v1618 = vpop.permute.xlu0 %1617
    %v1619 = vld [vmem:[#allocation6 + $0x14] sm:$0x1]
    %v1620 = vlaneseq
    %v1621 = vshrl.u32 %v1620, 7
    %v1622 = vsub.s32 0, %v1621
    %v1623 = vrot.slane %v1619, %v1622
    %v1624 = vmul.f32 %v1616, %v1623
    %v1625 = vmul.f32 %v1618, %v1623
    %v1626 = vadd.f32 %v1613, %v1624
    %v1627 = vadd.f32 %v1614, %v1625
    %v1628 = vld [vmem:[#allocation2 + $0x8] sm:$0xff]
    %v1629 = vld [vmem:[#allocation2 + $0x10] sm:$0xff]
    %1630 = vrot.lane.b32.xlu0 %v1628, 8
    %v1631 = vpop.permute.xlu0 %1630
    %1632 = vrot.lane.b32.xlu0 %v1629, 8
    %v1633 = vpop.permute.xlu0 %1632
    %v1634 = vld [vmem:[#allocation6 + $0x15] sm:$0x1]
    %v1635 = vlaneseq
    %v1636 = vshrl.u32 %v1635, 7
    %v1637 = vsub.s32 0, %v1636
    %v1638 = vrot.slane %v1634, %v1637
    %v1639 = vmul.f32 %v1631, %v1638
    %v1640 = vmul.f32 %v1633, %v1638
    %v1641 = vadd.f32 %v1626, %v1639
    %v1642 = vadd.f32 %v1627, %v1640
    %v1643 = vld [vmem:[#allocation6 + $0x16] sm:$0x1]
    %v1644 = vlaneseq
    %v1645 = vshrl.u32 %v1644, 7
    %v1646 = vsub.s32 0, %v1645
    %v1647 = vrot.slane %v1643, %v1646
    %v1648 = vmul.f32 %v1628, %v1647
    %v1649 = vmul.f32 %v1629, %v1647
    %v1650 = vadd.f32 %v1641, %v1648
    %v1651 = vadd.f32 %v1642, %v1649
    %1652 = vrot.lane.b32.xlu0 %v1628, 120
    %v1653 = vpop.permute.xlu0 %1652
    %1654 = vrot.lane.b32.xlu0 %v1629, 120
    %v1655 = vpop.permute.xlu0 %1654
    %v1656 = vld [vmem:[#allocation6 + $0x17] sm:$0x1]
    %v1657 = vlaneseq
    %v1658 = vshrl.u32 %v1657, 7
    %v1659 = vsub.s32 0, %v1658
    %v1660 = vrot.slane %v1656, %v1659
    %v1661 = vmul.f32 %v1653, %v1660
    %v1662 = vmul.f32 %v1655, %v1660
    %v1663 = vadd.f32 %v1650, %v1661
    %v1664 = vadd.f32 %v1651, %v1662
    %v1665 = vld [vmem:[#allocation2 + $0x9] sm:$0xff]
    %v1666 = vld [vmem:[#allocation2 + $0x11] sm:$0xff]
    %1667 = vrot.lane.b32.xlu0 %v1665, 8
    %v1668 = vpop.permute.xlu0 %1667
    %1669 = vrot.lane.b32.xlu0 %v1666, 8
    %v1670 = vpop.permute.xlu0 %1669
    %v1671 = vld [vmem:[#allocation6 + $0x18] sm:$0x1]
    %v1672 = vlaneseq
    %v1673 = vshrl.u32 %v1672, 7
    %v1674 = vsub.s32 0, %v1673
    %v1675 = vrot.slane %v1671, %v1674
    %v1676 = vmul.f32 %v1668, %v1675
    %v1677 = vmul.f32 %v1670, %v1675
    %v1678 = vadd.f32 %v1663, %v1676
    %v1679 = vadd.f32 %v1664, %v1677
    %v1680 = vld [vmem:[#allocation6 + $0x19] sm:$0x1]
    %v1681 = vlaneseq
    %v1682 = vshrl.u32 %v1681, 7
    %v1683 = vsub.s32 0, %v1682
    %v1684 = vrot.slane %v1680, %v1683
    %v1685 = vmul.f32 %v1665, %v1684
    %v1686 = vmul.f32 %v1666, %v1684
    %v1687 = vadd.f32 %v1678, %v1685
    %v1688 = vadd.f32 %v1679, %v1686
    %1689 = vrot.lane.b32.xlu0 %v1665, 120
    %v1690 = vpop.permute.xlu0 %1689
    %1691 = vrot.lane.b32.xlu0 %v1666, 120
    %v1692 = vpop.permute.xlu0 %1691
    %v1693 = vld [vmem:[#allocation6 + $0x1a] sm:$0x1]
    %v1694 = vlaneseq
    %v1695 = vshrl.u32 %v1694, 7
    %v1696 = vsub.s32 0, %v1695
    %v1697 = vrot.slane %v1693, %v1696
    %v1698 = vmul.f32 %v1690, %v1697
    %v1699 = vmul.f32 %v1692, %v1697
    %v1700 = vadd.f32 %v1687, %v1698
    %v1701 = vadd.f32 %v1688, %v1699
    %v1702 = vld [vmem:[#allocation8 + $0x2] sm:$0x1]
    %v1703 = vlaneseq
    %v1704 = vshrl.u32 %v1703, 7
    %v1705 = vsub.s32 0, %v1704
    %v1706 = vrot.slane %v1702, %v1705
    %v1707 = vadd.f32 %v1589, %v1706
    %v1708 = vadd.f32 %v1590, %v1706
    %v1709 = vadd.f32 %v1700, %v1706
    %v1710 = vadd.f32 %v1701, %v1706
    %v1711 = vmax.f32 %v1707, 0.0
    %v1712 = vmax.f32 %v1708, 0.0
    %v1713 = vmax.f32 %v1709, 0.0
    %v1714 = vmax.f32 %v1710, 0.0
    %s1715 = scalar_lea.vmem [#allocation9], 256
    %v1716 = vld [vmem:[%s1715] sm:$0xff]
    %v1717 = vld [vmem:[%s1715 + $0x8] sm:$0xff]
    %v1718 = vld [vmem:[%s1715 + $0x10] sm:$0xff]
    %v1719 = vld [vmem:[%s1715 + $0x18] sm:$0xff]
    %v1720 = vld [vmem:[%s1715 + $0x20] sm:$0xff]
    %v1721 = vld [vmem:[%s1715 + $0x28] sm:$0xff]
    %v1722 = vld [vmem:[%s1715 + $0x30] sm:$0xff]
    %v1723 = vld [vmem:[%s1715 + $0x38] sm:$0xff]
    %v1724 = vld [vmem:[%s1715 + $0x40] sm:$0xff]
    %v1725 = vld [vmem:[%s1715 + $0x48] sm:$0xff]
    %v1726 = vld [vmem:[%s1715 + $0x50] sm:$0xff]
    %v1727 = vld [vmem:[%s1715 + $0x58] sm:$0xff]
    %v1728 = vld [vmem:[%s1715 + $0x60] sm:$0xff]
    %v1729 = vld [vmem:[%s1715 + $0x68] sm:$0xff]
    %v1730 = vld [vmem:[%s1715 + $0x70] sm:$0xff]
    %v1731 = vld [vmem:[%s1715 + $0x78] sm:$0xff]
    %v1732 = vld [vmem:[#allocation11 + $0x2] sm:$0x1]
    %v1733 = vlaneseq
    %v1734 = vshrl.u32 %v1733, 7
    %v1735 = vsub.s32 0, %v1734
    %v1736 = vrot.slane %v1732, %v1735
    %1737 = vmatprep.subr.mxu0 0.0
    %1738 = vmatpush1.msra.mxu0 %v1731
    %1739 = vmatprep.subr.mxu0 0.0
    %1740 = vmatpush1.msra.mxu0 %v1730
    %1741 = vmatprep.subr.mxu0 0.0
    %1742 = vmatpush1.msra.mxu0 %v1729
    %1743 = vmatprep.subr.mxu0 0.0
    %1744 = vmatpush1.msra.mxu0 %v1728
    %1745 = vmatprep.subr.mxu0 0.0
    %1746 = vmatpush1.msra.mxu0 %v1727
    %1747 = vmatprep.subr.mxu0 0.0
    %1748 = vmatpush1.msra.mxu0 %v1726
    %1749 = vmatprep.subr.mxu0 0.0
    %1750 = vmatpush1.msra.mxu0 %v1725
    %1751 = vmatprep.subr.mxu0 0.0
    %1752 = vmatpush1.msra.mxu0 %v1724
    %1753 = vmatprep.subr.mxu0 0.0
    %1754 = vmatpush1.msra.mxu0 %v1723
    %1755 = vmatprep.subr.mxu0 0.0
    %1756 = vmatpush1.msra.mxu0 %v1722
    %1757 = vmatprep.subr.mxu0 0.0
    %1758 = vmatpush1.msra.mxu0 %v1721
    %1759 = vmatprep.subr.mxu0 0.0
    %1760 = vmatpush1.msra.mxu0 %v1720
    %1761 = vmatprep.subr.mxu0 0.0
    %1762 = vmatpush1.msra.mxu0 %v1719
    %1763 = vmatprep.subr.mxu0 0.0
    %1764 = vmatpush1.msra.mxu0 %v1718
    %1765 = vmatprep.subr.mxu0 0.0
    %1766 = vmatpush1.msra.mxu0 %v1717
    %1767 = vmatprep.subr.mxu0 0.0
    %1768 = vmatpush1.msra.mxu0 %v1716
    %1769 = vmatprep.subr.mxu0 0.0
    %1770 = vmatpush2.msra.mxu0 0.0
    %1771 = vmatprep.subr.mxu0 0.0
    %1772 = vmatpush2.msra.mxu0 0.0
    %1773 = vmatprep.subr.mxu0 0.0
    %1774 = vmatpush2.msra.mxu0 0.0
    %1775 = vmatprep.subr.mxu0 0.0
    %1776 = vmatpush2.msra.mxu0 0.0
    %1777 = vmatprep.subr.mxu0 0.0
    %1778 = vmatpush2.msra.mxu0 0.0
    %1779 = vmatprep.subr.mxu0 0.0
    %1780 = vmatpush2.msra.mxu0 0.0
    %1781 = vmatprep.subr.mxu0 0.0
    %1782 = vmatpush2.msra.mxu0 0.0
    %1783 = vmatprep.subr.mxu0 0.0
    %1784 = vmatpush2.msra.mxu0 0.0
    %1785 = vmatprep.subr.mxu0 0.0
    %1786 = vmatpush2.msra.mxu0 0.0
    %1787 = vmatprep.subr.mxu0 0.0
    %1788 = vmatpush2.msra.mxu0 0.0
    %1789 = vmatprep.subr.mxu0 0.0
    %1790 = vmatpush2.msra.mxu0 0.0
    %1791 = vmatprep.subr.mxu0 0.0
    %1792 = vmatpush2.msra.mxu0 0.0
    %1793 = vmatprep.subr.mxu0 0.0
    %1794 = vmatpush2.msra.mxu0 0.0
    %1795 = vmatprep.subr.mxu0 0.0
    %1796 = vmatpush2.msra.mxu0 0.0
    %1797 = vmatprep.subr.mxu0 0.0
    %1798 = vmatpush2.msra.mxu0 0.0
    %1799 = vmatprep.subr.mxu0 0.0
    %1800 = vmatpush2.msra.mxu0 0.0
    %1801 = vmatprep.mubr.f32.mxu0 0.0
    %1802 = vmatmul.mubr.f32.gmra.mxu0 %v1711
    %v1803 = vpop.f32.mrf.mxu0
    %v1804 = vadd.f32 %v1736, %v1803
    %v1805 = vpop.f32.mrf.mxu0
    %1806 = vmatprep.mubr.f32.mxu0 0.0
    %1807 = vmatmul.mubr.f32.gmra.mxu0 %v1712
    %v1808 = vpop.f32.mrf.mxu0
    %v1809 = vadd.f32 %v1736, %v1808
    %v1810 = vpop.f32.mrf.mxu0
    %1811 = vmatprep.mubr.f32.mxu0 0.0
    %1812 = vmatmul.mubr.f32.gmra.mxu0 %v1713
    %v1813 = vpop.f32.mrf.mxu0
    %v1814 = vadd.f32 %v1736, %v1813
    %v1815 = vpop.f32.mrf.mxu0
    %1816 = vmatprep.mubr.f32.mxu0 0.0
    %1817 = vmatmul.mubr.f32.gmra.mxu0 %v1714
    %v1818 = vpop.f32.mrf.mxu0
    %v1819 = vadd.f32 %v1736, %v1818
    %v1820 = vpop.f32.mrf.mxu0
    %1821 = vdwg.mxu0
    %v1822 = vmax.f32 %v1804, 0.0
    %v1823 = vmax.f32 %v1809, 0.0
    %v1824 = vmax.f32 %v1814, 0.0
    %v1825 = vmax.f32 %v1819, 0.0
    %1826 = vst [vmem:[#allocation2 + $0x8] sm:$0xff] %v89
    %1827 = vst [vmem:[#allocation2 + $0x10] sm:$0xff] %v90
    %v1828 = vld [vmem:[#allocation2 + $0x7] sm:$0xff]
    %v1829 = vld [vmem:[#allocation2 + $0xf] sm:$0xff]
    %1830 = vrot.lane.b32.xlu0 %v1828, 8
    %v1831 = vpop.permute.xlu0 %1830
    %1832 = vrot.lane.b32.xlu0 %v1829, 8
    %v1833 = vpop.permute.xlu0 %1832
    %v1834 = vld [vmem:[#allocation6 + $0x24] sm:$0x1]
    %v1835 = vlaneseq
    %v1836 = vshrl.u32 %v1835, 7
    %v1837 = vsub.s32 0, %v1836
    %v1838 = vrot.slane %v1834, %v1837
    %v1839 = vmul.f32 %v1831, %v1838
    %v1840 = vmul.f32 %v1833, %v1838
    %v1841 = vld [vmem:[#allocation6 + $0x25] sm:$0x1]
    %v1842 = vlaneseq
    %v1843 = vshrl.u32 %v1842, 7
    %v1844 = vsub.s32 0, %v1843
    %v1845 = vrot.slane %v1841, %v1844
    %v1846 = vmul.f32 %v1828, %v1845
    %v1847 = vmul.f32 %v1829, %v1845
    %v1848 = vadd.f32 %v1839, %v1846
    %v1849 = vadd.f32 %v1840, %v1847
    %1850 = vrot.lane.b32.xlu0 %v1828, 120
    %v1851 = vpop.permute.xlu0 %1850
    %1852 = vrot.lane.b32.xlu0 %v1829, 120
    %v1853 = vpop.permute.xlu0 %1852
    %v1854 = vld [vmem:[#allocation6 + $0x26] sm:$0x1]
    %v1855 = vlaneseq
    %v1856 = vshrl.u32 %v1855, 7
    %v1857 = vsub.s32 0, %v1856
    %v1858 = vrot.slane %v1854, %v1857
    %v1859 = vmul.f32 %v1851, %v1858
    %v1860 = vmul.f32 %v1853, %v1858
    %v1861 = vadd.f32 %v1848, %v1859
    %v1862 = vadd.f32 %v1849, %v1860
    %v1863 = vld [vmem:[#allocation2 + $0x8] sm:$0xff]
    %v1864 = vld [vmem:[#allocation2 + $0x10] sm:$0xff]
    %1865 = vrot.lane.b32.xlu0 %v1863, 8
    %v1866 = vpop.permute.xlu0 %1865
    %1867 = vrot.lane.b32.xlu0 %v1864, 8
    %v1868 = vpop.permute.xlu0 %1867
    %v1869 = vld [vmem:[#allocation6 + $0x27] sm:$0x1]
    %v1870 = vlaneseq
    %v1871 = vshrl.u32 %v1870, 7
    %v1872 = vsub.s32 0, %v1871
    %v1873 = vrot.slane %v1869, %v1872
    %v1874 = vmul.f32 %v1866, %v1873
    %v1875 = vmul.f32 %v1868, %v1873
    %v1876 = vadd.f32 %v1861, %v1874
    %v1877 = vadd.f32 %v1862, %v1875
    %v1878 = vld [vmem:[#allocation6 + $0x28] sm:$0x1]
    %v1879 = vlaneseq
    %v1880 = vshrl.u32 %v1879, 7
    %v1881 = vsub.s32 0, %v1880
    %v1882 = vrot.slane %v1878, %v1881
    %v1883 = vmul.f32 %v1863, %v1882
    %v1884 = vmul.f32 %v1864, %v1882
    %v1885 = vadd.f32 %v1876, %v1883
    %v1886 = vadd.f32 %v1877, %v1884
    %1887 = vrot.lane.b32.xlu0 %v1863, 120
    %v1888 = vpop.permute.xlu0 %1887
    %1889 = vrot.lane.b32.xlu0 %v1864, 120
    %v1890 = vpop.permute.xlu0 %1889
    %v1891 = vld [vmem:[#allocation6 + $0x29] sm:$0x1]
    %v1892 = vlaneseq
    %v1893 = vshrl.u32 %v1892, 7
    %v1894 = vsub.s32 0, %v1893
    %v1895 = vrot.slane %v1891, %v1894
    %v1896 = vmul.f32 %v1888, %v1895
    %v1897 = vmul.f32 %v1890, %v1895
    %v1898 = vadd.f32 %v1885, %v1896
    %v1899 = vadd.f32 %v1886, %v1897
    %v1900 = vld [vmem:[#allocation2 + $0x9] sm:$0xff]
    %v1901 = vld [vmem:[#allocation2 + $0x11] sm:$0xff]
    %1902 = vrot.lane.b32.xlu0 %v1900, 8
    %v1903 = vpop.permute.xlu0 %1902
    %1904 = vrot.lane.b32.xlu0 %v1901, 8
    %v1905 = vpop.permute.xlu0 %1904
    %v1906 = vld [vmem:[#allocation6 + $0x2a] sm:$0x1]
    %v1907 = vlaneseq
    %v1908 = vshrl.u32 %v1907, 7
    %v1909 = vsub.s32 0, %v1908
    %v1910 = vrot.slane %v1906, %v1909
    %v1911 = vmul.f32 %v1903, %v1910
    %v1912 = vmul.f32 %v1905, %v1910
    %v1913 = vadd.f32 %v1898, %v1911
    %v1914 = vadd.f32 %v1899, %v1912
    %v1915 = vld [vmem:[#allocation6 + $0x2b] sm:$0x1]
    %v1916 = vlaneseq
    %v1917 = vshrl.u32 %v1916, 7
    %v1918 = vsub.s32 0, %v1917
    %v1919 = vrot.slane %v1915, %v1918
    %v1920 = vmul.f32 %v1900, %v1919
    %v1921 = vmul.f32 %v1901, %v1919
    %v1922 = vadd.f32 %v1913, %v1920
    %v1923 = vadd.f32 %v1914, %v1921
    %1924 = vrot.lane.b32.xlu0 %v1900, 120
    %v1925 = vpop.permute.xlu0 %1924
    %1926 = vrot.lane.b32.xlu0 %v1901, 120
    %v1927 = vpop.permute.xlu0 %1926
    %v1928 = vld [vmem:[#allocation6 + $0x2c] sm:$0x1]
    %v1929 = vlaneseq
    %v1930 = vshrl.u32 %v1929, 7
    %v1931 = vsub.s32 0, %v1930
    %v1932 = vrot.slane %v1928, %v1931
    %v1933 = vmul.f32 %v1925, %v1932
    %v1934 = vmul.f32 %v1927, %v1932
    %v1935 = vadd.f32 %v1922, %v1933
    %v1936 = vadd.f32 %v1923, %v1934
    %1937 = vst [vmem:[#allocation2 + $0x8] sm:$0xff] %v91
    %1938 = vst [vmem:[#allocation2 + $0x10] sm:$0xff] %v92
    %v1939 = vld [vmem:[#allocation2 + $0x7] sm:$0xff]
    %v1940 = vld [vmem:[#allocation2 + $0xf] sm:$0xff]
    %1941 = vrot.lane.b32.xlu0 %v1939, 8
    %v1942 = vpop.permute.xlu0 %1941
    %1943 = vrot.lane.b32.xlu0 %v1940, 8
    %v1944 = vpop.permute.xlu0 %1943
    %v1945 = vld [vmem:[#allocation6 + $0x24] sm:$0x1]
    %v1946 = vlaneseq
    %v1947 = vshrl.u32 %v1946, 7
    %v1948 = vsub.s32 0, %v1947
    %v1949 = vrot.slane %v1945, %v1948
    %v1950 = vmul.f32 %v1942, %v1949
    %v1951 = vmul.f32 %v1944, %v1949
    %v1952 = vld [vmem:[#allocation6 + $0x25] sm:$0x1]
    %v1953 = vlaneseq
    %v1954 = vshrl.u32 %v1953, 7
    %v1955 = vsub.s32 0, %v1954
    %v1956 = vrot.slane %v1952, %v1955
    %v1957 = vmul.f32 %v1939, %v1956
    %v1958 = vmul.f32 %v1940, %v1956
    %v1959 = vadd.f32 %v1950, %v1957
    %v1960 = vadd.f32 %v1951, %v1958
    %1961 = vrot.lane.b32.xlu0 %v1939, 120
    %v1962 = vpop.permute.xlu0 %1961
    %1963 = vrot.lane.b32.xlu0 %v1940, 120
    %v1964 = vpop.permute.xlu0 %1963
    %v1965 = vld [vmem:[#allocation6 + $0x26] sm:$0x1]
    %v1966 = vlaneseq
    %v1967 = vshrl.u32 %v1966, 7
    %v1968 = vsub.s32 0, %v1967
    %v1969 = vrot.slane %v1965, %v1968
    %v1970 = vmul.f32 %v1962, %v1969
    %v1971 = vmul.f32 %v1964, %v1969
    %v1972 = vadd.f32 %v1959, %v1970
    %v1973 = vadd.f32 %v1960, %v1971
    %v1974 = vld [vmem:[#allocation2 + $0x8] sm:$0xff]
    %v1975 = vld [vmem:[#allocation2 + $0x10] sm:$0xff]
    %1976 = vrot.lane.b32.xlu0 %v1974, 8
    %v1977 = vpop.permute.xlu0 %1976
    %1978 = vrot.lane.b32.xlu0 %v1975, 8
    %v1979 = vpop.permute.xlu0 %1978
    %v1980 = vld [vmem:[#allocation6 + $0x27] sm:$0x1]
    %v1981 = vlaneseq
    %v1982 = vshrl.u32 %v1981, 7
    %v1983 = vsub.s32 0, %v1982
    %v1984 = vrot.slane %v1980, %v1983
    %v1985 = vmul.f32 %v1977, %v1984
    %v1986 = vmul.f32 %v1979, %v1984
    %v1987 = vadd.f32 %v1972, %v1985
    %v1988 = vadd.f32 %v1973, %v1986
    %v1989 = vld [vmem:[#allocation6 + $0x28] sm:$0x1]
    %v1990 = vlaneseq
    %v1991 = vshrl.u32 %v1990, 7
    %v1992 = vsub.s32 0, %v1991
    %v1993 = vrot.slane %v1989, %v1992
    %v1994 = vmul.f32 %v1974, %v1993
    %v1995 = vmul.f32 %v1975, %v1993
    %v1996 = vadd.f32 %v1987, %v1994
    %v1997 = vadd.f32 %v1988, %v1995
    %1998 = vrot.lane.b32.xlu0 %v1974, 120
    %v1999 = vpop.permute.xlu0 %1998
    %2000 = vrot.lane.b32.xlu0 %v1975, 120
    %v2001 = vpop.permute.xlu0 %2000
    %v2002 = vld [vmem:[#allocation6 + $0x29] sm:$0x1]
    %v2003 = vlaneseq
    %v2004 = vshrl.u32 %v2003, 7
    %v2005 = vsub.s32 0, %v2004
    %v2006 = vrot.slane %v2002, %v2005
    %v2007 = vmul.f32 %v1999, %v2006
    %v2008 = vmul.f32 %v2001, %v2006
    %v2009 = vadd.f32 %v1996, %v2007
    %v2010 = vadd.f32 %v1997, %v2008
    %v2011 = vld [vmem:[#allocation2 + $0x9] sm:$0xff]
    %v2012 = vld [vmem:[#allocation2 + $0x11] sm:$0xff]
    %2013 = vrot.lane.b32.xlu0 %v2011, 8
    %v2014 = vpop.permute.xlu0 %2013
    %2015 = vrot.lane.b32.xlu0 %v2012, 8
    %v2016 = vpop.permute.xlu0 %2015
    %v2017 = vld [vmem:[#allocation6 + $0x2a] sm:$0x1]
    %v2018 = vlaneseq
    %v2019 = vshrl.u32 %v2018, 7
    %v2020 = vsub.s32 0, %v2019
    %v2021 = vrot.slane %v2017, %v2020
    %v2022 = vmul.f32 %v2014, %v2021
    %v2023 = vmul.f32 %v2016, %v2021
    %v2024 = vadd.f32 %v2009, %v2022
    %v2025 = vadd.f32 %v2010, %v2023
    %v2026 = vld [vmem:[#allocation6 + $0x2b] sm:$0x1]
    %v2027 = vlaneseq
    %v2028 = vshrl.u32 %v2027, 7
    %v2029 = vsub.s32 0, %v2028
    %v2030 = vrot.slane %v2026, %v2029
    %v2031 = vmul.f32 %v2011, %v2030
    %v2032 = vmul.f32 %v2012, %v2030
    %v2033 = vadd.f32 %v2024, %v2031
    %v2034 = vadd.f32 %v2025, %v2032
    %2035 = vrot.lane.b32.xlu0 %v2011, 120
    %v2036 = vpop.permute.xlu0 %2035
    %2037 = vrot.lane.b32.xlu0 %v2012, 120
    %v2038 = vpop.permute.xlu0 %2037
    %v2039 = vld [vmem:[#allocation6 + $0x2c] sm:$0x1]
    %v2040 = vlaneseq
    %v2041 = vshrl.u32 %v2040, 7
    %v2042 = vsub.s32 0, %v2041
    %v2043 = vrot.slane %v2039, %v2042
    %v2044 = vmul.f32 %v2036, %v2043
    %v2045 = vmul.f32 %v2038, %v2043
    %v2046 = vadd.f32 %v2033, %v2044
    %v2047 = vadd.f32 %v2034, %v2045
    %v2048 = vld [vmem:[#allocation8 + $0x4] sm:$0x1]
    %v2049 = vlaneseq
    %v2050 = vshrl.u32 %v2049, 7
    %v2051 = vsub.s32 0, %v2050
    %v2052 = vrot.slane %v2048, %v2051
    %v2053 = vadd.f32 %v1935, %v2052
    %v2054 = vadd.f32 %v1936, %v2052
    %v2055 = vadd.f32 %v2046, %v2052
    %v2056 = vadd.f32 %v2047, %v2052
    %v2057 = vmax.f32 %v2053, 0.0
    %v2058 = vmax.f32 %v2054, 0.0
    %v2059 = vmax.f32 %v2055, 0.0
    %v2060 = vmax.f32 %v2056, 0.0
    %s2061 = scalar_lea.vmem [#allocation9], 512
    %v2062 = vld [vmem:[%s2061] sm:$0xff]
    %v2063 = vld [vmem:[%s2061 + $0x8] sm:$0xff]
    %v2064 = vld [vmem:[%s2061 + $0x10] sm:$0xff]
    %v2065 = vld [vmem:[%s2061 + $0x18] sm:$0xff]
    %v2066 = vld [vmem:[%s2061 + $0x20] sm:$0xff]
    %v2067 = vld [vmem:[%s2061 + $0x28] sm:$0xff]
    %v2068 = vld [vmem:[%s2061 + $0x30] sm:$0xff]
    %v2069 = vld [vmem:[%s2061 + $0x38] sm:$0xff]
    %v2070 = vld [vmem:[%s2061 + $0x40] sm:$0xff]
    %v2071 = vld [vmem:[%s2061 + $0x48] sm:$0xff]
    %v2072 = vld [vmem:[%s2061 + $0x50] sm:$0xff]
    %v2073 = vld [vmem:[%s2061 + $0x58] sm:$0xff]
    %v2074 = vld [vmem:[%s2061 + $0x60] sm:$0xff]
    %v2075 = vld [vmem:[%s2061 + $0x68] sm:$0xff]
    %v2076 = vld [vmem:[%s2061 + $0x70] sm:$0xff]
    %v2077 = vld [vmem:[%s2061 + $0x78] sm:$0xff]
    %v2078 = vld [vmem:[#allocation11 + $0x4] sm:$0x1]
    %v2079 = vlaneseq
    %v2080 = vshrl.u32 %v2079, 7
    %v2081 = vsub.s32 0, %v2080
    %v2082 = vrot.slane %v2078, %v2081
    %2083 = vmatprep.subr.mxu0 0.0
    %2084 = vmatpush1.msra.mxu0 %v2077
    %2085 = vmatprep.subr.mxu0 0.0
    %2086 = vmatpush1.msra.mxu0 %v2076
    %2087 = vmatprep.subr.mxu0 0.0
    %2088 = vmatpush1.msra.mxu0 %v2075
    %2089 = vmatprep.subr.mxu0 0.0
    %2090 = vmatpush1.msra.mxu0 %v2074
    %2091 = vmatprep.subr.mxu0 0.0
    %2092 = vmatpush1.msra.mxu0 %v2073
    %2093 = vmatprep.subr.mxu0 0.0
    %2094 = vmatpush1.msra.mxu0 %v2072
    %2095 = vmatprep.subr.mxu0 0.0
    %2096 = vmatpush1.msra.mxu0 %v2071
    %2097 = vmatprep.subr.mxu0 0.0
    %2098 = vmatpush1.msra.mxu0 %v2070
    %2099 = vmatprep.subr.mxu0 0.0
    %2100 = vmatpush1.msra.mxu0 %v2069
    %2101 = vmatprep.subr.mxu0 0.0
    %2102 = vmatpush1.msra.mxu0 %v2068
    %2103 = vmatprep.subr.mxu0 0.0
    %2104 = vmatpush1.msra.mxu0 %v2067
    %2105 = vmatprep.subr.mxu0 0.0
    %2106 = vmatpush1.msra.mxu0 %v2066
    %2107 = vmatprep.subr.mxu0 0.0
    %2108 = vmatpush1.msra.mxu0 %v2065
    %2109 = vmatprep.subr.mxu0 0.0
    %2110 = vmatpush1.msra.mxu0 %v2064
    %2111 = vmatprep.subr.mxu0 0.0
    %2112 = vmatpush1.msra.mxu0 %v2063
    %2113 = vmatprep.subr.mxu0 0.0
    %2114 = vmatpush1.msra.mxu0 %v2062
    %2115 = vmatprep.subr.mxu0 0.0
    %2116 = vmatpush2.msra.mxu0 0.0
    %2117 = vmatprep.subr.mxu0 0.0
    %2118 = vmatpush2.msra.mxu0 0.0
    %2119 = vmatprep.subr.mxu0 0.0
    %2120 = vmatpush2.msra.mxu0 0.0
    %2121 = vmatprep.subr.mxu0 0.0
    %2122 = vmatpush2.msra.mxu0 0.0
    %2123 = vmatprep.subr.mxu0 0.0
    %2124 = vmatpush2.msra.mxu0 0.0
    %2125 = vmatprep.subr.mxu0 0.0
    %2126 = vmatpush2.msra.mxu0 0.0
    %2127 = vmatprep.subr.mxu0 0.0
    %2128 = vmatpush2.msra.mxu0 0.0
    %2129 = vmatprep.subr.mxu0 0.0
    %2130 = vmatpush2.msra.mxu0 0.0
    %2131 = vmatprep.subr.mxu0 0.0
    %2132 = vmatpush2.msra.mxu0 0.0
    %2133 = vmatprep.subr.mxu0 0.0
    %2134 = vmatpush2.msra.mxu0 0.0
    %2135 = vmatprep.subr.mxu0 0.0
    %2136 = vmatpush2.msra.mxu0 0.0
    %2137 = vmatprep.subr.mxu0 0.0
    %2138 = vmatpush2.msra.mxu0 0.0
    %2139 = vmatprep.subr.mxu0 0.0
    %2140 = vmatpush2.msra.mxu0 0.0
    %2141 = vmatprep.subr.mxu0 0.0
    %2142 = vmatpush2.msra.mxu0 0.0
    %2143 = vmatprep.subr.mxu0 0.0
    %2144 = vmatpush2.msra.mxu0 0.0
    %2145 = vmatprep.subr.mxu0 0.0
    %2146 = vmatpush2.msra.mxu0 0.0
    %2147 = vmatprep.mubr.f32.mxu0 0.0
    %2148 = vmatmul.mubr.f32.gmra.mxu0 %v2057
    %v2149 = vpop.f32.mrf.mxu0
    %v2150 = vadd.f32 %v2082, %v2149
    %v2151 = vpop.f32.mrf.mxu0
    %2152 = vmatprep.mubr.f32.mxu0 0.0
    %2153 = vmatmul.mubr.f32.gmra.mxu0 %v2058
    %v2154 = vpop.f32.mrf.mxu0
    %v2155 = vadd.f32 %v2082, %v2154
    %v2156 = vpop.f32.mrf.mxu0
    %2157 = vmatprep.mubr.f32.mxu0 0.0
    %2158 = vmatmul.mubr.f32.gmra.mxu0 %v2059
    %v2159 = vpop.f32.mrf.mxu0
    %v2160 = vadd.f32 %v2082, %v2159
    %v2161 = vpop.f32.mrf.mxu0
    %2162 = vmatprep.mubr.f32.mxu0 0.0
    %2163 = vmatmul.mubr.f32.gmra.mxu0 %v2060
    %v2164 = vpop.f32.mrf.mxu0
    %v2165 = vadd.f32 %v2082, %v2164
    %v2166 = vpop.f32.mrf.mxu0
    %2167 = vdwg.mxu0
    %v2168 = vmax.f32 %v2150, 0.0
    %v2169 = vmax.f32 %v2155, 0.0
    %v2170 = vmax.f32 %v2160, 0.0
    %v2171 = vmax.f32 %v2165, 0.0
    %v2172 = vadd.f32 %v1822, %v2168
    %v2173 = vadd.f32 %v1823, %v2169
    %v2174 = vadd.f32 %v1824, %v2170
    %v2175 = vadd.f32 %v1825, %v2171
    %2176 = vst [vmem:[#allocation12] sm:$0xff] %v2172
    %2177 = vst [vmem:[#allocation12 + $0x8] sm:$0xff] %v2173
    %2178 = vst [vmem:[#allocation12 + $0x10] sm:$0xff] %v2174
    %2179 = vst [vmem:[#allocation12 + $0x18] sm:$0xff] %v2175
    // Predicated region
    $region42: #{tpu_custom_call.1} parent=1 // pred_check
      _
    $region43: #{tpu_custom_call.1} parent=1 // pred_check_branch
      %2181 = sbr.rel (0) target = $region45
    $region44: #{tpu_custom_call.1} parent=1 // pred_region
      %s2183 = ssub.s32 512, 512
      %2184 = vsyncadd [#allocation5], %s2183
      %s2185 = sshll.u32 [#allocation12], 4
      %s2186 = int_to_ptr.vmem [resolvable:$true] %s2185
      %2191 = dma.vmem_to_hbm [thread:$0]  %s2186, 512, %s5, [#allocation5], 128, 128, 8
    $region45: #{tpu_custom_call.1} parent=1 // pred_fallthru
      _
    // Predicated region
    $region46: #{tpu_custom_call.1} parent=1 // pred_check
      _
    $region47: #{tpu_custom_call.1} parent=1 // pred_check_branch
      %2193 = sbr.rel (0) target = $region49
    $region48: #{tpu_custom_call.1} parent=1 // pred_region
      %2194 = dma.done [#allocation5], 512
    $region49: #{tpu_custom_call.1} parent=1 // pred_fallthru
      _
    %2195 = vsyncpa [#allocation4], 1
    %2196 = vsyncpa [#allocation7], 1
    %2197 = vsyncpa [#allocation10], 1
    %2198 = vsyncpa [#allocation5], 1

</llo_original>
